<compile_context>
chip_gen: v7x
topology: tpu7x:2x2x1
jax: 0.10.0
libtpu: 0.0.40
codegen_flags: <defaults>
</compile_context>

<pallas_src>
import functools
import math

import jax
import jax.numpy as jnp
from jax.experimental import pallas as pl
from jax.experimental.pallas import tpu as pltpu

LN_EPS = 1e-12
NEG_INF = -10000.0
LOGIT_PAD = 128  # classifier output padded to a full 128-lane slab


# ------------------------------ in-kernel math --------------------------------

def _layernorm(y, gamma, beta, eps):
    # f32 statistics, matches torch.nn.LayerNorm semantics.
    mean = jnp.mean(y, axis=-1, keepdims=True)
    var = jnp.mean(jnp.square(y - mean), axis=-1, keepdims=True)
    return (y - mean) * jax.lax.rsqrt(var + eps) * gamma + beta


def _gelu_tanh(x):
    # BERT "gelu_new" (tanh approximation), kept in f32 for the VPU/EUP path.
    c = 0.7978845608028654  # sqrt(2/pi)
    return 0.5 * x * (1.0 + jnp.tanh(c * (x + 0.044715 * x * x * x)))


def _split_heads(x2d, num_heads, dh, off):
    """(S, nH*dh) lane-packed slab -> (nH, S, dh) head-major stack."""
    return jnp.concatenate(
        [x2d[:, off + h * dh: off + (h + 1) * dh][None] for h in range(num_heads)],
        axis=0)


# --------------------------------- kernel -------------------------------------

def joint_modal_bert_kernel(
        pre_ref, extra_ref, mask_ref,
        jw_ref, jb_ref, jg_ref, jbt_ref, eg_ref, ebt_ref,
        wqkv_ref, bqkv_ref, wo_ref, bo_ref, ln1g_ref, ln1b_ref,
        wi_ref, bi_ref, wo2_ref, bo2_ref, ln2g_ref, ln2b_ref,
        pw_ref, pb_ref, cw_ref, cb_ref,
        logits_ref, *, num_layers, num_heads, eps):
    """Whole jointModalBert forward for ONE batch element (grid axis = batch)."""
    H = jw_ref.shape[1]
    dh = H // num_heads
    scale = 1.0 / math.sqrt(dh)

    # --- joint_proj + jointLayerNorm + (pos + token-type add) + embeddings LN --
    pre = pre_ref[0]                                             # (S, H+V+A) f32
    y = jnp.dot(pre.astype(jnp.bfloat16), jw_ref[...],
                preferred_element_type=jnp.float32) + jb_ref[...]
    y = _layernorm(y, jg_ref[...], jbt_ref[...], eps)            # jointLayerNorm
    # dropout: identity (inference)
    y = y + extra_ref[0]                                         # + pos + token-type emb
    x = _layernorm(y, eg_ref[...], ebt_ref[...], eps)            # BertEmbeddings LN
    # dropout: identity (inference)

    # Additive attention mask built in-kernel; broadcasts over (nH, S, S).
    neg = (1.0 - mask_ref[0]) * NEG_INF                          # (1, S) f32

    # ----------------------------- encoder layers -----------------------------
    for l in range(num_layers):
        # Fused QKV projection; ONE bf16 cast of the whole qkv slab.
        qkv = jnp.dot(x.astype(jnp.bfloat16), wqkv_ref[l],
                      preferred_element_type=jnp.float32) + bqkv_ref[l]   # (S, 3H)
        qkv = qkv.astype(jnp.bfloat16)

        # Heads batched into single 3-D contractions (leading head axis).
        q = _split_heads(qkv, num_heads, dh, 0)                  # (nH, S, dh) bf16
        k = _split_heads(qkv, num_heads, dh, H)
        v = _split_heads(qkv, num_heads, dh, 2 * H)
        s = jnp.einsum('hqd,hkd->hqk', q, k,
                       preferred_element_type=jnp.float32) * scale + neg  # (nH, S, S)
        m = jnp.max(s, axis=-1, keepdims=True)
        p = jnp.exp(s - m)
        p = p / jnp.sum(p, axis=-1, keepdims=True)               # exact softmax (f32)
        ctx = jnp.einsum('hqk,hkd->hqd', p.astype(jnp.bfloat16), v,
                         preferred_element_type=jnp.float32)     # (nH, S, dh)

        # Re-pack heads lane-dense; ONE K=H output projection (no per-head fold).
        ctx2 = jnp.concatenate([ctx[h] for h in range(num_heads)], axis=-1)  # (S, H)
        attn = jnp.dot(ctx2.astype(jnp.bfloat16), wo_ref[l],
                       preferred_element_type=jnp.float32) + bo_ref[l]
        # dropout: identity (inference); Add & LayerNorm 1
        h1 = _layernorm(attn + x, ln1g_ref[l], ln1b_ref[l], eps)

        # Feed-forward (bf16 MXU, f32 GELU), dropout(identity), Add & LayerNorm 2.
        inter = _gelu_tanh(jnp.dot(h1.astype(jnp.bfloat16), wi_ref[l],
                                   preferred_element_type=jnp.float32) + bi_ref[l])
        ffn = jnp.dot(inter.astype(jnp.bfloat16), wo2_ref[l],
                      preferred_element_type=jnp.float32) + bo2_ref[l]
        x = _layernorm(ffn + h1, ln2g_ref[l], ln2b_ref[l], eps)

    # ----------------------- pooler + classifier on [CLS] ---------------------
    cls = x[0:1, :]                                              # (1, H)
    pooled = jnp.tanh(jnp.dot(cls.astype(jnp.bfloat16), pw_ref[...],
                              preferred_element_type=jnp.float32) + pb_ref[...])
    # dropout: identity (inference)
    logits = jnp.dot(pooled.astype(jnp.bfloat16), cw_ref[...],
                     preferred_element_type=jnp.float32) + cb_ref[...]    # (1, 128)
    logits_ref[0] = logits.astype(logits_ref.dtype)


# --------------------------------- wrapper -------------------------------------

def pallas_joint_modal_bert(pre, extra, mask3, params, cfg):
    B, S, Din = pre.shape
    H = cfg["hidden_size"]
    NL = cfg["num_hidden_layers"]
    nH = cfg["num_attention_heads"]
    I = cfg["intermediate_size"]
    dh = H // nH

    weights = [
        params["joint_w"], params["joint_b"],
        params["joint_ln_g"], params["joint_ln_b"],
        params["emb_ln_g"], params["emb_ln_b"],
        params["wqkv"], params["bqkv"], params["wo"], params["bo"],
        params["ln1_g"], params["ln1_b"], params["wi"], params["bi"],
        params["wo2"], params["bo2"], params["ln2_g"], params["ln2_b"],
        params["pool_w"], params["pool_b"],
        params["cls_w_pad"], params["cls_b_pad"],
    ]

    def batch_spec(arr):
        shape = arr.shape
        return pl.BlockSpec((1,) + shape[1:],
                            lambda b: (b,) + (0,) * (len(shape) - 1))

    def full_spec(arr):
        nd = arr.ndim
        return pl.BlockSpec(arr.shape, lambda b: (0,) * nd)

    in_specs = ([batch_spec(pre), batch_spec(extra), batch_spec(mask3)]
                + [full_spec(wgt) for wgt in weights])
    out_spec = pl.BlockSpec((1, 1, LOGIT_PAD), lambda b: (b, 0, 0))

    # Advisory cost estimate for XLA scheduling (whole call, all batches).
    per_layer_flops = (2 * S * H * 3 * H            # fused QKV
                       + 2 * nH * S * S * dh * 2    # scores + context
                       + 2 * S * H * H              # output projection
                       + 2 * S * H * I + 2 * S * I * H)
    flops = B * (2 * S * Din * H + NL * per_layer_flops
                 + 2 * H * H + 2 * H * LOGIT_PAD)
    transcendentals = B * (NL * (nH * S * S + S * I) + H)
    in_bytes = sum(int(a.size) * a.dtype.itemsize for a in [pre, extra, mask3] + weights)
    bytes_accessed = in_bytes + B * LOGIT_PAD * 4

    # VMEM budget: double-buffered per-batch activation blocks + resident
    # weights + headroom for in-kernel f32 intermediates.
    weight_bytes = sum(int(w.size) * w.dtype.itemsize for w in weights)
    block_bytes = (S * Din + S * H + S + LOGIT_PAD) * 4
    vmem_limit = 2 * 2 * (weight_bytes + block_bytes) + (4 << 20)

    out = pl.pallas_call(
        functools.partial(joint_modal_bert_kernel, num_layers=NL, num_heads=nH,
                          eps=cfg["layer_norm_eps"]),
        out_shape=jax.ShapeDtypeStruct((B, 1, LOGIT_PAD), jnp.float32),
        grid=(B,),
        in_specs=in_specs,
        out_specs=out_spec,
        compiler_params=pltpu.CompilerParams(
            dimension_semantics=("parallel",),   # batches split across TCs on v7x
            vmem_limit_bytes=int(vmem_limit)),
        cost_estimate=pl.CostEstimate(flops=int(flops),
                                      transcendentals=int(transcendentals),
                                      bytes_accessed=int(bytes_accessed)),
    )(pre, extra, mask3, *weights)
    return out.reshape(B, LOGIT_PAD)[:, :cfg["num_labels"]]


# ----------------------------- model definition --------------------------------

CONFIG = dict(
    hidden_size=32,
    visual_dim=16,
    audio_dim=8,
    num_attention_heads=4,
    intermediate_size=64,
    num_hidden_layers=2,
    num_labels=2,
    max_position_embeddings=64,
    type_vocab_size=2,
    layer_norm_eps=LN_EPS,
    hidden_dropout_prob=0.1,  # inference: identity
)


def init_params(key, cfg):
    H = cfg["hidden_size"]
    V = cfg["visual_dim"]
    A = cfg["audio_dim"]
    I = cfg["intermediate_size"]
    L = cfg["num_labels"]
    NL = cfg["num_hidden_layers"]
    keys = iter(jax.random.split(key, 64))

    def w(k, din, dout, dtype=jnp.bfloat16):
        return (jax.random.normal(k, (din, dout), jnp.float32) * 0.02).astype(dtype)

    p = {}
    # jointModalBert joint-branch projection + jointLayerNorm.
    p["joint_w"] = w(next(keys), H + V + A, H)                       # bf16 MXU weight
    p["joint_b"] = jnp.zeros((1, H), jnp.float32)
    p["joint_ln_g"] = jnp.ones((1, H), jnp.float32)
    p["joint_ln_b"] = jnp.zeros((1, H), jnp.float32)
    # BertEmbeddings (word embeddings bypassed via inputs_embeds).
    p["pos_emb"] = jax.random.normal(next(keys), (cfg["max_position_embeddings"], H),
                                     jnp.float32) * 0.02
    p["tok_emb"] = jax.random.normal(next(keys), (cfg["type_vocab_size"], H),
                                     jnp.float32) * 0.02
    p["emb_ln_g"] = jnp.ones((1, H), jnp.float32)
    p["emb_ln_b"] = jnp.zeros((1, H), jnp.float32)
    # Encoder layers: params stacked on a leading layer axis; MXU weights bf16
    # (QKV pre-fused into one (H, 3H) matrix, wo pre-cast to bf16).
    p["wqkv"] = jnp.stack([w(next(keys), H, 3 * H) for _ in range(NL)], 0)
    p["bqkv"] = jnp.zeros((NL, 1, 3 * H), jnp.float32)
    p["wo"] = jnp.stack([w(next(keys), H, H) for _ in range(NL)], 0)
    p["bo"] = jnp.zeros((NL, 1, H), jnp.float32)
    p["ln1_g"] = jnp.ones((NL, 1, H), jnp.float32)
    p["ln1_b"] = jnp.zeros((NL, 1, H), jnp.float32)
    p["wi"] = jnp.stack([w(next(keys), H, I) for _ in range(NL)], 0)
    p["bi"] = jnp.zeros((NL, 1, I), jnp.float32)
    p["wo2"] = jnp.stack([w(next(keys), I, H) for _ in range(NL)], 0)
    p["bo2"] = jnp.zeros((NL, 1, H), jnp.float32)
    p["ln2_g"] = jnp.ones((NL, 1, H), jnp.float32)
    p["ln2_b"] = jnp.zeros((NL, 1, H), jnp.float32)
    # Pooler + classifier (classifier padded to a 128-lane output slab).
    p["pool_w"] = w(next(keys), H, H)
    p["pool_b"] = jnp.zeros((1, H), jnp.float32)
    cls_w = jax.random.normal(next(keys), (H, L), jnp.float32) * 0.02
    p["cls_w_pad"] = jnp.zeros((H, LOGIT_PAD), jnp.float32).at[:, :L].set(
        cls_w).astype(jnp.bfloat16)
    p["cls_b_pad"] = jnp.zeros((1, LOGIT_PAD), jnp.float32)
    return p


def joint_modal_bert_forward(params, cfg, input_reps, input_visual, input_audio,
                             token_type_ids, attention_mask, labels=None):
    """Joint-modality branch: both visual and audio provided."""
    B, S, H = input_reps.shape

    # pre_embs = cat(word, visual, audio); inputs_embeds = joint_proj(pre_embs)
    pre = jnp.concatenate([input_reps, input_visual, input_audio], axis=-1)

    # position + token-type embeddings (tiny gathers stay in XLA glue).
    pos = params["pos_emb"][:S]                                  # (S, H)
    tok = params["tok_emb"][token_type_ids]                      # (B, S, H)
    extra = pos[None, :, :] + tok                                # (B, S, H)

    # 0/1 mask passed as (B, 1, S); additive -10000*(1-mask) built in-kernel.
    mask3 = attention_mask.astype(jnp.float32)[:, None, :]

    logits = pallas_joint_modal_bert(pre, extra, mask3, params, cfg)

    if labels is not None:
        # cross-entropy (mean) — tiny reduction, plain JAX glue.
        logp = jax.nn.log_softmax(logits, axis=-1)
        loss = -jnp.mean(jnp.take_along_axis(logp, labels[:, None], axis=-1))
        return loss, logits
    return (logits,)


# ----------------------------------- main --------------------------------------

if __name__ == "__main__":
    cfg = CONFIG
    B, S = 2, 8
    H, V, A = cfg["hidden_size"], cfg["visual_dim"], cfg["audio_dim"]

    key = jax.random.PRNGKey(0)
    kp, kr, kv, ka, kl = jax.random.split(key, 5)

    params = init_params(kp, cfg)

    input_reps = jax.random.normal(kr, (B, S, H), jnp.float32)
    input_visual = jax.random.normal(kv, (B, S, V), jnp.float32)
    input_audio = jax.random.normal(ka, (B, S, A), jnp.float32)
    token_type_ids = jnp.zeros((B, S), jnp.int32)
    attention_mask = jnp.ones((B, S), jnp.float32)
    labels = jax.random.randint(kl, (B,), 0, cfg["num_labels"], jnp.int32)

    fwd = jax.jit(functools.partial(joint_modal_bert_forward, params, cfg))
    loss, logits = fwd(input_reps, input_visual, input_audio,
                       token_type_ids, attention_mask, labels)
    jax.block_until_ready((loss, logits))

    assert logits.shape == (B, cfg["num_labels"])
    assert loss.shape == ()
    assert bool(jnp.isfinite(loss)) and bool(jnp.all(jnp.isfinite(logits)))
    print("KERNEL_OK")
</pallas_src>

<mosaic_0001>
module attributes {stable_mosaic.version = 11 : i64} {
  func.func @joint_modal_bert_kernel(%arg0: i32, %arg1: memref<1x8x56xf32, #tpu.memory_space<vmem>>, %arg2: memref<1x8x32xf32, #tpu.memory_space<vmem>>, %arg3: memref<1x1x8xf32, #tpu.memory_space<vmem>>, %arg4: memref<56x32xbf16, #tpu.memory_space<vmem>>, %arg5: memref<1x32xf32, #tpu.memory_space<vmem>>, %arg6: memref<1x32xf32, #tpu.memory_space<vmem>>, %arg7: memref<1x32xf32, #tpu.memory_space<vmem>>, %arg8: memref<1x32xf32, #tpu.memory_space<vmem>>, %arg9: memref<1x32xf32, #tpu.memory_space<vmem>>, %arg10: memref<2x32x96xbf16, #tpu.memory_space<vmem>>, %arg11: memref<2x1x96xf32, #tpu.memory_space<vmem>>, %arg12: memref<2x32x32xbf16, #tpu.memory_space<vmem>>, %arg13: memref<2x1x32xf32, #tpu.memory_space<vmem>>, %arg14: memref<2x1x32xf32, #tpu.memory_space<vmem>>, %arg15: memref<2x1x32xf32, #tpu.memory_space<vmem>>, %arg16: memref<2x32x64xbf16, #tpu.memory_space<vmem>>, %arg17: memref<2x1x64xf32, #tpu.memory_space<vmem>>, %arg18: memref<2x64x32xbf16, #tpu.memory_space<vmem>>, %arg19: memref<2x1x32xf32, #tpu.memory_space<vmem>>, %arg20: memref<2x1x32xf32, #tpu.memory_space<vmem>>, %arg21: memref<2x1x32xf32, #tpu.memory_space<vmem>>, %arg22: memref<32x32xbf16, #tpu.memory_space<vmem>>, %arg23: memref<1x32xf32, #tpu.memory_space<vmem>>, %arg24: memref<32x128xbf16, #tpu.memory_space<vmem>>, %arg25: memref<1x128xf32, #tpu.memory_space<vmem>>, %arg26: memref<1x1x128xf32, #tpu.memory_space<vmem>>) attributes {dimension_semantics = [#tpu.dimension_semantics<parallel>], iteration_bounds = array<i64: 2>, scalar_prefetch = 0 : i64, scratch_operands = 0 : i64, tpu.core_type = #tpu.core_type<tc>, window_params = [{transform_indices = @transform_0, window_bounds = array<i64: 1, 8, 56>}, {transform_indices = @transform_1, window_bounds = array<i64: 1, 8, 32>}, {transform_indices = @transform_2, window_bounds = array<i64: 1, 1, 8>}, {pipeline_mode = #tpu.pipeline_mode<synchronous>, transform_indices = @transform_3, window_bounds = array<i64: 56, 32>}, {pipeline_mode = #tpu.pipeline_mode<synchronous>, transform_indices = @transform_4, window_bounds = array<i64: 1, 32>}, {pipeline_mode = #tpu.pipeline_mode<synchronous>, transform_indices = @transform_5, window_bounds = array<i64: 1, 32>}, {pipeline_mode = #tpu.pipeline_mode<synchronous>, transform_indices = @transform_6, window_bounds = array<i64: 1, 32>}, {pipeline_mode = #tpu.pipeline_mode<synchronous>, transform_indices = @transform_7, window_bounds = array<i64: 1, 32>}, {pipeline_mode = #tpu.pipeline_mode<synchronous>, transform_indices = @transform_8, window_bounds = array<i64: 1, 32>}, {pipeline_mode = #tpu.pipeline_mode<synchronous>, transform_indices = @transform_9, window_bounds = array<i64: 2, 32, 96>}, {pipeline_mode = #tpu.pipeline_mode<synchronous>, transform_indices = @transform_10, window_bounds = array<i64: 2, 1, 96>}, {pipeline_mode = #tpu.pipeline_mode<synchronous>, transform_indices = @transform_11, window_bounds = array<i64: 2, 32, 32>}, {pipeline_mode = #tpu.pipeline_mode<synchronous>, transform_indices = @transform_12, window_bounds = array<i64: 2, 1, 32>}, {pipeline_mode = #tpu.pipeline_mode<synchronous>, transform_indices = @transform_13, window_bounds = array<i64: 2, 1, 32>}, {pipeline_mode = #tpu.pipeline_mode<synchronous>, transform_indices = @transform_14, window_bounds = array<i64: 2, 1, 32>}, {pipeline_mode = #tpu.pipeline_mode<synchronous>, transform_indices = @transform_15, window_bounds = array<i64: 2, 32, 64>}, {pipeline_mode = #tpu.pipeline_mode<synchronous>, transform_indices = @transform_16, window_bounds = array<i64: 2, 1, 64>}, {pipeline_mode = #tpu.pipeline_mode<synchronous>, transform_indices = @transform_17, window_bounds = array<i64: 2, 64, 32>}, {pipeline_mode = #tpu.pipeline_mode<synchronous>, transform_indices = @transform_18, window_bounds = array<i64: 2, 1, 32>}, {pipeline_mode = #tpu.pipeline_mode<synchronous>, transform_indices = @transform_19, window_bounds = array<i64: 2, 1, 32>}, {pipeline_mode = #tpu.pipeline_mode<synchronous>, transform_indices = @transform_20, window_bounds = array<i64: 2, 1, 32>}, {pipeline_mode = #tpu.pipeline_mode<synchronous>, transform_indices = @transform_21, window_bounds = array<i64: 32, 32>}, {pipeline_mode = #tpu.pipeline_mode<synchronous>, transform_indices = @transform_22, window_bounds = array<i64: 1, 32>}, {pipeline_mode = #tpu.pipeline_mode<synchronous>, transform_indices = @transform_23, window_bounds = array<i64: 32, 128>}, {pipeline_mode = #tpu.pipeline_mode<synchronous>, transform_indices = @transform_24, window_bounds = array<i64: 1, 128>}, {transform_indices = @transform_25, window_bounds = array<i64: 1, 1, 128>}]} {
    %c0 = arith.constant 0 : index
    %c0_0 = arith.constant 0 : index
    %c0_1 = arith.constant 0 : index
    %0 = vector.load %arg1[%c0, %c0_0, %c0_1] : memref<1x8x56xf32, #tpu.memory_space<vmem>>, vector<1x8x56xf32>
    %1 = vector.shape_cast %0 : vector<1x8x56xf32> to vector<8x56xf32>
    %2 = arith.truncf %1 : vector<8x56xf32> to vector<8x56xbf16>
    %c0_2 = arith.constant 0 : index
    %c0_3 = arith.constant 0 : index
    %3 = vector.load %arg4[%c0_2, %c0_3] : memref<56x32xbf16, #tpu.memory_space<vmem>>, vector<56x32xbf16>
    %cst = arith.constant dense<0.000000e+00> : vector<8x32xf32>
    %4 = tpu.matmul %2, %3, %cst {dimension_numbers = #tpu.dot_dimension_numbers<[1], [0], [0], [1], [0, 0, 1, 1], [], []>} : vector<8x56xbf16>, vector<56x32xbf16>, vector<8x32xf32> -> vector<8x32xf32>
    %c0_4 = arith.constant 0 : index
    %c0_5 = arith.constant 0 : index
    %5 = vector.load %arg5[%c0_4, %c0_5] : memref<1x32xf32, #tpu.memory_space<vmem>>, vector<1x32xf32>
    %6 = vector.broadcast %5 : vector<1x32xf32> to vector<8x32xf32>
    %7 = arith.addf %4, %6 : vector<8x32xf32>
    %c0_6 = arith.constant 0 : index
    %c0_7 = arith.constant 0 : index
    %8 = vector.load %arg6[%c0_6, %c0_7] : memref<1x32xf32, #tpu.memory_space<vmem>>, vector<1x32xf32>
    %c0_8 = arith.constant 0 : index
    %c0_9 = arith.constant 0 : index
    %9 = vector.load %arg7[%c0_8, %c0_9] : memref<1x32xf32, #tpu.memory_space<vmem>>, vector<1x32xf32>
    %cst_10 = arith.constant dense<0.000000e+00> : vector<8xf32>
    %10 = vector.multi_reduction <add>, %7, %cst_10 [1] : vector<8x32xf32> to vector<8xf32>
    %11 = vector.shape_cast %10 : vector<8xf32> to vector<8x1xf32>
    %cst_11 = arith.constant 3.200000e+01 : f32
    %12 = vector.broadcast %cst_11 : f32 to vector<8x1xf32>
    %13 = arith.divf %11, %12 : vector<8x1xf32>
    %14 = vector.broadcast %13 : vector<8x1xf32> to vector<8x32xf32>
    %15 = arith.subf %7, %14 : vector<8x32xf32>
    %16 = arith.mulf %15, %15 : vector<8x32xf32>
    %cst_12 = arith.constant dense<0.000000e+00> : vector<8xf32>
    %17 = vector.multi_reduction <add>, %16, %cst_12 [1] : vector<8x32xf32> to vector<8xf32>
    %18 = vector.shape_cast %17 : vector<8xf32> to vector<8x1xf32>
    %cst_13 = arith.constant 3.200000e+01 : f32
    %19 = vector.broadcast %cst_13 : f32 to vector<8x1xf32>
    %20 = arith.divf %18, %19 : vector<8x1xf32>
    %21 = vector.broadcast %13 : vector<8x1xf32> to vector<8x32xf32>
    %22 = arith.subf %7, %21 : vector<8x32xf32>
    %cst_14 = arith.constant 9.99999996E-13 : f32
    %23 = vector.broadcast %cst_14 : f32 to vector<8x1xf32>
    %24 = arith.addf %20, %23 : vector<8x1xf32>
    %25 = math.rsqrt %24 : vector<8x1xf32>
    %26 = vector.broadcast %25 : vector<8x1xf32> to vector<8x32xf32>
    %27 = arith.mulf %22, %26 : vector<8x32xf32>
    %28 = vector.broadcast %8 : vector<1x32xf32> to vector<8x32xf32>
    %29 = arith.mulf %27, %28 : vector<8x32xf32>
    %30 = vector.broadcast %9 : vector<1x32xf32> to vector<8x32xf32>
    %31 = arith.addf %29, %30 : vector<8x32xf32>
    %c0_15 = arith.constant 0 : index
    %c0_16 = arith.constant 0 : index
    %c0_17 = arith.constant 0 : index
    %32 = vector.load %arg2[%c0_15, %c0_16, %c0_17] : memref<1x8x32xf32, #tpu.memory_space<vmem>>, vector<1x8x32xf32>
    %33 = vector.shape_cast %32 : vector<1x8x32xf32> to vector<8x32xf32>
    %34 = arith.addf %31, %33 : vector<8x32xf32>
    %c0_18 = arith.constant 0 : index
    %c0_19 = arith.constant 0 : index
    %35 = vector.load %arg8[%c0_18, %c0_19] : memref<1x32xf32, #tpu.memory_space<vmem>>, vector<1x32xf32>
    %c0_20 = arith.constant 0 : index
    %c0_21 = arith.constant 0 : index
    %36 = vector.load %arg9[%c0_20, %c0_21] : memref<1x32xf32, #tpu.memory_space<vmem>>, vector<1x32xf32>
    %cst_22 = arith.constant dense<0.000000e+00> : vector<8xf32>
    %37 = vector.multi_reduction <add>, %34, %cst_22 [1] : vector<8x32xf32> to vector<8xf32>
    %38 = vector.shape_cast %37 : vector<8xf32> to vector<8x1xf32>
    %cst_23 = arith.constant 3.200000e+01 : f32
    %39 = vector.broadcast %cst_23 : f32 to vector<8x1xf32>
    %40 = arith.divf %38, %39 : vector<8x1xf32>
    %41 = vector.broadcast %40 : vector<8x1xf32> to vector<8x32xf32>
    %42 = arith.subf %34, %41 : vector<8x32xf32>
    %43 = arith.mulf %42, %42 : vector<8x32xf32>
    %cst_24 = arith.constant dense<0.000000e+00> : vector<8xf32>
    %44 = vector.multi_reduction <add>, %43, %cst_24 [1] : vector<8x32xf32> to vector<8xf32>
    %45 = vector.shape_cast %44 : vector<8xf32> to vector<8x1xf32>
    %cst_25 = arith.constant 3.200000e+01 : f32
    %46 = vector.broadcast %cst_25 : f32 to vector<8x1xf32>
    %47 = arith.divf %45, %46 : vector<8x1xf32>
    %48 = vector.broadcast %40 : vector<8x1xf32> to vector<8x32xf32>
    %49 = arith.subf %34, %48 : vector<8x32xf32>
    %cst_26 = arith.constant 9.99999996E-13 : f32
    %50 = vector.broadcast %cst_26 : f32 to vector<8x1xf32>
    %51 = arith.addf %47, %50 : vector<8x1xf32>
    %52 = math.rsqrt %51 : vector<8x1xf32>
    %53 = vector.broadcast %52 : vector<8x1xf32> to vector<8x32xf32>
    %54 = arith.mulf %49, %53 : vector<8x32xf32>
    %55 = vector.broadcast %35 : vector<1x32xf32> to vector<8x32xf32>
    %56 = arith.mulf %54, %55 : vector<8x32xf32>
    %57 = vector.broadcast %36 : vector<1x32xf32> to vector<8x32xf32>
    %58 = arith.addf %56, %57 : vector<8x32xf32>
    %c0_27 = arith.constant 0 : index
    %c0_28 = arith.constant 0 : index
    %c0_29 = arith.constant 0 : index
    %59 = vector.load %arg3[%c0_27, %c0_28, %c0_29] : memref<1x1x8xf32, #tpu.memory_space<vmem>>, vector<1x1x8xf32>
    %60 = vector.shape_cast %59 : vector<1x1x8xf32> to vector<1x8xf32>
    %cst_30 = arith.constant 1.000000e+00 : f32
    %61 = vector.broadcast %cst_30 : f32 to vector<1x8xf32>
    %62 = arith.subf %61, %60 : vector<1x8xf32>
    %cst_31 = arith.constant -1.000000e+04 : f32
    %63 = vector.broadcast %cst_31 : f32 to vector<1x8xf32>
    %64 = arith.mulf %62, %63 : vector<1x8xf32>
    %65 = arith.truncf %58 : vector<8x32xf32> to vector<8x32xbf16>
    %c0_32 = arith.constant 0 : index
    %c0_33 = arith.constant 0 : index
    %c0_34 = arith.constant 0 : index
    %66 = vector.load %arg10[%c0_32, %c0_33, %c0_34] : memref<2x32x96xbf16, #tpu.memory_space<vmem>>, vector<1x32x96xbf16>
    %67 = vector.shape_cast %66 : vector<1x32x96xbf16> to vector<32x96xbf16>
    %cst_35 = arith.constant dense<0.000000e+00> : vector<8x96xf32>
    %68 = tpu.matmul %65, %67, %cst_35 {dimension_numbers = #tpu.dot_dimension_numbers<[1], [0], [0], [1], [0, 0, 1, 1], [], []>} : vector<8x32xbf16>, vector<32x96xbf16>, vector<8x96xf32> -> vector<8x96xf32>
    %c0_36 = arith.constant 0 : index
    %c0_37 = arith.constant 0 : index
    %c0_38 = arith.constant 0 : index
    %69 = vector.load %arg11[%c0_36, %c0_37, %c0_38] : memref<2x1x96xf32, #tpu.memory_space<vmem>>, vector<1x1x96xf32>
    %70 = vector.shape_cast %69 : vector<1x1x96xf32> to vector<1x96xf32>
    %71 = vector.broadcast %70 : vector<1x96xf32> to vector<8x96xf32>
    %72 = arith.addf %68, %71 : vector<8x96xf32>
    %73 = arith.truncf %72 : vector<8x96xf32> to vector<8x96xbf16>
    %74 = vector.extract_strided_slice %73 {offsets = [0, 0], sizes = [8, 8], strides = [1, 1]} : vector<8x96xbf16> to vector<8x8xbf16>
    %75 = vector.shape_cast %74 : vector<8x8xbf16> to vector<1x8x8xbf16>
    %76 = vector.extract_strided_slice %73 {offsets = [0, 8], sizes = [8, 8], strides = [1, 1]} : vector<8x96xbf16> to vector<8x8xbf16>
    %77 = vector.shape_cast %76 : vector<8x8xbf16> to vector<1x8x8xbf16>
    %78 = vector.extract_strided_slice %73 {offsets = [0, 16], sizes = [8, 8], strides = [1, 1]} : vector<8x96xbf16> to vector<8x8xbf16>
    %79 = vector.shape_cast %78 : vector<8x8xbf16> to vector<1x8x8xbf16>
    %80 = vector.extract_strided_slice %73 {offsets = [0, 24], sizes = [8, 8], strides = [1, 1]} : vector<8x96xbf16> to vector<8x8xbf16>
    %81 = vector.shape_cast %80 : vector<8x8xbf16> to vector<1x8x8xbf16>
    %82 = tpu.concatenate %75, %77, %79, %81 in 0 : vector<1x8x8xbf16>, vector<1x8x8xbf16>, vector<1x8x8xbf16>, vector<1x8x8xbf16> -> vector<4x8x8xbf16>
    %83 = vector.extract_strided_slice %73 {offsets = [0, 32], sizes = [8, 8], strides = [1, 1]} : vector<8x96xbf16> to vector<8x8xbf16>
    %84 = vector.shape_cast %83 : vector<8x8xbf16> to vector<1x8x8xbf16>
    %85 = vector.extract_strided_slice %73 {offsets = [0, 40], sizes = [8, 8], strides = [1, 1]} : vector<8x96xbf16> to vector<8x8xbf16>
    %86 = vector.shape_cast %85 : vector<8x8xbf16> to vector<1x8x8xbf16>
    %87 = vector.extract_strided_slice %73 {offsets = [0, 48], sizes = [8, 8], strides = [1, 1]} : vector<8x96xbf16> to vector<8x8xbf16>
    %88 = vector.shape_cast %87 : vector<8x8xbf16> to vector<1x8x8xbf16>
    %89 = vector.extract_strided_slice %73 {offsets = [0, 56], sizes = [8, 8], strides = [1, 1]} : vector<8x96xbf16> to vector<8x8xbf16>
    %90 = vector.shape_cast %89 : vector<8x8xbf16> to vector<1x8x8xbf16>
    %91 = tpu.concatenate %84, %86, %88, %90 in 0 : vector<1x8x8xbf16>, vector<1x8x8xbf16>, vector<1x8x8xbf16>, vector<1x8x8xbf16> -> vector<4x8x8xbf16>
    %92 = vector.extract_strided_slice %73 {offsets = [0, 64], sizes = [8, 8], strides = [1, 1]} : vector<8x96xbf16> to vector<8x8xbf16>
    %93 = vector.shape_cast %92 : vector<8x8xbf16> to vector<1x8x8xbf16>
    %94 = vector.extract_strided_slice %73 {offsets = [0, 72], sizes = [8, 8], strides = [1, 1]} : vector<8x96xbf16> to vector<8x8xbf16>
    %95 = vector.shape_cast %94 : vector<8x8xbf16> to vector<1x8x8xbf16>
    %96 = vector.extract_strided_slice %73 {offsets = [0, 80], sizes = [8, 8], strides = [1, 1]} : vector<8x96xbf16> to vector<8x8xbf16>
    %97 = vector.shape_cast %96 : vector<8x8xbf16> to vector<1x8x8xbf16>
    %98 = vector.extract_strided_slice %73 {offsets = [0, 88], sizes = [8, 8], strides = [1, 1]} : vector<8x96xbf16> to vector<8x8xbf16>
    %99 = vector.shape_cast %98 : vector<8x8xbf16> to vector<1x8x8xbf16>
    %100 = tpu.concatenate %93, %95, %97, %99 in 0 : vector<1x8x8xbf16>, vector<1x8x8xbf16>, vector<1x8x8xbf16>, vector<1x8x8xbf16> -> vector<4x8x8xbf16>
    "tpu.trace_start"() <{level = 10 : i32, message = "hqd,hkd->hqk"}> : () -> ()
    %cst_39 = arith.constant dense<0.000000e+00> : vector<4x8x8xf32>
    %101 = tpu.matmul %82, %91, %cst_39 {dimension_numbers = #tpu.dot_dimension_numbers<[2], [2], [1], [1], [0, 0, 0, 1, 1, 1], [0], [0]>} : vector<4x8x8xbf16>, vector<4x8x8xbf16>, vector<4x8x8xf32> -> vector<4x8x8xf32>
    "tpu.trace_stop"() : () -> ()
    %cst_40 = arith.constant 0.353553385 : f32
    %102 = vector.broadcast %cst_40 : f32 to vector<4x8x8xf32>
    %103 = arith.mulf %101, %102 : vector<4x8x8xf32>
    %104 = vector.shape_cast %64 : vector<1x8xf32> to vector<1x1x8xf32>
    %105 = vector.broadcast %104 : vector<1x1x8xf32> to vector<4x8x8xf32>
    %106 = arith.addf %103, %105 : vector<4x8x8xf32>
    %cst_41 = arith.constant dense<0xFF800000> : vector<4x8xf32>
    %107 = vector.multi_reduction <maximumf>, %106, %cst_41 [2] : vector<4x8x8xf32> to vector<4x8xf32>
    %108 = vector.shape_cast %107 : vector<4x8xf32> to vector<4x8x1xf32>
    %109 = vector.broadcast %108 : vector<4x8x1xf32> to vector<4x8x8xf32>
    %110 = arith.subf %106, %109 : vector<4x8x8xf32>
    %111 = math.exp %110 : vector<4x8x8xf32>
    %cst_42 = arith.constant dense<0.000000e+00> : vector<4x8xf32>
    %112 = vector.multi_reduction <add>, %111, %cst_42 [2] : vector<4x8x8xf32> to vector<4x8xf32>
    %113 = vector.shape_cast %112 : vector<4x8xf32> to vector<4x8x1xf32>
    %114 = vector.broadcast %113 : vector<4x8x1xf32> to vector<4x8x8xf32>
    %115 = arith.divf %111, %114 : vector<4x8x8xf32>
    %116 = arith.truncf %115 : vector<4x8x8xf32> to vector<4x8x8xbf16>
    "tpu.trace_start"() <{level = 10 : i32, message = "hqk,hkd->hqd"}> : () -> ()
    %cst_43 = arith.constant dense<0.000000e+00> : vector<4x8x8xf32>
    %117 = tpu.matmul %116, %100, %cst_43 {dimension_numbers = #tpu.dot_dimension_numbers<[2], [1], [1], [2], [0, 0, 0, 1, 1, 2], [0], [0]>} : vector<4x8x8xbf16>, vector<4x8x8xbf16>, vector<4x8x8xf32> -> vector<4x8x8xf32>
    "tpu.trace_stop"() : () -> ()
    %118 = vector.extract_strided_slice %117 {offsets = [0, 0, 0], sizes = [1, 8, 8], strides = [1, 1, 1]} : vector<4x8x8xf32> to vector<1x8x8xf32>
    %119 = vector.shape_cast %118 : vector<1x8x8xf32> to vector<8x8xf32>
    %120 = vector.extract_strided_slice %117 {offsets = [1, 0, 0], sizes = [1, 8, 8], strides = [1, 1, 1]} : vector<4x8x8xf32> to vector<1x8x8xf32>
    %121 = vector.shape_cast %120 : vector<1x8x8xf32> to vector<8x8xf32>
    %122 = vector.extract_strided_slice %117 {offsets = [2, 0, 0], sizes = [1, 8, 8], strides = [1, 1, 1]} : vector<4x8x8xf32> to vector<1x8x8xf32>
    %123 = vector.shape_cast %122 : vector<1x8x8xf32> to vector<8x8xf32>
    %124 = vector.extract_strided_slice %117 {offsets = [3, 0, 0], sizes = [1, 8, 8], strides = [1, 1, 1]} : vector<4x8x8xf32> to vector<1x8x8xf32>
    %125 = vector.shape_cast %124 : vector<1x8x8xf32> to vector<8x8xf32>
    %126 = tpu.concatenate %119, %121, %123, %125 in 1 : vector<8x8xf32>, vector<8x8xf32>, vector<8x8xf32>, vector<8x8xf32> -> vector<8x32xf32>
    %127 = arith.truncf %126 : vector<8x32xf32> to vector<8x32xbf16>
    %c0_44 = arith.constant 0 : index
    %c0_45 = arith.constant 0 : index
    %c0_46 = arith.constant 0 : index
    %128 = vector.load %arg12[%c0_44, %c0_45, %c0_46] : memref<2x32x32xbf16, #tpu.memory_space<vmem>>, vector<1x32x32xbf16>
    %129 = vector.shape_cast %128 : vector<1x32x32xbf16> to vector<32x32xbf16>
    %cst_47 = arith.constant dense<0.000000e+00> : vector<8x32xf32>
    %130 = tpu.matmul %127, %129, %cst_47 {dimension_numbers = #tpu.dot_dimension_numbers<[1], [0], [0], [1], [0, 0, 1, 1], [], []>} : vector<8x32xbf16>, vector<32x32xbf16>, vector<8x32xf32> -> vector<8x32xf32>
    %c0_48 = arith.constant 0 : index
    %c0_49 = arith.constant 0 : index
    %c0_50 = arith.constant 0 : index
    %131 = vector.load %arg13[%c0_48, %c0_49, %c0_50] : memref<2x1x32xf32, #tpu.memory_space<vmem>>, vector<1x1x32xf32>
    %132 = vector.shape_cast %131 : vector<1x1x32xf32> to vector<1x32xf32>
    %133 = vector.broadcast %132 : vector<1x32xf32> to vector<8x32xf32>
    %134 = arith.addf %130, %133 : vector<8x32xf32>
    %135 = arith.addf %134, %58 : vector<8x32xf32>
    %c0_51 = arith.constant 0 : index
    %c0_52 = arith.constant 0 : index
    %c0_53 = arith.constant 0 : index
    %136 = vector.load %arg14[%c0_51, %c0_52, %c0_53] : memref<2x1x32xf32, #tpu.memory_space<vmem>>, vector<1x1x32xf32>
    %137 = vector.shape_cast %136 : vector<1x1x32xf32> to vector<1x32xf32>
    %c0_54 = arith.constant 0 : index
    %c0_55 = arith.constant 0 : index
    %c0_56 = arith.constant 0 : index
    %138 = vector.load %arg15[%c0_54, %c0_55, %c0_56] : memref<2x1x32xf32, #tpu.memory_space<vmem>>, vector<1x1x32xf32>
    %139 = vector.shape_cast %138 : vector<1x1x32xf32> to vector<1x32xf32>
    %cst_57 = arith.constant dense<0.000000e+00> : vector<8xf32>
    %140 = vector.multi_reduction <add>, %135, %cst_57 [1] : vector<8x32xf32> to vector<8xf32>
    %141 = vector.shape_cast %140 : vector<8xf32> to vector<8x1xf32>
    %cst_58 = arith.constant 3.200000e+01 : f32
    %142 = vector.broadcast %cst_58 : f32 to vector<8x1xf32>
    %143 = arith.divf %141, %142 : vector<8x1xf32>
    %144 = vector.broadcast %143 : vector<8x1xf32> to vector<8x32xf32>
    %145 = arith.subf %135, %144 : vector<8x32xf32>
    %146 = arith.mulf %145, %145 : vector<8x32xf32>
    %cst_59 = arith.constant dense<0.000000e+00> : vector<8xf32>
    %147 = vector.multi_reduction <add>, %146, %cst_59 [1] : vector<8x32xf32> to vector<8xf32>
    %148 = vector.shape_cast %147 : vector<8xf32> to vector<8x1xf32>
    %cst_60 = arith.constant 3.200000e+01 : f32
    %149 = vector.broadcast %cst_60 : f32 to vector<8x1xf32>
    %150 = arith.divf %148, %149 : vector<8x1xf32>
    %151 = vector.broadcast %143 : vector<8x1xf32> to vector<8x32xf32>
    %152 = arith.subf %135, %151 : vector<8x32xf32>
    %cst_61 = arith.constant 9.99999996E-13 : f32
    %153 = vector.broadcast %cst_61 : f32 to vector<8x1xf32>
    %154 = arith.addf %150, %153 : vector<8x1xf32>
    %155 = math.rsqrt %154 : vector<8x1xf32>
    %156 = vector.broadcast %155 : vector<8x1xf32> to vector<8x32xf32>
    %157 = arith.mulf %152, %156 : vector<8x32xf32>
    %158 = vector.broadcast %137 : vector<1x32xf32> to vector<8x32xf32>
    %159 = arith.mulf %157, %158 : vector<8x32xf32>
    %160 = vector.broadcast %139 : vector<1x32xf32> to vector<8x32xf32>
    %161 = arith.addf %159, %160 : vector<8x32xf32>
    %162 = arith.truncf %161 : vector<8x32xf32> to vector<8x32xbf16>
    %c0_62 = arith.constant 0 : index
    %c0_63 = arith.constant 0 : index
    %c0_64 = arith.constant 0 : index
    %163 = vector.load %arg16[%c0_62, %c0_63, %c0_64] : memref<2x32x64xbf16, #tpu.memory_space<vmem>>, vector<1x32x64xbf16>
    %164 = vector.shape_cast %163 : vector<1x32x64xbf16> to vector<32x64xbf16>
    %cst_65 = arith.constant dense<0.000000e+00> : vector<8x64xf32>
    %165 = tpu.matmul %162, %164, %cst_65 {dimension_numbers = #tpu.dot_dimension_numbers<[1], [0], [0], [1], [0, 0, 1, 1], [], []>} : vector<8x32xbf16>, vector<32x64xbf16>, vector<8x64xf32> -> vector<8x64xf32>
    %c0_66 = arith.constant 0 : index
    %c0_67 = arith.constant 0 : index
    %c0_68 = arith.constant 0 : index
    %166 = vector.load %arg17[%c0_66, %c0_67, %c0_68] : memref<2x1x64xf32, #tpu.memory_space<vmem>>, vector<1x1x64xf32>
    %167 = vector.shape_cast %166 : vector<1x1x64xf32> to vector<1x64xf32>
    %168 = vector.broadcast %167 : vector<1x64xf32> to vector<8x64xf32>
    %169 = arith.addf %165, %168 : vector<8x64xf32>
    %cst_69 = arith.constant 5.000000e-01 : f32
    %170 = vector.broadcast %cst_69 : f32 to vector<8x64xf32>
    %171 = arith.mulf %170, %169 : vector<8x64xf32>
    %cst_70 = arith.constant 4.471500e-02 : f32
    %172 = vector.broadcast %cst_70 : f32 to vector<8x64xf32>
    %173 = arith.mulf %172, %169 : vector<8x64xf32>
    %174 = arith.mulf %173, %169 : vector<8x64xf32>
    %175 = arith.mulf %174, %169 : vector<8x64xf32>
    %176 = arith.addf %169, %175 : vector<8x64xf32>
    %cst_71 = arith.constant 0.797884583 : f32
    %177 = vector.broadcast %cst_71 : f32 to vector<8x64xf32>
    %178 = arith.mulf %177, %176 : vector<8x64xf32>
    %179 = math.tanh %178 : vector<8x64xf32>
    %cst_72 = arith.constant 1.000000e+00 : f32
    %180 = vector.broadcast %cst_72 : f32 to vector<8x64xf32>
    %181 = arith.addf %180, %179 : vector<8x64xf32>
    %182 = arith.mulf %171, %181 : vector<8x64xf32>
    %183 = arith.truncf %182 : vector<8x64xf32> to vector<8x64xbf16>
    %c0_73 = arith.constant 0 : index
    %c0_74 = arith.constant 0 : index
    %c0_75 = arith.constant 0 : index
    %184 = vector.load %arg18[%c0_73, %c0_74, %c0_75] : memref<2x64x32xbf16, #tpu.memory_space<vmem>>, vector<1x64x32xbf16>
    %185 = vector.shape_cast %184 : vector<1x64x32xbf16> to vector<64x32xbf16>
    %cst_76 = arith.constant dense<0.000000e+00> : vector<8x32xf32>
    %186 = tpu.matmul %183, %185, %cst_76 {dimension_numbers = #tpu.dot_dimension_numbers<[1], [0], [0], [1], [0, 0, 1, 1], [], []>} : vector<8x64xbf16>, vector<64x32xbf16>, vector<8x32xf32> -> vector<8x32xf32>
    %c0_77 = arith.constant 0 : index
    %c0_78 = arith.constant 0 : index
    %c0_79 = arith.constant 0 : index
    %187 = vector.load %arg19[%c0_77, %c0_78, %c0_79] : memref<2x1x32xf32, #tpu.memory_space<vmem>>, vector<1x1x32xf32>
    %188 = vector.shape_cast %187 : vector<1x1x32xf32> to vector<1x32xf32>
    %189 = vector.broadcast %188 : vector<1x32xf32> to vector<8x32xf32>
    %190 = arith.addf %186, %189 : vector<8x32xf32>
    %191 = arith.addf %190, %161 : vector<8x32xf32>
    %c0_80 = arith.constant 0 : index
    %c0_81 = arith.constant 0 : index
    %c0_82 = arith.constant 0 : index
    %192 = vector.load %arg20[%c0_80, %c0_81, %c0_82] : memref<2x1x32xf32, #tpu.memory_space<vmem>>, vector<1x1x32xf32>
    %193 = vector.shape_cast %192 : vector<1x1x32xf32> to vector<1x32xf32>
    %c0_83 = arith.constant 0 : index
    %c0_84 = arith.constant 0 : index
    %c0_85 = arith.constant 0 : index
    %194 = vector.load %arg21[%c0_83, %c0_84, %c0_85] : memref<2x1x32xf32, #tpu.memory_space<vmem>>, vector<1x1x32xf32>
    %195 = vector.shape_cast %194 : vector<1x1x32xf32> to vector<1x32xf32>
    %cst_86 = arith.constant dense<0.000000e+00> : vector<8xf32>
    %196 = vector.multi_reduction <add>, %191, %cst_86 [1] : vector<8x32xf32> to vector<8xf32>
    %197 = vector.shape_cast %196 : vector<8xf32> to vector<8x1xf32>
    %cst_87 = arith.constant 3.200000e+01 : f32
    %198 = vector.broadcast %cst_87 : f32 to vector<8x1xf32>
    %199 = arith.divf %197, %198 : vector<8x1xf32>
    %200 = vector.broadcast %199 : vector<8x1xf32> to vector<8x32xf32>
    %201 = arith.subf %191, %200 : vector<8x32xf32>
    %202 = arith.mulf %201, %201 : vector<8x32xf32>
    %cst_88 = arith.constant dense<0.000000e+00> : vector<8xf32>
    %203 = vector.multi_reduction <add>, %202, %cst_88 [1] : vector<8x32xf32> to vector<8xf32>
    %204 = vector.shape_cast %203 : vector<8xf32> to vector<8x1xf32>
    %cst_89 = arith.constant 3.200000e+01 : f32
    %205 = vector.broadcast %cst_89 : f32 to vector<8x1xf32>
    %206 = arith.divf %204, %205 : vector<8x1xf32>
    %207 = vector.broadcast %199 : vector<8x1xf32> to vector<8x32xf32>
    %208 = arith.subf %191, %207 : vector<8x32xf32>
    %cst_90 = arith.constant 9.99999996E-13 : f32
    %209 = vector.broadcast %cst_90 : f32 to vector<8x1xf32>
    %210 = arith.addf %206, %209 : vector<8x1xf32>
    %211 = math.rsqrt %210 : vector<8x1xf32>
    %212 = vector.broadcast %211 : vector<8x1xf32> to vector<8x32xf32>
    %213 = arith.mulf %208, %212 : vector<8x32xf32>
    %214 = vector.broadcast %193 : vector<1x32xf32> to vector<8x32xf32>
    %215 = arith.mulf %213, %214 : vector<8x32xf32>
    %216 = vector.broadcast %195 : vector<1x32xf32> to vector<8x32xf32>
    %217 = arith.addf %215, %216 : vector<8x32xf32>
    %218 = arith.truncf %217 : vector<8x32xf32> to vector<8x32xbf16>
    %c1 = arith.constant 1 : index
    %c0_91 = arith.constant 0 : index
    %c0_92 = arith.constant 0 : index
    %219 = vector.load %arg10[%c1, %c0_91, %c0_92] : memref<2x32x96xbf16, #tpu.memory_space<vmem>>, vector<1x32x96xbf16>
    %220 = vector.shape_cast %219 : vector<1x32x96xbf16> to vector<32x96xbf16>
    %cst_93 = arith.constant dense<0.000000e+00> : vector<8x96xf32>
    %221 = tpu.matmul %218, %220, %cst_93 {dimension_numbers = #tpu.dot_dimension_numbers<[1], [0], [0], [1], [0, 0, 1, 1], [], []>} : vector<8x32xbf16>, vector<32x96xbf16>, vector<8x96xf32> -> vector<8x96xf32>
    %c1_94 = arith.constant 1 : index
    %c0_95 = arith.constant 0 : index
    %c0_96 = arith.constant 0 : index
    %222 = vector.load %arg11[%c1_94, %c0_95, %c0_96] : memref<2x1x96xf32, #tpu.memory_space<vmem>>, vector<1x1x96xf32>
    %223 = vector.shape_cast %222 : vector<1x1x96xf32> to vector<1x96xf32>
    %224 = vector.broadcast %223 : vector<1x96xf32> to vector<8x96xf32>
    %225 = arith.addf %221, %224 : vector<8x96xf32>
    %226 = arith.truncf %225 : vector<8x96xf32> to vector<8x96xbf16>
    %227 = vector.extract_strided_slice %226 {offsets = [0, 0], sizes = [8, 8], strides = [1, 1]} : vector<8x96xbf16> to vector<8x8xbf16>
    %228 = vector.shape_cast %227 : vector<8x8xbf16> to vector<1x8x8xbf16>
    %229 = vector.extract_strided_slice %226 {offsets = [0, 8], sizes = [8, 8], strides = [1, 1]} : vector<8x96xbf16> to vector<8x8xbf16>
    %230 = vector.shape_cast %229 : vector<8x8xbf16> to vector<1x8x8xbf16>
    %231 = vector.extract_strided_slice %226 {offsets = [0, 16], sizes = [8, 8], strides = [1, 1]} : vector<8x96xbf16> to vector<8x8xbf16>
    %232 = vector.shape_cast %231 : vector<8x8xbf16> to vector<1x8x8xbf16>
    %233 = vector.extract_strided_slice %226 {offsets = [0, 24], sizes = [8, 8], strides = [1, 1]} : vector<8x96xbf16> to vector<8x8xbf16>
    %234 = vector.shape_cast %233 : vector<8x8xbf16> to vector<1x8x8xbf16>
    %235 = tpu.concatenate %228, %230, %232, %234 in 0 : vector<1x8x8xbf16>, vector<1x8x8xbf16>, vector<1x8x8xbf16>, vector<1x8x8xbf16> -> vector<4x8x8xbf16>
    %236 = vector.extract_strided_slice %226 {offsets = [0, 32], sizes = [8, 8], strides = [1, 1]} : vector<8x96xbf16> to vector<8x8xbf16>
    %237 = vector.shape_cast %236 : vector<8x8xbf16> to vector<1x8x8xbf16>
    %238 = vector.extract_strided_slice %226 {offsets = [0, 40], sizes = [8, 8], strides = [1, 1]} : vector<8x96xbf16> to vector<8x8xbf16>
    %239 = vector.shape_cast %238 : vector<8x8xbf16> to vector<1x8x8xbf16>
    %240 = vector.extract_strided_slice %226 {offsets = [0, 48], sizes = [8, 8], strides = [1, 1]} : vector<8x96xbf16> to vector<8x8xbf16>
    %241 = vector.shape_cast %240 : vector<8x8xbf16> to vector<1x8x8xbf16>
    %242 = vector.extract_strided_slice %226 {offsets = [0, 56], sizes = [8, 8], strides = [1, 1]} : vector<8x96xbf16> to vector<8x8xbf16>
    %243 = vector.shape_cast %242 : vector<8x8xbf16> to vector<1x8x8xbf16>
    %244 = tpu.concatenate %237, %239, %241, %243 in 0 : vector<1x8x8xbf16>, vector<1x8x8xbf16>, vector<1x8x8xbf16>, vector<1x8x8xbf16> -> vector<4x8x8xbf16>
    %245 = vector.extract_strided_slice %226 {offsets = [0, 64], sizes = [8, 8], strides = [1, 1]} : vector<8x96xbf16> to vector<8x8xbf16>
    %246 = vector.shape_cast %245 : vector<8x8xbf16> to vector<1x8x8xbf16>
    %247 = vector.extract_strided_slice %226 {offsets = [0, 72], sizes = [8, 8], strides = [1, 1]} : vector<8x96xbf16> to vector<8x8xbf16>
    %248 = vector.shape_cast %247 : vector<8x8xbf16> to vector<1x8x8xbf16>
    %249 = vector.extract_strided_slice %226 {offsets = [0, 80], sizes = [8, 8], strides = [1, 1]} : vector<8x96xbf16> to vector<8x8xbf16>
    %250 = vector.shape_cast %249 : vector<8x8xbf16> to vector<1x8x8xbf16>
    %251 = vector.extract_strided_slice %226 {offsets = [0, 88], sizes = [8, 8], strides = [1, 1]} : vector<8x96xbf16> to vector<8x8xbf16>
    %252 = vector.shape_cast %251 : vector<8x8xbf16> to vector<1x8x8xbf16>
    %253 = tpu.concatenate %246, %248, %250, %252 in 0 : vector<1x8x8xbf16>, vector<1x8x8xbf16>, vector<1x8x8xbf16>, vector<1x8x8xbf16> -> vector<4x8x8xbf16>
    "tpu.trace_start"() <{level = 10 : i32, message = "hqd,hkd->hqk"}> : () -> ()
    %cst_97 = arith.constant dense<0.000000e+00> : vector<4x8x8xf32>
    %254 = tpu.matmul %235, %244, %cst_97 {dimension_numbers = #tpu.dot_dimension_numbers<[2], [2], [1], [1], [0, 0, 0, 1, 1, 1], [0], [0]>} : vector<4x8x8xbf16>, vector<4x8x8xbf16>, vector<4x8x8xf32> -> vector<4x8x8xf32>
    "tpu.trace_stop"() : () -> ()
    %cst_98 = arith.constant 0.353553385 : f32
    %255 = vector.broadcast %cst_98 : f32 to vector<4x8x8xf32>
    %256 = arith.mulf %254, %255 : vector<4x8x8xf32>
    %257 = vector.shape_cast %64 : vector<1x8xf32> to vector<1x1x8xf32>
    %258 = vector.broadcast %257 : vector<1x1x8xf32> to vector<4x8x8xf32>
    %259 = arith.addf %256, %258 : vector<4x8x8xf32>
    %cst_99 = arith.constant dense<0xFF800000> : vector<4x8xf32>
    %260 = vector.multi_reduction <maximumf>, %259, %cst_99 [2] : vector<4x8x8xf32> to vector<4x8xf32>
    %261 = vector.shape_cast %260 : vector<4x8xf32> to vector<4x8x1xf32>
    %262 = vector.broadcast %261 : vector<4x8x1xf32> to vector<4x8x8xf32>
    %263 = arith.subf %259, %262 : vector<4x8x8xf32>
    %264 = math.exp %263 : vector<4x8x8xf32>
    %cst_100 = arith.constant dense<0.000000e+00> : vector<4x8xf32>
    %265 = vector.multi_reduction <add>, %264, %cst_100 [2] : vector<4x8x8xf32> to vector<4x8xf32>
    %266 = vector.shape_cast %265 : vector<4x8xf32> to vector<4x8x1xf32>
    %267 = vector.broadcast %266 : vector<4x8x1xf32> to vector<4x8x8xf32>
    %268 = arith.divf %264, %267 : vector<4x8x8xf32>
    %269 = arith.truncf %268 : vector<4x8x8xf32> to vector<4x8x8xbf16>
    "tpu.trace_start"() <{level = 10 : i32, message = "hqk,hkd->hqd"}> : () -> ()
    %cst_101 = arith.constant dense<0.000000e+00> : vector<4x8x8xf32>
    %270 = tpu.matmul %269, %253, %cst_101 {dimension_numbers = #tpu.dot_dimension_numbers<[2], [1], [1], [2], [0, 0, 0, 1, 1, 2], [0], [0]>} : vector<4x8x8xbf16>, vector<4x8x8xbf16>, vector<4x8x8xf32> -> vector<4x8x8xf32>
    "tpu.trace_stop"() : () -> ()
    %271 = vector.extract_strided_slice %270 {offsets = [0, 0, 0], sizes = [1, 8, 8], strides = [1, 1, 1]} : vector<4x8x8xf32> to vector<1x8x8xf32>
    %272 = vector.shape_cast %271 : vector<1x8x8xf32> to vector<8x8xf32>
    %273 = vector.extract_strided_slice %270 {offsets = [1, 0, 0], sizes = [1, 8, 8], strides = [1, 1, 1]} : vector<4x8x8xf32> to vector<1x8x8xf32>
    %274 = vector.shape_cast %273 : vector<1x8x8xf32> to vector<8x8xf32>
    %275 = vector.extract_strided_slice %270 {offsets = [2, 0, 0], sizes = [1, 8, 8], strides = [1, 1, 1]} : vector<4x8x8xf32> to vector<1x8x8xf32>
    %276 = vector.shape_cast %275 : vector<1x8x8xf32> to vector<8x8xf32>
    %277 = vector.extract_strided_slice %270 {offsets = [3, 0, 0], sizes = [1, 8, 8], strides = [1, 1, 1]} : vector<4x8x8xf32> to vector<1x8x8xf32>
    %278 = vector.shape_cast %277 : vector<1x8x8xf32> to vector<8x8xf32>
    %279 = tpu.concatenate %272, %274, %276, %278 in 1 : vector<8x8xf32>, vector<8x8xf32>, vector<8x8xf32>, vector<8x8xf32> -> vector<8x32xf32>
    %280 = arith.truncf %279 : vector<8x32xf32> to vector<8x32xbf16>
    %c1_102 = arith.constant 1 : index
    %c0_103 = arith.constant 0 : index
    %c0_104 = arith.constant 0 : index
    %281 = vector.load %arg12[%c1_102, %c0_103, %c0_104] : memref<2x32x32xbf16, #tpu.memory_space<vmem>>, vector<1x32x32xbf16>
    %282 = vector.shape_cast %281 : vector<1x32x32xbf16> to vector<32x32xbf16>
    %cst_105 = arith.constant dense<0.000000e+00> : vector<8x32xf32>
    %283 = tpu.matmul %280, %282, %cst_105 {dimension_numbers = #tpu.dot_dimension_numbers<[1], [0], [0], [1], [0, 0, 1, 1], [], []>} : vector<8x32xbf16>, vector<32x32xbf16>, vector<8x32xf32> -> vector<8x32xf32>
    %c1_106 = arith.constant 1 : index
    %c0_107 = arith.constant 0 : index
    %c0_108 = arith.constant 0 : index
    %284 = vector.load %arg13[%c1_106, %c0_107, %c0_108] : memref<2x1x32xf32, #tpu.memory_space<vmem>>, vector<1x1x32xf32>
    %285 = vector.shape_cast %284 : vector<1x1x32xf32> to vector<1x32xf32>
    %286 = vector.broadcast %285 : vector<1x32xf32> to vector<8x32xf32>
    %287 = arith.addf %283, %286 : vector<8x32xf32>
    %288 = arith.addf %287, %217 : vector<8x32xf32>
    %c1_109 = arith.constant 1 : index
    %c0_110 = arith.constant 0 : index
    %c0_111 = arith.constant 0 : index
    %289 = vector.load %arg14[%c1_109, %c0_110, %c0_111] : memref<2x1x32xf32, #tpu.memory_space<vmem>>, vector<1x1x32xf32>
    %290 = vector.shape_cast %289 : vector<1x1x32xf32> to vector<1x32xf32>
    %c1_112 = arith.constant 1 : index
    %c0_113 = arith.constant 0 : index
    %c0_114 = arith.constant 0 : index
    %291 = vector.load %arg15[%c1_112, %c0_113, %c0_114] : memref<2x1x32xf32, #tpu.memory_space<vmem>>, vector<1x1x32xf32>
    %292 = vector.shape_cast %291 : vector<1x1x32xf32> to vector<1x32xf32>
    %cst_115 = arith.constant dense<0.000000e+00> : vector<8xf32>
    %293 = vector.multi_reduction <add>, %288, %cst_115 [1] : vector<8x32xf32> to vector<8xf32>
    %294 = vector.shape_cast %293 : vector<8xf32> to vector<8x1xf32>
    %cst_116 = arith.constant 3.200000e+01 : f32
    %295 = vector.broadcast %cst_116 : f32 to vector<8x1xf32>
    %296 = arith.divf %294, %295 : vector<8x1xf32>
    %297 = vector.broadcast %296 : vector<8x1xf32> to vector<8x32xf32>
    %298 = arith.subf %288, %297 : vector<8x32xf32>
    %299 = arith.mulf %298, %298 : vector<8x32xf32>
    %cst_117 = arith.constant dense<0.000000e+00> : vector<8xf32>
    %300 = vector.multi_reduction <add>, %299, %cst_117 [1] : vector<8x32xf32> to vector<8xf32>
    %301 = vector.shape_cast %300 : vector<8xf32> to vector<8x1xf32>
    %cst_118 = arith.constant 3.200000e+01 : f32
    %302 = vector.broadcast %cst_118 : f32 to vector<8x1xf32>
    %303 = arith.divf %301, %302 : vector<8x1xf32>
    %304 = vector.broadcast %296 : vector<8x1xf32> to vector<8x32xf32>
    %305 = arith.subf %288, %304 : vector<8x32xf32>
    %cst_119 = arith.constant 9.99999996E-13 : f32
    %306 = vector.broadcast %cst_119 : f32 to vector<8x1xf32>
    %307 = arith.addf %303, %306 : vector<8x1xf32>
    %308 = math.rsqrt %307 : vector<8x1xf32>
    %309 = vector.broadcast %308 : vector<8x1xf32> to vector<8x32xf32>
    %310 = arith.mulf %305, %309 : vector<8x32xf32>
    %311 = vector.broadcast %290 : vector<1x32xf32> to vector<8x32xf32>
    %312 = arith.mulf %310, %311 : vector<8x32xf32>
    %313 = vector.broadcast %292 : vector<1x32xf32> to vector<8x32xf32>
    %314 = arith.addf %312, %313 : vector<8x32xf32>
    %315 = arith.truncf %314 : vector<8x32xf32> to vector<8x32xbf16>
    %c1_120 = arith.constant 1 : index
    %c0_121 = arith.constant 0 : index
    %c0_122 = arith.constant 0 : index
    %316 = vector.load %arg16[%c1_120, %c0_121, %c0_122] : memref<2x32x64xbf16, #tpu.memory_space<vmem>>, vector<1x32x64xbf16>
    %317 = vector.shape_cast %316 : vector<1x32x64xbf16> to vector<32x64xbf16>
    %cst_123 = arith.constant dense<0.000000e+00> : vector<8x64xf32>
    %318 = tpu.matmul %315, %317, %cst_123 {dimension_numbers = #tpu.dot_dimension_numbers<[1], [0], [0], [1], [0, 0, 1, 1], [], []>} : vector<8x32xbf16>, vector<32x64xbf16>, vector<8x64xf32> -> vector<8x64xf32>
    %c1_124 = arith.constant 1 : index
    %c0_125 = arith.constant 0 : index
    %c0_126 = arith.constant 0 : index
    %319 = vector.load %arg17[%c1_124, %c0_125, %c0_126] : memref<2x1x64xf32, #tpu.memory_space<vmem>>, vector<1x1x64xf32>
    %320 = vector.shape_cast %319 : vector<1x1x64xf32> to vector<1x64xf32>
    %321 = vector.broadcast %320 : vector<1x64xf32> to vector<8x64xf32>
    %322 = arith.addf %318, %321 : vector<8x64xf32>
    %cst_127 = arith.constant 5.000000e-01 : f32
    %323 = vector.broadcast %cst_127 : f32 to vector<8x64xf32>
    %324 = arith.mulf %323, %322 : vector<8x64xf32>
    %cst_128 = arith.constant 4.471500e-02 : f32
    %325 = vector.broadcast %cst_128 : f32 to vector<8x64xf32>
    %326 = arith.mulf %325, %322 : vector<8x64xf32>
    %327 = arith.mulf %326, %322 : vector<8x64xf32>
    %328 = arith.mulf %327, %322 : vector<8x64xf32>
    %329 = arith.addf %322, %328 : vector<8x64xf32>
    %cst_129 = arith.constant 0.797884583 : f32
    %330 = vector.broadcast %cst_129 : f32 to vector<8x64xf32>
    %331 = arith.mulf %330, %329 : vector<8x64xf32>
    %332 = math.tanh %331 : vector<8x64xf32>
    %cst_130 = arith.constant 1.000000e+00 : f32
    %333 = vector.broadcast %cst_130 : f32 to vector<8x64xf32>
    %334 = arith.addf %333, %332 : vector<8x64xf32>
    %335 = arith.mulf %324, %334 : vector<8x64xf32>
    %336 = arith.truncf %335 : vector<8x64xf32> to vector<8x64xbf16>
    %c1_131 = arith.constant 1 : index
    %c0_132 = arith.constant 0 : index
    %c0_133 = arith.constant 0 : index
    %337 = vector.load %arg18[%c1_131, %c0_132, %c0_133] : memref<2x64x32xbf16, #tpu.memory_space<vmem>>, vector<1x64x32xbf16>
    %338 = vector.shape_cast %337 : vector<1x64x32xbf16> to vector<64x32xbf16>
    %cst_134 = arith.constant dense<0.000000e+00> : vector<8x32xf32>
    %339 = tpu.matmul %336, %338, %cst_134 {dimension_numbers = #tpu.dot_dimension_numbers<[1], [0], [0], [1], [0, 0, 1, 1], [], []>} : vector<8x64xbf16>, vector<64x32xbf16>, vector<8x32xf32> -> vector<8x32xf32>
    %c1_135 = arith.constant 1 : index
    %c0_136 = arith.constant 0 : index
    %c0_137 = arith.constant 0 : index
    %340 = vector.load %arg19[%c1_135, %c0_136, %c0_137] : memref<2x1x32xf32, #tpu.memory_space<vmem>>, vector<1x1x32xf32>
    %341 = vector.shape_cast %340 : vector<1x1x32xf32> to vector<1x32xf32>
    %342 = vector.broadcast %341 : vector<1x32xf32> to vector<8x32xf32>
    %343 = arith.addf %339, %342 : vector<8x32xf32>
    %344 = arith.addf %343, %314 : vector<8x32xf32>
    %c1_138 = arith.constant 1 : index
    %c0_139 = arith.constant 0 : index
    %c0_140 = arith.constant 0 : index
    %345 = vector.load %arg20[%c1_138, %c0_139, %c0_140] : memref<2x1x32xf32, #tpu.memory_space<vmem>>, vector<1x1x32xf32>
    %346 = vector.shape_cast %345 : vector<1x1x32xf32> to vector<1x32xf32>
    %c1_141 = arith.constant 1 : index
    %c0_142 = arith.constant 0 : index
    %c0_143 = arith.constant 0 : index
    %347 = vector.load %arg21[%c1_141, %c0_142, %c0_143] : memref<2x1x32xf32, #tpu.memory_space<vmem>>, vector<1x1x32xf32>
    %348 = vector.shape_cast %347 : vector<1x1x32xf32> to vector<1x32xf32>
    %cst_144 = arith.constant dense<0.000000e+00> : vector<8xf32>
    %349 = vector.multi_reduction <add>, %344, %cst_144 [1] : vector<8x32xf32> to vector<8xf32>
    %350 = vector.shape_cast %349 : vector<8xf32> to vector<8x1xf32>
    %cst_145 = arith.constant 3.200000e+01 : f32
    %351 = vector.broadcast %cst_145 : f32 to vector<8x1xf32>
    %352 = arith.divf %350, %351 : vector<8x1xf32>
    %353 = vector.broadcast %352 : vector<8x1xf32> to vector<8x32xf32>
    %354 = arith.subf %344, %353 : vector<8x32xf32>
    %355 = arith.mulf %354, %354 : vector<8x32xf32>
    %cst_146 = arith.constant dense<0.000000e+00> : vector<8xf32>
    %356 = vector.multi_reduction <add>, %355, %cst_146 [1] : vector<8x32xf32> to vector<8xf32>
    %357 = vector.shape_cast %356 : vector<8xf32> to vector<8x1xf32>
    %cst_147 = arith.constant 3.200000e+01 : f32
    %358 = vector.broadcast %cst_147 : f32 to vector<8x1xf32>
    %359 = arith.divf %357, %358 : vector<8x1xf32>
    %360 = vector.broadcast %352 : vector<8x1xf32> to vector<8x32xf32>
    %361 = arith.subf %344, %360 : vector<8x32xf32>
    %cst_148 = arith.constant 9.99999996E-13 : f32
    %362 = vector.broadcast %cst_148 : f32 to vector<8x1xf32>
    %363 = arith.addf %359, %362 : vector<8x1xf32>
    %364 = math.rsqrt %363 : vector<8x1xf32>
    %365 = vector.broadcast %364 : vector<8x1xf32> to vector<8x32xf32>
    %366 = arith.mulf %361, %365 : vector<8x32xf32>
    %367 = vector.broadcast %346 : vector<1x32xf32> to vector<8x32xf32>
    %368 = arith.mulf %366, %367 : vector<8x32xf32>
    %369 = vector.broadcast %348 : vector<1x32xf32> to vector<8x32xf32>
    %370 = arith.addf %368, %369 : vector<8x32xf32>
    %371 = vector.extract_strided_slice %370 {offsets = [0, 0], sizes = [1, 32], strides = [1, 1]} : vector<8x32xf32> to vector<1x32xf32>
    %372 = arith.truncf %371 : vector<1x32xf32> to vector<1x32xbf16>
    %c0_149 = arith.constant 0 : index
    %c0_150 = arith.constant 0 : index
    %373 = vector.load %arg22[%c0_149, %c0_150] : memref<32x32xbf16, #tpu.memory_space<vmem>>, vector<32x32xbf16>
    %cst_151 = arith.constant dense<0.000000e+00> : vector<1x32xf32>
    %374 = tpu.matmul %372, %373, %cst_151 {dimension_numbers = #tpu.dot_dimension_numbers<[1], [0], [0], [1], [0, 0, 1, 1], [], []>} : vector<1x32xbf16>, vector<32x32xbf16>, vector<1x32xf32> -> vector<1x32xf32>
    %c0_152 = arith.constant 0 : index
    %c0_153 = arith.constant 0 : index
    %375 = vector.load %arg23[%c0_152, %c0_153] : memref<1x32xf32, #tpu.memory_space<vmem>>, vector<1x32xf32>
    %376 = arith.addf %374, %375 : vector<1x32xf32>
    %377 = math.tanh %376 : vector<1x32xf32>
    %378 = arith.truncf %377 : vector<1x32xf32> to vector<1x32xbf16>
    %c0_154 = arith.constant 0 : index
    %c0_155 = arith.constant 0 : index
    %379 = vector.load %arg24[%c0_154, %c0_155] : memref<32x128xbf16, #tpu.memory_space<vmem>>, vector<32x128xbf16>
    %cst_156 = arith.constant dense<0.000000e+00> : vector<1x128xf32>
    %380 = tpu.matmul %378, %379, %cst_156 {dimension_numbers = #tpu.dot_dimension_numbers<[1], [0], [0], [1], [0, 0, 1, 1], [], []>} : vector<1x32xbf16>, vector<32x128xbf16>, vector<1x128xf32> -> vector<1x128xf32>
    %c0_157 = arith.constant 0 : index
    %c0_158 = arith.constant 0 : index
    %381 = vector.load %arg25[%c0_157, %c0_158] : memref<1x128xf32, #tpu.memory_space<vmem>>, vector<1x128xf32>
    %382 = arith.addf %380, %381 : vector<1x128xf32>
    %c0_159 = arith.constant 0 : index
    %c0_160 = arith.constant 0 : index
    %c0_161 = arith.constant 0 : index
    %383 = vector.load %arg26[%c0_159, %c0_160, %c0_161] : memref<1x1x128xf32, #tpu.memory_space<vmem>>, vector<1x1x128xf32>
    %384 = vector.shape_cast %383 : vector<1x1x128xf32> to vector<1x128xf32>
    %385 = vector.shape_cast %382 : vector<1x128xf32> to vector<1x1x128xf32>
    tpu.vector_store %arg26[%c0_159, %c0_160, %c0_161], %385 {strides = array<i32>} : memref<1x1x128xf32, #tpu.memory_space<vmem>>, vector<1x1x128xf32>,
    return
  }
  func.func @transform_0(%arg0: i32) -> (i32, i32, i32) {
    %c0_i32 = arith.constant 0 : i32
    %c0_i32_0 = arith.constant 0 : i32
    %c0_i32_1 = arith.constant 0 : i32
    return %arg0, %c0_i32, %c0_i32_0 : i32, i32, i32
  }
  func.func @transform_1(%arg0: i32) -> (i32, i32, i32) {
    %c0_i32 = arith.constant 0 : i32
    %c0_i32_0 = arith.constant 0 : i32
    %c0_i32_1 = arith.constant 0 : i32
    return %arg0, %c0_i32, %c0_i32_0 : i32, i32, i32
  }
  func.func @transform_2(%arg0: i32) -> (i32, i32, i32) {
    %c0_i32 = arith.constant 0 : i32
    %c0_i32_0 = arith.constant 0 : i32
    %c0_i32_1 = arith.constant 0 : i32
    return %arg0, %c0_i32, %c0_i32_0 : i32, i32, i32
  }
  func.func @transform_3(%arg0: i32) -> (i32, i32) {
    %c0_i32 = arith.constant 0 : i32
    %c0_i32_0 = arith.constant 0 : i32
    %c0_i32_1 = arith.constant 0 : i32
    return %c0_i32, %c0_i32_0 : i32, i32
  }
  func.func @transform_4(%arg0: i32) -> (i32, i32) {
    %c0_i32 = arith.constant 0 : i32
    %c0_i32_0 = arith.constant 0 : i32
    %c0_i32_1 = arith.constant 0 : i32
    return %c0_i32, %c0_i32_0 : i32, i32
  }
  func.func @transform_5(%arg0: i32) -> (i32, i32) {
    %c0_i32 = arith.constant 0 : i32
    %c0_i32_0 = arith.constant 0 : i32
    %c0_i32_1 = arith.constant 0 : i32
    return %c0_i32, %c0_i32_0 : i32, i32
  }
  func.func @transform_6(%arg0: i32) -> (i32, i32) {
    %c0_i32 = arith.constant 0 : i32
    %c0_i32_0 = arith.constant 0 : i32
    %c0_i32_1 = arith.constant 0 : i32
    return %c0_i32, %c0_i32_0 : i32, i32
  }
  func.func @transform_7(%arg0: i32) -> (i32, i32) {
    %c0_i32 = arith.constant 0 : i32
    %c0_i32_0 = arith.constant 0 : i32
    %c0_i32_1 = arith.constant 0 : i32
    return %c0_i32, %c0_i32_0 : i32, i32
  }
  func.func @transform_8(%arg0: i32) -> (i32, i32) {
    %c0_i32 = arith.constant 0 : i32
    %c0_i32_0 = arith.constant 0 : i32
    %c0_i32_1 = arith.constant 0 : i32
    return %c0_i32, %c0_i32_0 : i32, i32
  }
  func.func @transform_9(%arg0: i32) -> (i32, i32, i32) {
    %c0_i32 = arith.constant 0 : i32
    %c0_i32_0 = arith.constant 0 : i32
    %c0_i32_1 = arith.constant 0 : i32
    %c0_i32_2 = arith.constant 0 : i32
    return %c0_i32, %c0_i32_0, %c0_i32_1 : i32, i32, i32
  }
  func.func @transform_10(%arg0: i32) -> (i32, i32, i32) {
    %c0_i32 = arith.constant 0 : i32
    %c0_i32_0 = arith.constant 0 : i32
    %c0_i32_1 = arith.constant 0 : i32
    %c0_i32_2 = arith.constant 0 : i32
    return %c0_i32, %c0_i32_0, %c0_i32_1 : i32, i32, i32
  }
  func.func @transform_11(%arg0: i32) -> (i32, i32, i32) {
    %c0_i32 = arith.constant 0 : i32
    %c0_i32_0 = arith.constant 0 : i32
    %c0_i32_1 = arith.constant 0 : i32
    %c0_i32_2 = arith.constant 0 : i32
    return %c0_i32, %c0_i32_0, %c0_i32_1 : i32, i32, i32
  }
  func.func @transform_12(%arg0: i32) -> (i32, i32, i32) {
    %c0_i32 = arith.constant 0 : i32
    %c0_i32_0 = arith.constant 0 : i32
    %c0_i32_1 = arith.constant 0 : i32
    %c0_i32_2 = arith.constant 0 : i32
    return %c0_i32, %c0_i32_0, %c0_i32_1 : i32, i32, i32
  }
  func.func @transform_13(%arg0: i32) -> (i32, i32, i32) {
    %c0_i32 = arith.constant 0 : i32
    %c0_i32_0 = arith.constant 0 : i32
    %c0_i32_1 = arith.constant 0 : i32
    %c0_i32_2 = arith.constant 0 : i32
    return %c0_i32, %c0_i32_0, %c0_i32_1 : i32, i32, i32
  }
  func.func @transform_14(%arg0: i32) -> (i32, i32, i32) {
    %c0_i32 = arith.constant 0 : i32
    %c0_i32_0 = arith.constant 0 : i32
    %c0_i32_1 = arith.constant 0 : i32
    %c0_i32_2 = arith.constant 0 : i32
    return %c0_i32, %c0_i32_0, %c0_i32_1 : i32, i32, i32
  }
  func.func @transform_15(%arg0: i32) -> (i32, i32, i32) {
    %c0_i32 = arith.constant 0 : i32
    %c0_i32_0 = arith.constant 0 : i32
    %c0_i32_1 = arith.constant 0 : i32
    %c0_i32_2 = arith.constant 0 : i32
    return %c0_i32, %c0_i32_0, %c0_i32_1 : i32, i32, i32
  }
  func.func @transform_16(%arg0: i32) -> (i32, i32, i32) {
    %c0_i32 = arith.constant 0 : i32
    %c0_i32_0 = arith.constant 0 : i32
    %c0_i32_1 = arith.constant 0 : i32
    %c0_i32_2 = arith.constant 0 : i32
    return %c0_i32, %c0_i32_0, %c0_i32_1 : i32, i32, i32
  }
  func.func @transform_17(%arg0: i32) -> (i32, i32, i32) {
    %c0_i32 = arith.constant 0 : i32
    %c0_i32_0 = arith.constant 0 : i32
    %c0_i32_1 = arith.constant 0 : i32
    %c0_i32_2 = arith.constant 0 : i32
    return %c0_i32, %c0_i32_0, %c0_i32_1 : i32, i32, i32
  }
  func.func @transform_18(%arg0: i32) -> (i32, i32, i32) {
    %c0_i32 = arith.constant 0 : i32
    %c0_i32_0 = arith.constant 0 : i32
    %c0_i32_1 = arith.constant 0 : i32
    %c0_i32_2 = arith.constant 0 : i32
    return %c0_i32, %c0_i32_0, %c0_i32_1 : i32, i32, i32
  }
  func.func @transform_19(%arg0: i32) -> (i32, i32, i32) {
    %c0_i32 = arith.constant 0 : i32
    %c0_i32_0 = arith.constant 0 : i32
    %c0_i32_1 = arith.constant 0 : i32
    %c0_i32_2 = arith.constant 0 : i32
    return %c0_i32, %c0_i32_0, %c0_i32_1 : i32, i32, i32
  }
  func.func @transform_20(%arg0: i32) -> (i32, i32, i32) {
    %c0_i32 = arith.constant 0 : i32
    %c0_i32_0 = arith.constant 0 : i32
    %c0_i32_1 = arith.constant 0 : i32
    %c0_i32_2 = arith.constant 0 : i32
    return %c0_i32, %c0_i32_0, %c0_i32_1 : i32, i32, i32
  }
  func.func @transform_21(%arg0: i32) -> (i32, i32) {
    %c0_i32 = arith.constant 0 : i32
    %c0_i32_0 = arith.constant 0 : i32
    %c0_i32_1 = arith.constant 0 : i32
    return %c0_i32, %c0_i32_0 : i32, i32
  }
  func.func @transform_22(%arg0: i32) -> (i32, i32) {
    %c0_i32 = arith.constant 0 : i32
    %c0_i32_0 = arith.constant 0 : i32
    %c0_i32_1 = arith.constant 0 : i32
    return %c0_i32, %c0_i32_0 : i32, i32
  }
  func.func @transform_23(%arg0: i32) -> (i32, i32) {
    %c0_i32 = arith.constant 0 : i32
    %c0_i32_0 = arith.constant 0 : i32
    %c0_i32_1 = arith.constant 0 : i32
    return %c0_i32, %c0_i32_0 : i32, i32
  }
  func.func @transform_24(%arg0: i32) -> (i32, i32) {
    %c0_i32 = arith.constant 0 : i32
    %c0_i32_0 = arith.constant 0 : i32
    %c0_i32_1 = arith.constant 0 : i32
    return %c0_i32, %c0_i32_0 : i32, i32
  }
  func.func @transform_25(%arg0: i32) -> (i32, i32, i32) {
    %c0_i32 = arith.constant 0 : i32
    %c0_i32_0 = arith.constant 0 : i32
    %c0_i32_1 = arith.constant 0 : i32
    return %arg0, %c0_i32, %c0_i32_0 : i32, i32, i32
  }
}

</mosaic_0001>

<llo_original>
// kernel: joint_modal_bert_forward.1
$region0: #{joint_modal_bert_forward.1}
  #allocation0 [shape = 'u32[]', space=smem, size = 0x4, offset = 0x4, fixed_abs, tag = 'smem constant byte address 0x4 - core index']
  #allocation1 [shape = 'u32[144,128]{1,0:T(1,128)}', space=vmem, size = 0x12000, scoped, tag = 'internal scratch']
  %s0 = inlined_call_operand.vmem [shape: f32[2,8,56], index: 0, kind: input, shape index: {}]
  %s1 = inlined_call_operand.vmem [shape: f32[2,8,32], index: 1, kind: input, shape index: {}]
  %s2 = inlined_call_operand.vmem [shape: f32[2,1,8], index: 2, kind: input, shape index: {}]
  %s3 = inlined_call_operand.vmem [shape: bf16[56,32], index: 3, kind: input, shape index: {}]
  %s4 = inlined_call_operand.vmem [shape: f32[1,32], index: 4, kind: input, shape index: {}, may-alias: {4,6,8,22}]
  %s5 = inlined_call_operand.vmem [shape: f32[1,32], index: 5, kind: input, shape index: {}, may-alias: {5,7}]
  %s6 = inlined_call_operand.vmem [shape: f32[1,32], index: 6, kind: input, shape index: {}, may-alias: {4,6,8,22}]
  %s7 = inlined_call_operand.vmem [shape: f32[1,32], index: 7, kind: input, shape index: {}, may-alias: {5,7}]
  %s8 = inlined_call_operand.vmem [shape: f32[1,32], index: 8, kind: input, shape index: {}, may-alias: {4,6,8,22}]
  %s9 = inlined_call_operand.vmem [shape: bf16[2,32,96], index: 9, kind: input, shape index: {}]
  %s10 = inlined_call_operand.vmem [shape: f32[2,1,96], index: 10, kind: input, shape index: {}]
  %s11 = inlined_call_operand.vmem [shape: bf16[2,32,32], index: 11, kind: input, shape index: {}]
  %s12 = inlined_call_operand.vmem [shape: f32[2,1,32], index: 12, kind: input, shape index: {}, may-alias: {12,14,18,20}]
  %s13 = inlined_call_operand.vmem [shape: f32[2,1,32], index: 13, kind: input, shape index: {}, may-alias: {13,19}]
  %s14 = inlined_call_operand.vmem [shape: f32[2,1,32], index: 14, kind: input, shape index: {}, may-alias: {12,14,18,20}]
  %s15 = inlined_call_operand.vmem [shape: bf16[2,32,64], index: 15, kind: input, shape index: {}]
  %s16 = inlined_call_operand.vmem [shape: f32[2,1,64], index: 16, kind: input, shape index: {}]
  %s17 = inlined_call_operand.vmem [shape: bf16[2,64,32], index: 17, kind: input, shape index: {}]
  %s18 = inlined_call_operand.vmem [shape: f32[2,1,32], index: 18, kind: input, shape index: {}, may-alias: {12,14,18,20}]
  %s19 = inlined_call_operand.vmem [shape: f32[2,1,32], index: 19, kind: input, shape index: {}, may-alias: {13,19}]
  %s20 = inlined_call_operand.vmem [shape: f32[2,1,32], index: 20, kind: input, shape index: {}, may-alias: {12,14,18,20}]
  %s21 = inlined_call_operand.vmem [shape: bf16[32,32], index: 21, kind: input, shape index: {}]
  %s22 = inlined_call_operand.vmem [shape: f32[1,32], index: 22, kind: input, shape index: {}, may-alias: {4,6,8,22}]
  %s23 = inlined_call_operand.vmem [shape: bf16[32,128], index: 23, kind: input, shape index: {}]
  %s24 = inlined_call_operand.vmem [shape: f32[1,128], index: 24, kind: input, shape index: {}]
  %s25 = inlined_call_operand.vmem [shape: f32[2,1,128], index: 25, kind: output, shape index: {}]
  %s26 = sld [smem:[#allocation0]]
  $region133: #{joint_modal_bert_forward.1} parent=0
    _
  %s28 = ssub.s32 1, %s26
  %s29 = scalar_select 0, %s28, %s26
  loop: start=0, step=1, limit=4
  $region2: #{joint_modal_bert_forward.1} parent=0 // loop_pre_header
    _
  $region3: #{joint_modal_bert_forward.1} parent=0 // loop_header
    %s31 = sphi 0, %s35
    %p32 = scmp.ge.s32.totalorder %s31, 4
    %s41 = sphi 0, %s43
    %s44 = sphi 0, %s41
    %s45 = sphi 0, %s44
    %s61 = sphi 0, %s45
    %s67 = sphi 0, %s69
    %s70 = sphi 0, %s67
    %s71 = sphi 0, %s70
    %s87 = sphi 0, %s71
    %s93 = sphi 0, %s95
    %s96 = sphi 0, %s93
    %s97 = sphi 0, %s96
    %s113 = sphi 0, %s97
    %s117 = sphi 0, %s117
    %s119 = sphi 0, %s117
    %s120 = sphi 0, %s119
    %s134 = sphi 0, %s120
    %s138 = sphi 0, %s138
    %s140 = sphi 0, %s138
    %s141 = sphi 0, %s140
    %s155 = sphi 0, %s141
    %s159 = sphi 0, %s159
    %s161 = sphi 0, %s159
    %s162 = sphi 0, %s161
    %s176 = sphi 0, %s162
    %s180 = sphi 0, %s180
    %s182 = sphi 0, %s180
    %s183 = sphi 0, %s182
    %s197 = sphi 0, %s183
    %s201 = sphi 0, %s201
    %s203 = sphi 0, %s201
    %s204 = sphi 0, %s203
    %s218 = sphi 0, %s204
    %s222 = sphi 0, %s222
    %s224 = sphi 0, %s222
    %s225 = sphi 0, %s224
    %s239 = sphi 0, %s225
    %s243 = sphi 0, %s243
    %s245 = sphi 0, %s243
    %s246 = sphi 0, %s245
    %s260 = sphi 0, %s246
    %s264 = sphi 0, %s264
    %s266 = sphi 0, %s264
    %s267 = sphi 0, %s266
    %s281 = sphi 0, %s267
    %s285 = sphi 0, %s285
    %s287 = sphi 0, %s285
    %s288 = sphi 0, %s287
    %s302 = sphi 0, %s288
    %s306 = sphi 0, %s306
    %s308 = sphi 0, %s306
    %s309 = sphi 0, %s308
    %s323 = sphi 0, %s309
    %s327 = sphi 0, %s327
    %s329 = sphi 0, %s327
    %s330 = sphi 0, %s329
    %s344 = sphi 0, %s330
    %s348 = sphi 0, %s348
    %s350 = sphi 0, %s348
    %s351 = sphi 0, %s350
    %s365 = sphi 0, %s351
    %s369 = sphi 0, %s369
    %s371 = sphi 0, %s369
    %s372 = sphi 0, %s371
    %s386 = sphi 0, %s372
    %s390 = sphi 0, %s390
    %s392 = sphi 0, %s390
    %s393 = sphi 0, %s392
    %s407 = sphi 0, %s393
    %s411 = sphi 0, %s411
    %s413 = sphi 0, %s411
    %s414 = sphi 0, %s413
    %s428 = sphi 0, %s414
    %s432 = sphi 0, %s432
    %s434 = sphi 0, %s432
    %s435 = sphi 0, %s434
    %s449 = sphi 0, %s435
    %s453 = sphi 0, %s453
    %s455 = sphi 0, %s453
    %s456 = sphi 0, %s455
    %s470 = sphi 0, %s456
    %s474 = sphi 0, %s474
    %s476 = sphi 0, %s474
    %s477 = sphi 0, %s476
    %s491 = sphi 0, %s477
    %s495 = sphi 0, %s495
    %s497 = sphi 0, %s495
    %s498 = sphi 0, %s497
    %s512 = sphi 0, %s498
    %s516 = sphi 0, %s516
    %s518 = sphi 0, %s516
    %s519 = sphi 0, %s518
    %s533 = sphi 0, %s519
    %s537 = sphi 0, %s537
    %s539 = sphi 0, %s537
    %s540 = sphi 0, %s539
    %s554 = sphi 0, %s540
    %s558 = sphi 0, %s558
    %s560 = sphi 0, %s558
    %s561 = sphi 0, %s560
    %s575 = sphi 0, %s561
    %s581 = sphi 0, %s583
    %s584 = sphi 0, %s581
    %s585 = sphi 0, %s584
    %s601 = sphi 0, %s585
  $region4: #{joint_modal_bert_forward.1} parent=0 // loop_header_branch
    %34 = sbr.rel (%p32) target = $region8
  $region5: #{joint_modal_bert_forward.1} parent=0 // loop_body
    %s36 = ssub.s32 %s31, 1
    %s37 = ssub.s32 %s31, 2
    %s38 = sadd.s32 %s31, 1
    %s39 = ssub.s32 %s31, %s38
    %p40 = scmp.eq.s32.totalorder %s39, 0
    %s42 = sadd.s32 %s41, 1
    %s43 = scalar_select %p40, %s41, %s42
    %p46 = pneg %p40
    %p47 = scmp.eq.s32.totalorder %s31, 1
    %p48 = por %p46, %p47
    %p49 = scmp.ne.s32.totalorder %s41, %s44
    %p50 = scmp.eq.s32.totalorder %s31, 0
    %p51 = por %p49, %p50
    %p52 = scmp.ne.s32.totalorder %s41, %s44
    %p53 = scmp.eq.s32.totalorder %s36, 1
    %p54 = por %p52, %p53
    %p55 = scmp.ne.s32.totalorder %s44, %s45
    %p56 = scmp.eq.s32.totalorder %s36, 0
    %p57 = por %p55, %p56
    %p58 = scmp.ne.s32.totalorder %s44, %s45
    %p59 = scmp.eq.s32.totalorder %s37, 1
    %p60 = por %p58, %p59
    %p62 = scmp.ne.s32.totalorder %s45, %s61
    %p63 = scmp.eq.s32.totalorder %s37, 0
    %p64 = por %p62, %p63
    %s65 = ssub.s32 %s31, %s38
    %p66 = scmp.eq.s32.totalorder %s65, 0
    %s68 = sadd.s32 %s67, 1
    %s69 = scalar_select %p66, %s67, %s68
    %p72 = pneg %p66
    %p73 = scmp.eq.s32.totalorder %s31, 1
    %p74 = por %p72, %p73
    %p75 = scmp.ne.s32.totalorder %s67, %s70
    %p76 = scmp.eq.s32.totalorder %s31, 0
    %p77 = por %p75, %p76
    %p78 = scmp.ne.s32.totalorder %s67, %s70
    %p79 = scmp.eq.s32.totalorder %s36, 1
    %p80 = por %p78, %p79
    %p81 = scmp.ne.s32.totalorder %s70, %s71
    %p82 = scmp.eq.s32.totalorder %s36, 0
    %p83 = por %p81, %p82
    %p84 = scmp.ne.s32.totalorder %s70, %s71
    %p85 = scmp.eq.s32.totalorder %s37, 1
    %p86 = por %p84, %p85
    %p88 = scmp.ne.s32.totalorder %s71, %s87
    %p89 = scmp.eq.s32.totalorder %s37, 0
    %p90 = por %p88, %p89
    %s91 = ssub.s32 %s31, %s38
    %p92 = scmp.eq.s32.totalorder %s91, 0
    %s94 = sadd.s32 %s93, 1
    %s95 = scalar_select %p92, %s93, %s94
    %p98 = pneg %p92
    %p99 = scmp.eq.s32.totalorder %s31, 1
    %p100 = por %p98, %p99
    %p101 = scmp.ne.s32.totalorder %s93, %s96
    %p102 = scmp.eq.s32.totalorder %s31, 0
    %p103 = por %p101, %p102
    %p104 = scmp.ne.s32.totalorder %s93, %s96
    %p105 = scmp.eq.s32.totalorder %s36, 1
    %p106 = por %p104, %p105
    %p107 = scmp.ne.s32.totalorder %s96, %s97
    %p108 = scmp.eq.s32.totalorder %s36, 0
    %p109 = por %p107, %p108
    %p110 = scmp.ne.s32.totalorder %s96, %s97
    %p111 = scmp.eq.s32.totalorder %s37, 1
    %p112 = por %p110, %p111
    %p114 = scmp.ne.s32.totalorder %s97, %s113
    %p115 = scmp.eq.s32.totalorder %s37, 0
    %p116 = por %p114, %p115
    %s118 = sadd.s32 %s117, 1
    %p121 = scmp.eq.s32.totalorder %s31, 1
    %p122 = scmp.ne.s32.totalorder %s117, %s119
    %p123 = scmp.eq.s32.totalorder %s31, 0
    %p124 = por %p122, %p123
    %p125 = scmp.ne.s32.totalorder %s117, %s119
    %p126 = scmp.eq.s32.totalorder %s36, 1
    %p127 = por %p125, %p126
    %p128 = scmp.ne.s32.totalorder %s119, %s120
    %p129 = scmp.eq.s32.totalorder %s36, 0
    %p130 = por %p128, %p129
    %p131 = scmp.ne.s32.totalorder %s119, %s120
    %p132 = scmp.eq.s32.totalorder %s37, 1
    %p133 = por %p131, %p132
    %p135 = scmp.ne.s32.totalorder %s120, %s134
    %p136 = scmp.eq.s32.totalorder %s37, 0
    %p137 = por %p135, %p136
    %s139 = sadd.s32 %s138, 1
    %p142 = scmp.eq.s32.totalorder %s31, 1
    %p143 = scmp.ne.s32.totalorder %s138, %s140
    %p144 = scmp.eq.s32.totalorder %s31, 0
    %p145 = por %p143, %p144
    %p146 = scmp.ne.s32.totalorder %s138, %s140
    %p147 = scmp.eq.s32.totalorder %s36, 1
    %p148 = por %p146, %p147
    %p149 = scmp.ne.s32.totalorder %s140, %s141
    %p150 = scmp.eq.s32.totalorder %s36, 0
    %p151 = por %p149, %p150
    %p152 = scmp.ne.s32.totalorder %s140, %s141
    %p153 = scmp.eq.s32.totalorder %s37, 1
    %p154 = por %p152, %p153
    %p156 = scmp.ne.s32.totalorder %s141, %s155
    %p157 = scmp.eq.s32.totalorder %s37, 0
    %p158 = por %p156, %p157
    %s160 = sadd.s32 %s159, 1
    %p163 = scmp.eq.s32.totalorder %s31, 1
    %p164 = scmp.ne.s32.totalorder %s159, %s161
    %p165 = scmp.eq.s32.totalorder %s31, 0
    %p166 = por %p164, %p165
    %p167 = scmp.ne.s32.totalorder %s159, %s161
    %p168 = scmp.eq.s32.totalorder %s36, 1
    %p169 = por %p167, %p168
    %p170 = scmp.ne.s32.totalorder %s161, %s162
    %p171 = scmp.eq.s32.totalorder %s36, 0
    %p172 = por %p170, %p171
    %p173 = scmp.ne.s32.totalorder %s161, %s162
    %p174 = scmp.eq.s32.totalorder %s37, 1
    %p175 = por %p173, %p174
    %p177 = scmp.ne.s32.totalorder %s162, %s176
    %p178 = scmp.eq.s32.totalorder %s37, 0
    %p179 = por %p177, %p178
    %s181 = sadd.s32 %s180, 1
    %p184 = scmp.eq.s32.totalorder %s31, 1
    %p185 = scmp.ne.s32.totalorder %s180, %s182
    %p186 = scmp.eq.s32.totalorder %s31, 0
    %p187 = por %p185, %p186
    %p188 = scmp.ne.s32.totalorder %s180, %s182
    %p189 = scmp.eq.s32.totalorder %s36, 1
    %p190 = por %p188, %p189
    %p191 = scmp.ne.s32.totalorder %s182, %s183
    %p192 = scmp.eq.s32.totalorder %s36, 0
    %p193 = por %p191, %p192
    %p194 = scmp.ne.s32.totalorder %s182, %s183
    %p195 = scmp.eq.s32.totalorder %s37, 1
    %p196 = por %p194, %p195
    %p198 = scmp.ne.s32.totalorder %s183, %s197
    %p199 = scmp.eq.s32.totalorder %s37, 0
    %p200 = por %p198, %p199
    %s202 = sadd.s32 %s201, 1
    %p205 = scmp.eq.s32.totalorder %s31, 1
    %p206 = scmp.ne.s32.totalorder %s201, %s203
    %p207 = scmp.eq.s32.totalorder %s31, 0
    %p208 = por %p206, %p207
    %p209 = scmp.ne.s32.totalorder %s201, %s203
    %p210 = scmp.eq.s32.totalorder %s36, 1
    %p211 = por %p209, %p210
    %p212 = scmp.ne.s32.totalorder %s203, %s204
    %p213 = scmp.eq.s32.totalorder %s36, 0
    %p214 = por %p212, %p213
    %p215 = scmp.ne.s32.totalorder %s203, %s204
    %p216 = scmp.eq.s32.totalorder %s37, 1
    %p217 = por %p215, %p216
    %p219 = scmp.ne.s32.totalorder %s204, %s218
    %p220 = scmp.eq.s32.totalorder %s37, 0
    %p221 = por %p219, %p220
    %s223 = sadd.s32 %s222, 1
    %p226 = scmp.eq.s32.totalorder %s31, 1
    %p227 = scmp.ne.s32.totalorder %s222, %s224
    %p228 = scmp.eq.s32.totalorder %s31, 0
    %p229 = por %p227, %p228
    %p230 = scmp.ne.s32.totalorder %s222, %s224
    %p231 = scmp.eq.s32.totalorder %s36, 1
    %p232 = por %p230, %p231
    %p233 = scmp.ne.s32.totalorder %s224, %s225
    %p234 = scmp.eq.s32.totalorder %s36, 0
    %p235 = por %p233, %p234
    %p236 = scmp.ne.s32.totalorder %s224, %s225
    %p237 = scmp.eq.s32.totalorder %s37, 1
    %p238 = por %p236, %p237
    %p240 = scmp.ne.s32.totalorder %s225, %s239
    %p241 = scmp.eq.s32.totalorder %s37, 0
    %p242 = por %p240, %p241
    %s244 = sadd.s32 %s243, 1
    %p247 = scmp.eq.s32.totalorder %s31, 1
    %p248 = scmp.ne.s32.totalorder %s243, %s245
    %p249 = scmp.eq.s32.totalorder %s31, 0
    %p250 = por %p248, %p249
    %p251 = scmp.ne.s32.totalorder %s243, %s245
    %p252 = scmp.eq.s32.totalorder %s36, 1
    %p253 = por %p251, %p252
    %p254 = scmp.ne.s32.totalorder %s245, %s246
    %p255 = scmp.eq.s32.totalorder %s36, 0
    %p256 = por %p254, %p255
    %p257 = scmp.ne.s32.totalorder %s245, %s246
    %p258 = scmp.eq.s32.totalorder %s37, 1
    %p259 = por %p257, %p258
    %p261 = scmp.ne.s32.totalorder %s246, %s260
    %p262 = scmp.eq.s32.totalorder %s37, 0
    %p263 = por %p261, %p262
    %s265 = sadd.s32 %s264, 1
    %p268 = scmp.eq.s32.totalorder %s31, 1
    %p269 = scmp.ne.s32.totalorder %s264, %s266
    %p270 = scmp.eq.s32.totalorder %s31, 0
    %p271 = por %p269, %p270
    %p272 = scmp.ne.s32.totalorder %s264, %s266
    %p273 = scmp.eq.s32.totalorder %s36, 1
    %p274 = por %p272, %p273
    %p275 = scmp.ne.s32.totalorder %s266, %s267
    %p276 = scmp.eq.s32.totalorder %s36, 0
    %p277 = por %p275, %p276
    %p278 = scmp.ne.s32.totalorder %s266, %s267
    %p279 = scmp.eq.s32.totalorder %s37, 1
    %p280 = por %p278, %p279
    %p282 = scmp.ne.s32.totalorder %s267, %s281
    %p283 = scmp.eq.s32.totalorder %s37, 0
    %p284 = por %p282, %p283
    %s286 = sadd.s32 %s285, 1
    %p289 = scmp.eq.s32.totalorder %s31, 1
    %p290 = scmp.ne.s32.totalorder %s285, %s287
    %p291 = scmp.eq.s32.totalorder %s31, 0
    %p292 = por %p290, %p291
    %p293 = scmp.ne.s32.totalorder %s285, %s287
    %p294 = scmp.eq.s32.totalorder %s36, 1
    %p295 = por %p293, %p294
    %p296 = scmp.ne.s32.totalorder %s287, %s288
    %p297 = scmp.eq.s32.totalorder %s36, 0
    %p298 = por %p296, %p297
    %p299 = scmp.ne.s32.totalorder %s287, %s288
    %p300 = scmp.eq.s32.totalorder %s37, 1
    %p301 = por %p299, %p300
    %p303 = scmp.ne.s32.totalorder %s288, %s302
    %p304 = scmp.eq.s32.totalorder %s37, 0
    %p305 = por %p303, %p304
    %s307 = sadd.s32 %s306, 1
    %p310 = scmp.eq.s32.totalorder %s31, 1
    %p311 = scmp.ne.s32.totalorder %s306, %s308
    %p312 = scmp.eq.s32.totalorder %s31, 0
    %p313 = por %p311, %p312
    %p314 = scmp.ne.s32.totalorder %s306, %s308
    %p315 = scmp.eq.s32.totalorder %s36, 1
    %p316 = por %p314, %p315
    %p317 = scmp.ne.s32.totalorder %s308, %s309
    %p318 = scmp.eq.s32.totalorder %s36, 0
    %p319 = por %p317, %p318
    %p320 = scmp.ne.s32.totalorder %s308, %s309
    %p321 = scmp.eq.s32.totalorder %s37, 1
    %p322 = por %p320, %p321
    %p324 = scmp.ne.s32.totalorder %s309, %s323
    %p325 = scmp.eq.s32.totalorder %s37, 0
    %p326 = por %p324, %p325
    %s328 = sadd.s32 %s327, 1
    %p331 = scmp.eq.s32.totalorder %s31, 1
    %p332 = scmp.ne.s32.totalorder %s327, %s329
    %p333 = scmp.eq.s32.totalorder %s31, 0
    %p334 = por %p332, %p333
    %p335 = scmp.ne.s32.totalorder %s327, %s329
    %p336 = scmp.eq.s32.totalorder %s36, 1
    %p337 = por %p335, %p336
    %p338 = scmp.ne.s32.totalorder %s329, %s330
    %p339 = scmp.eq.s32.totalorder %s36, 0
    %p340 = por %p338, %p339
    %p341 = scmp.ne.s32.totalorder %s329, %s330
    %p342 = scmp.eq.s32.totalorder %s37, 1
    %p343 = por %p341, %p342
    %p345 = scmp.ne.s32.totalorder %s330, %s344
    %p346 = scmp.eq.s32.totalorder %s37, 0
    %p347 = por %p345, %p346
    %s349 = sadd.s32 %s348, 1
    %p352 = scmp.eq.s32.totalorder %s31, 1
    %p353 = scmp.ne.s32.totalorder %s348, %s350
    %p354 = scmp.eq.s32.totalorder %s31, 0
    %p355 = por %p353, %p354
    %p356 = scmp.ne.s32.totalorder %s348, %s350
    %p357 = scmp.eq.s32.totalorder %s36, 1
    %p358 = por %p356, %p357
    %p359 = scmp.ne.s32.totalorder %s350, %s351
    %p360 = scmp.eq.s32.totalorder %s36, 0
    %p361 = por %p359, %p360
    %p362 = scmp.ne.s32.totalorder %s350, %s351
    %p363 = scmp.eq.s32.totalorder %s37, 1
    %p364 = por %p362, %p363
    %p366 = scmp.ne.s32.totalorder %s351, %s365
    %p367 = scmp.eq.s32.totalorder %s37, 0
    %p368 = por %p366, %p367
    %s370 = sadd.s32 %s369, 1
    %p373 = scmp.eq.s32.totalorder %s31, 1
    %p374 = scmp.ne.s32.totalorder %s369, %s371
    %p375 = scmp.eq.s32.totalorder %s31, 0
    %p376 = por %p374, %p375
    %p377 = scmp.ne.s32.totalorder %s369, %s371
    %p378 = scmp.eq.s32.totalorder %s36, 1
    %p379 = por %p377, %p378
    %p380 = scmp.ne.s32.totalorder %s371, %s372
    %p381 = scmp.eq.s32.totalorder %s36, 0
    %p382 = por %p380, %p381
    %p383 = scmp.ne.s32.totalorder %s371, %s372
    %p384 = scmp.eq.s32.totalorder %s37, 1
    %p385 = por %p383, %p384
    %p387 = scmp.ne.s32.totalorder %s372, %s386
    %p388 = scmp.eq.s32.totalorder %s37, 0
    %p389 = por %p387, %p388
    %s391 = sadd.s32 %s390, 1
    %p394 = scmp.eq.s32.totalorder %s31, 1
    %p395 = scmp.ne.s32.totalorder %s390, %s392
    %p396 = scmp.eq.s32.totalorder %s31, 0
    %p397 = por %p395, %p396
    %p398 = scmp.ne.s32.totalorder %s390, %s392
    %p399 = scmp.eq.s32.totalorder %s36, 1
    %p400 = por %p398, %p399
    %p401 = scmp.ne.s32.totalorder %s392, %s393
    %p402 = scmp.eq.s32.totalorder %s36, 0
    %p403 = por %p401, %p402
    %p404 = scmp.ne.s32.totalorder %s392, %s393
    %p405 = scmp.eq.s32.totalorder %s37, 1
    %p406 = por %p404, %p405
    %p408 = scmp.ne.s32.totalorder %s393, %s407
    %p409 = scmp.eq.s32.totalorder %s37, 0
    %p410 = por %p408, %p409
    %s412 = sadd.s32 %s411, 1
    %p415 = scmp.eq.s32.totalorder %s31, 1
    %p416 = scmp.ne.s32.totalorder %s411, %s413
    %p417 = scmp.eq.s32.totalorder %s31, 0
    %p418 = por %p416, %p417
    %p419 = scmp.ne.s32.totalorder %s411, %s413
    %p420 = scmp.eq.s32.totalorder %s36, 1
    %p421 = por %p419, %p420
    %p422 = scmp.ne.s32.totalorder %s413, %s414
    %p423 = scmp.eq.s32.totalorder %s36, 0
    %p424 = por %p422, %p423
    %p425 = scmp.ne.s32.totalorder %s413, %s414
    %p426 = scmp.eq.s32.totalorder %s37, 1
    %p427 = por %p425, %p426
    %p429 = scmp.ne.s32.totalorder %s414, %s428
    %p430 = scmp.eq.s32.totalorder %s37, 0
    %p431 = por %p429, %p430
    %s433 = sadd.s32 %s432, 1
    %p436 = scmp.eq.s32.totalorder %s31, 1
    %p437 = scmp.ne.s32.totalorder %s432, %s434
    %p438 = scmp.eq.s32.totalorder %s31, 0
    %p439 = por %p437, %p438
    %p440 = scmp.ne.s32.totalorder %s432, %s434
    %p441 = scmp.eq.s32.totalorder %s36, 1
    %p442 = por %p440, %p441
    %p443 = scmp.ne.s32.totalorder %s434, %s435
    %p444 = scmp.eq.s32.totalorder %s36, 0
    %p445 = por %p443, %p444
    %p446 = scmp.ne.s32.totalorder %s434, %s435
    %p447 = scmp.eq.s32.totalorder %s37, 1
    %p448 = por %p446, %p447
    %p450 = scmp.ne.s32.totalorder %s435, %s449
    %p451 = scmp.eq.s32.totalorder %s37, 0
    %p452 = por %p450, %p451
    %s454 = sadd.s32 %s453, 1
    %p457 = scmp.eq.s32.totalorder %s31, 1
    %p458 = scmp.ne.s32.totalorder %s453, %s455
    %p459 = scmp.eq.s32.totalorder %s31, 0
    %p460 = por %p458, %p459
    %p461 = scmp.ne.s32.totalorder %s453, %s455
    %p462 = scmp.eq.s32.totalorder %s36, 1
    %p463 = por %p461, %p462
    %p464 = scmp.ne.s32.totalorder %s455, %s456
    %p465 = scmp.eq.s32.totalorder %s36, 0
    %p466 = por %p464, %p465
    %p467 = scmp.ne.s32.totalorder %s455, %s456
    %p468 = scmp.eq.s32.totalorder %s37, 1
    %p469 = por %p467, %p468
    %p471 = scmp.ne.s32.totalorder %s456, %s470
    %p472 = scmp.eq.s32.totalorder %s37, 0
    %p473 = por %p471, %p472
    %s475 = sadd.s32 %s474, 1
    %p478 = scmp.eq.s32.totalorder %s31, 1
    %p479 = scmp.ne.s32.totalorder %s474, %s476
    %p480 = scmp.eq.s32.totalorder %s31, 0
    %p481 = por %p479, %p480
    %p482 = scmp.ne.s32.totalorder %s474, %s476
    %p483 = scmp.eq.s32.totalorder %s36, 1
    %p484 = por %p482, %p483
    %p485 = scmp.ne.s32.totalorder %s476, %s477
    %p486 = scmp.eq.s32.totalorder %s36, 0
    %p487 = por %p485, %p486
    %p488 = scmp.ne.s32.totalorder %s476, %s477
    %p489 = scmp.eq.s32.totalorder %s37, 1
    %p490 = por %p488, %p489
    %p492 = scmp.ne.s32.totalorder %s477, %s491
    %p493 = scmp.eq.s32.totalorder %s37, 0
    %p494 = por %p492, %p493
    %s496 = sadd.s32 %s495, 1
    %p499 = scmp.eq.s32.totalorder %s31, 1
    %p500 = scmp.ne.s32.totalorder %s495, %s497
    %p501 = scmp.eq.s32.totalorder %s31, 0
    %p502 = por %p500, %p501
    %p503 = scmp.ne.s32.totalorder %s495, %s497
    %p504 = scmp.eq.s32.totalorder %s36, 1
    %p505 = por %p503, %p504
    %p506 = scmp.ne.s32.totalorder %s497, %s498
    %p507 = scmp.eq.s32.totalorder %s36, 0
    %p508 = por %p506, %p507
    %p509 = scmp.ne.s32.totalorder %s497, %s498
    %p510 = scmp.eq.s32.totalorder %s37, 1
    %p511 = por %p509, %p510
    %p513 = scmp.ne.s32.totalorder %s498, %s512
    %p514 = scmp.eq.s32.totalorder %s37, 0
    %p515 = por %p513, %p514
    %s517 = sadd.s32 %s516, 1
    %p520 = scmp.eq.s32.totalorder %s31, 1
    %p521 = scmp.ne.s32.totalorder %s516, %s518
    %p522 = scmp.eq.s32.totalorder %s31, 0
    %p523 = por %p521, %p522
    %p524 = scmp.ne.s32.totalorder %s516, %s518
    %p525 = scmp.eq.s32.totalorder %s36, 1
    %p526 = por %p524, %p525
    %p527 = scmp.ne.s32.totalorder %s518, %s519
    %p528 = scmp.eq.s32.totalorder %s36, 0
    %p529 = por %p527, %p528
    %p530 = scmp.ne.s32.totalorder %s518, %s519
    %p531 = scmp.eq.s32.totalorder %s37, 1
    %p532 = por %p530, %p531
    %p534 = scmp.ne.s32.totalorder %s519, %s533
    %p535 = scmp.eq.s32.totalorder %s37, 0
    %p536 = por %p534, %p535
    %s538 = sadd.s32 %s537, 1
    %p541 = scmp.eq.s32.totalorder %s31, 1
    %p542 = scmp.ne.s32.totalorder %s537, %s539
    %p543 = scmp.eq.s32.totalorder %s31, 0
    %p544 = por %p542, %p543
    %p545 = scmp.ne.s32.totalorder %s537, %s539
    %p546 = scmp.eq.s32.totalorder %s36, 1
    %p547 = por %p545, %p546
    %p548 = scmp.ne.s32.totalorder %s539, %s540
    %p549 = scmp.eq.s32.totalorder %s36, 0
    %p550 = por %p548, %p549
    %p551 = scmp.ne.s32.totalorder %s539, %s540
    %p552 = scmp.eq.s32.totalorder %s37, 1
    %p553 = por %p551, %p552
    %p555 = scmp.ne.s32.totalorder %s540, %s554
    %p556 = scmp.eq.s32.totalorder %s37, 0
    %p557 = por %p555, %p556
    %s559 = sadd.s32 %s558, 1
    %p562 = scmp.eq.s32.totalorder %s31, 1
    %p563 = scmp.ne.s32.totalorder %s558, %s560
    %p564 = scmp.eq.s32.totalorder %s31, 0
    %p565 = por %p563, %p564
    %p566 = scmp.ne.s32.totalorder %s558, %s560
    %p567 = scmp.eq.s32.totalorder %s36, 1
    %p568 = por %p566, %p567
    %p569 = scmp.ne.s32.totalorder %s560, %s561
    %p570 = scmp.eq.s32.totalorder %s36, 0
    %p571 = por %p569, %p570
    %p572 = scmp.ne.s32.totalorder %s560, %s561
    %p573 = scmp.eq.s32.totalorder %s37, 1
    %p574 = por %p572, %p573
    %p576 = scmp.ne.s32.totalorder %s561, %s575
    %p577 = scmp.eq.s32.totalorder %s37, 0
    %p578 = por %p576, %p577
    %s579 = ssub.s32 %s31, %s38
    %p580 = scmp.eq.s32.totalorder %s579, 0
    %s582 = sadd.s32 %s581, 1
    %s583 = scalar_select %p580, %s581, %s582
    %p586 = pneg %p580
    %p587 = scmp.eq.s32.totalorder %s31, 1
    %p588 = por %p586, %p587
    %p589 = scmp.ne.s32.totalorder %s581, %s584
    %p590 = scmp.eq.s32.totalorder %s31, 0
    %p591 = por %p589, %p590
    %p592 = scmp.ne.s32.totalorder %s581, %s584
    %p593 = scmp.eq.s32.totalorder %s36, 1
    %p594 = por %p592, %p593
    %p595 = scmp.ne.s32.totalorder %s584, %s585
    %p596 = scmp.eq.s32.totalorder %s36, 0
    %p597 = por %p595, %p596
    %p598 = scmp.ne.s32.totalorder %s584, %s585
    %p599 = scmp.eq.s32.totalorder %s37, 1
    %p600 = por %p598, %p599
    %p602 = scmp.ne.s32.totalorder %s585, %s601
    %p603 = scmp.eq.s32.totalorder %s37, 0
    %p604 = por %p602, %p603
    %p605 = scmp.le.s32.totalorder 1, %s31
    %p606 = scmp.lt.s32.totalorder %s31, 3
    %p607 = pnand %p605, %p606
    %p608 = pneg %p607
    // Predicated region
    $region9: #{joint_modal_bert_forward.1} parent=5 // pred_check
      _
    $region10: #{joint_modal_bert_forward.1} parent=5 // pred_check_branch
      %610 = sbr.rel (%p607) target = $region12
    $region11: #{joint_modal_bert_forward.1} parent=5 // pred_region
      %s611 = ssub.s32 %s31, 1
      // Predicated region
      $region13: #{joint_modal_bert_forward.1} parent=11 // pred_check
        %p612 = pneg %p130
      $region14: #{joint_modal_bert_forward.1} parent=11 // pred_check_branch
        %614 = sbr.rel (%p612) target = $region16
      $region15: #{joint_modal_bert_forward.1} parent=11 // pred_region
        _
      $region16: #{joint_modal_bert_forward.1} parent=11 // pred_fallthru
        _
      // Predicated region
      $region17: #{joint_modal_bert_forward.1} parent=11 // pred_check
        %p615 = pneg %p151
      $region18: #{joint_modal_bert_forward.1} parent=11 // pred_check_branch
        %617 = sbr.rel (%p615) target = $region20
      $region19: #{joint_modal_bert_forward.1} parent=11 // pred_region
        _
      $region20: #{joint_modal_bert_forward.1} parent=11 // pred_fallthru
        _
      // Predicated region
      $region21: #{joint_modal_bert_forward.1} parent=11 // pred_check
        %p618 = pneg %p172
      $region22: #{joint_modal_bert_forward.1} parent=11 // pred_check_branch
        %620 = sbr.rel (%p618) target = $region24
      $region23: #{joint_modal_bert_forward.1} parent=11 // pred_region
        _
      $region24: #{joint_modal_bert_forward.1} parent=11 // pred_fallthru
        _
      // Predicated region
      $region25: #{joint_modal_bert_forward.1} parent=11 // pred_check
        %p621 = pneg %p193
      $region26: #{joint_modal_bert_forward.1} parent=11 // pred_check_branch
        %623 = sbr.rel (%p621) target = $region28
      $region27: #{joint_modal_bert_forward.1} parent=11 // pred_region
        _
      $region28: #{joint_modal_bert_forward.1} parent=11 // pred_fallthru
        _
      // Predicated region
      $region29: #{joint_modal_bert_forward.1} parent=11 // pred_check
        %p624 = pneg %p214
      $region30: #{joint_modal_bert_forward.1} parent=11 // pred_check_branch
        %626 = sbr.rel (%p624) target = $region32
      $region31: #{joint_modal_bert_forward.1} parent=11 // pred_region
        _
      $region32: #{joint_modal_bert_forward.1} parent=11 // pred_fallthru
        _
      // Predicated region
      $region33: #{joint_modal_bert_forward.1} parent=11 // pred_check
        %p627 = pneg %p235
      $region34: #{joint_modal_bert_forward.1} parent=11 // pred_check_branch
        %629 = sbr.rel (%p627) target = $region36
      $region35: #{joint_modal_bert_forward.1} parent=11 // pred_region
        _
      $region36: #{joint_modal_bert_forward.1} parent=11 // pred_fallthru
        _
      // Predicated region
      $region37: #{joint_modal_bert_forward.1} parent=11 // pred_check
        %p630 = pneg %p256
      $region38: #{joint_modal_bert_forward.1} parent=11 // pred_check_branch
        %632 = sbr.rel (%p630) target = $region40
      $region39: #{joint_modal_bert_forward.1} parent=11 // pred_region
        _
      $region40: #{joint_modal_bert_forward.1} parent=11 // pred_fallthru
        _
      // Predicated region
      $region41: #{joint_modal_bert_forward.1} parent=11 // pred_check
        %p633 = pneg %p277
      $region42: #{joint_modal_bert_forward.1} parent=11 // pred_check_branch
        %635 = sbr.rel (%p633) target = $region44
      $region43: #{joint_modal_bert_forward.1} parent=11 // pred_region
        _
      $region44: #{joint_modal_bert_forward.1} parent=11 // pred_fallthru
        _
      // Predicated region
      $region45: #{joint_modal_bert_forward.1} parent=11 // pred_check
        %p636 = pneg %p298
      $region46: #{joint_modal_bert_forward.1} parent=11 // pred_check_branch
        %638 = sbr.rel (%p636) target = $region48
      $region47: #{joint_modal_bert_forward.1} parent=11 // pred_region
        _
      $region48: #{joint_modal_bert_forward.1} parent=11 // pred_fallthru
        _
      // Predicated region
      $region49: #{joint_modal_bert_forward.1} parent=11 // pred_check
        %p639 = pneg %p319
      $region50: #{joint_modal_bert_forward.1} parent=11 // pred_check_branch
        %641 = sbr.rel (%p639) target = $region52
      $region51: #{joint_modal_bert_forward.1} parent=11 // pred_region
        _
      $region52: #{joint_modal_bert_forward.1} parent=11 // pred_fallthru
        _
      // Predicated region
      $region53: #{joint_modal_bert_forward.1} parent=11 // pred_check
        %p642 = pneg %p340
      $region54: #{joint_modal_bert_forward.1} parent=11 // pred_check_branch
        %644 = sbr.rel (%p642) target = $region56
      $region55: #{joint_modal_bert_forward.1} parent=11 // pred_region
        _
      $region56: #{joint_modal_bert_forward.1} parent=11 // pred_fallthru
        _
      // Predicated region
      $region57: #{joint_modal_bert_forward.1} parent=11 // pred_check
        %p645 = pneg %p361
      $region58: #{joint_modal_bert_forward.1} parent=11 // pred_check_branch
        %647 = sbr.rel (%p645) target = $region60
      $region59: #{joint_modal_bert_forward.1} parent=11 // pred_region
        _
      $region60: #{joint_modal_bert_forward.1} parent=11 // pred_fallthru
        _
      // Predicated region
      $region61: #{joint_modal_bert_forward.1} parent=11 // pred_check
        %p648 = pneg %p382
      $region62: #{joint_modal_bert_forward.1} parent=11 // pred_check_branch
        %650 = sbr.rel (%p648) target = $region64
      $region63: #{joint_modal_bert_forward.1} parent=11 // pred_region
        _
      $region64: #{joint_modal_bert_forward.1} parent=11 // pred_fallthru
        _
      // Predicated region
      $region65: #{joint_modal_bert_forward.1} parent=11 // pred_check
        %p651 = pneg %p403
      $region66: #{joint_modal_bert_forward.1} parent=11 // pred_check_branch
        %653 = sbr.rel (%p651) target = $region68
      $region67: #{joint_modal_bert_forward.1} parent=11 // pred_region
        _
      $region68: #{joint_modal_bert_forward.1} parent=11 // pred_fallthru
        _
      // Predicated region
      $region69: #{joint_modal_bert_forward.1} parent=11 // pred_check
        %p654 = pneg %p424
      $region70: #{joint_modal_bert_forward.1} parent=11 // pred_check_branch
        %656 = sbr.rel (%p654) target = $region72
      $region71: #{joint_modal_bert_forward.1} parent=11 // pred_region
        _
      $region72: #{joint_modal_bert_forward.1} parent=11 // pred_fallthru
        _
      // Predicated region
      $region73: #{joint_modal_bert_forward.1} parent=11 // pred_check
        %p657 = pneg %p445
      $region74: #{joint_modal_bert_forward.1} parent=11 // pred_check_branch
        %659 = sbr.rel (%p657) target = $region76
      $region75: #{joint_modal_bert_forward.1} parent=11 // pred_region
        _
      $region76: #{joint_modal_bert_forward.1} parent=11 // pred_fallthru
        _
      // Predicated region
      $region77: #{joint_modal_bert_forward.1} parent=11 // pred_check
        %p660 = pneg %p466
      $region78: #{joint_modal_bert_forward.1} parent=11 // pred_check_branch
        %662 = sbr.rel (%p660) target = $region80
      $region79: #{joint_modal_bert_forward.1} parent=11 // pred_region
        _
      $region80: #{joint_modal_bert_forward.1} parent=11 // pred_fallthru
        _
      // Predicated region
      $region81: #{joint_modal_bert_forward.1} parent=11 // pred_check
        %p663 = pneg %p487
      $region82: #{joint_modal_bert_forward.1} parent=11 // pred_check_branch
        %665 = sbr.rel (%p663) target = $region84
      $region83: #{joint_modal_bert_forward.1} parent=11 // pred_region
        _
      $region84: #{joint_modal_bert_forward.1} parent=11 // pred_fallthru
        _
      // Predicated region
      $region85: #{joint_modal_bert_forward.1} parent=11 // pred_check
        %p666 = pneg %p508
      $region86: #{joint_modal_bert_forward.1} parent=11 // pred_check_branch
        %668 = sbr.rel (%p666) target = $region88
      $region87: #{joint_modal_bert_forward.1} parent=11 // pred_region
        _
      $region88: #{joint_modal_bert_forward.1} parent=11 // pred_fallthru
        _
      // Predicated region
      $region89: #{joint_modal_bert_forward.1} parent=11 // pred_check
        %p669 = pneg %p529
      $region90: #{joint_modal_bert_forward.1} parent=11 // pred_check_branch
        %671 = sbr.rel (%p669) target = $region92
      $region91: #{joint_modal_bert_forward.1} parent=11 // pred_region
        _
      $region92: #{joint_modal_bert_forward.1} parent=11 // pred_fallthru
        _
      // Predicated region
      $region93: #{joint_modal_bert_forward.1} parent=11 // pred_check
        %p672 = pneg %p550
      $region94: #{joint_modal_bert_forward.1} parent=11 // pred_check_branch
        %674 = sbr.rel (%p672) target = $region96
      $region95: #{joint_modal_bert_forward.1} parent=11 // pred_region
        _
      $region96: #{joint_modal_bert_forward.1} parent=11 // pred_fallthru
        _
      // Predicated region
      $region97: #{joint_modal_bert_forward.1} parent=11 // pred_check
        %p675 = pneg %p571
      $region98: #{joint_modal_bert_forward.1} parent=11 // pred_check_branch
        %677 = sbr.rel (%p675) target = $region100
      $region99: #{joint_modal_bert_forward.1} parent=11 // pred_region
        _
      $region100: #{joint_modal_bert_forward.1} parent=11 // pred_fallthru
        _
    $region12: #{joint_modal_bert_forward.1} parent=5 // pred_fallthru
      _
    %p678 = scmp.lt.s32.totalorder %s31, 2
    // Predicated region
    $region101: #{joint_modal_bert_forward.1} parent=5 // pred_check
      %p679 = pneg %p678
    $region102: #{joint_modal_bert_forward.1} parent=5 // pred_check_branch
      %681 = sbr.rel (%p679) target = $region104
    $region103: #{joint_modal_bert_forward.1} parent=5 // pred_region
      // Predicated region
      $region105: #{joint_modal_bert_forward.1} parent=103 // pred_check
        %p682 = pneg %p51
      $region106: #{joint_modal_bert_forward.1} parent=103 // pred_check_branch
        %684 = sbr.rel (%p682) target = $region108
      $region107: #{joint_modal_bert_forward.1} parent=103 // pred_region
        %p685 = scmp.lt.s32.totalorder %s31, 1
        %s686 = scalar_select %p685, %s31, 1
        %s687 = smul.addr %s686, 8
        %s688 = scalar_lea.vmem %s0, %s687
      $region108: #{joint_modal_bert_forward.1} parent=103 // pred_fallthru
        _
      // Predicated region
      $region109: #{joint_modal_bert_forward.1} parent=103 // pred_check
        %p689 = pneg %p77
      $region110: #{joint_modal_bert_forward.1} parent=103 // pred_check_branch
        %691 = sbr.rel (%p689) target = $region112
      $region111: #{joint_modal_bert_forward.1} parent=103 // pred_region
        %p692 = scmp.lt.s32.totalorder %s31, 1
        %s693 = scalar_select %p692, %s31, 1
        %s694 = smul.addr %s693, 8
        %s695 = scalar_lea.vmem %s1, %s694
      $region112: #{joint_modal_bert_forward.1} parent=103 // pred_fallthru
        _
      // Predicated region
      $region113: #{joint_modal_bert_forward.1} parent=103 // pred_check
        %p696 = pneg %p103
      $region114: #{joint_modal_bert_forward.1} parent=103 // pred_check_branch
        %698 = sbr.rel (%p696) target = $region116
      $region115: #{joint_modal_bert_forward.1} parent=103 // pred_region
        %p699 = scmp.lt.s32.totalorder %s31, 1
        %s700 = scalar_select %p699, %s31, 1
        %s701 = scalar_lea.vmem %s2, %s700
      $region116: #{joint_modal_bert_forward.1} parent=103 // pred_fallthru
        _
    $region104: #{joint_modal_bert_forward.1} parent=5 // pred_fallthru
      _
    %p702 = scmp.le.s32.totalorder 1, %s31
    %p703 = scmp.lt.s32.totalorder %s31, 3
    %p704 = pnand %p702, %p703
    %p705 = pneg %p704
    // Predicated region
    $region117: #{joint_modal_bert_forward.1} parent=5 // pred_check
      _
    $region118: #{joint_modal_bert_forward.1} parent=5 // pred_check_branch
      %707 = sbr.rel (%p704) target = $region120
    $region119: #{joint_modal_bert_forward.1} parent=5 // pred_region
      %s708 = ssub.s32 %s31, 1
      %p709 = scmp.lt.s32.totalorder %s36, 1
      %s710 = scalar_select %p709, %s36, 1
      %s711 = smul.addr %s710, 8
      %s712 = scalar_lea.vmem %s0, %s711
      %p713 = pneg %p57
      %p714 = pneg %p54
      %p715 = scmp.lt.s32.totalorder %s36, 1
      %s716 = scalar_select %p715, %s36, 1
      %s717 = smul.addr %s716, 8
      %s718 = scalar_lea.vmem %s1, %s717
      %p719 = pneg %p83
      %p720 = pneg %p80
      %p721 = scmp.lt.s32.totalorder %s36, 1
      %s722 = scalar_select %p721, %s36, 1
      %s723 = scalar_lea.vmem %s2, %s722
      %p724 = pneg %p109
      %p725 = pneg %p106
      %p726 = pneg %p130
      %p727 = pneg %p127
      %p728 = pneg %p151
      %p729 = pneg %p148
      %p730 = pneg %p172
      %p731 = pneg %p169
      %p732 = pneg %p193
      %p733 = pneg %p190
      %p734 = pneg %p214
      %p735 = pneg %p211
      %p736 = pneg %p235
      %p737 = pneg %p232
      %p738 = pneg %p256
      %p739 = pneg %p253
      %p740 = pneg %p277
      %p741 = pneg %p274
      %p742 = pneg %p298
      %p743 = pneg %p295
      %p744 = pneg %p319
      %p745 = pneg %p316
      %p746 = pneg %p340
      %p747 = pneg %p337
      %p748 = pneg %p361
      %p749 = pneg %p358
      %p750 = pneg %p382
      %p751 = pneg %p379
      %p752 = pneg %p403
      %p753 = pneg %p400
      %p754 = pneg %p424
      %p755 = pneg %p421
      %p756 = pneg %p445
      %p757 = pneg %p442
      %p758 = pneg %p466
      %p759 = pneg %p463
      %p760 = pneg %p487
      %p761 = pneg %p484
      %p762 = pneg %p508
      %p763 = pneg %p505
      %p764 = pneg %p529
      %p765 = pneg %p526
      %p766 = pneg %p550
      %p767 = pneg %p547
      %p768 = pneg %p571
      %p769 = pneg %p568
      %p770 = pneg %p597
      %p771 = pneg %p594
      %p772 = scmp.lt.s32.totalorder %s36, 1
      %s773 = scalar_select %p772, %s36, 1
      %s774 = scalar_lea.vmem %s25, %s773
      %p775 = scmp.lt.s32.totalorder %s36, 1
      %s776 = scalar_select %p775, %s36, 1
      %s777 = smul.addr %s776, 8
      %s778 = scalar_lea.vmem %s0, %s777
      %p779 = scmp.lt.s32.totalorder %s36, 1
      %s780 = scalar_select %p779, %s36, 1
      %s781 = smul.addr %s780, 8
      %s782 = scalar_lea.vmem %s1, %s781
      %p783 = scmp.lt.s32.totalorder %s36, 1
      %s784 = scalar_select %p783, %s36, 1
      %s785 = scalar_lea.vmem %s2, %s784
      %p786 = scmp.lt.s32.totalorder %s36, 1
      %s787 = scalar_select %p786, %s36, 1
      %s788 = scalar_lea.vmem %s25, %s787
      %v790 = vld [vmem:[%s778] sm:$0xff]
      %v791 = vpack.c.bf16 %v790, %v790
      %v792 = vld [vmem:[%s3] sm:$0xf]
      %v793 = vld [vmem:[%s3 + $0x4] sm:$0xf]
      %v794 = vld [vmem:[%s3 + $0x8] sm:$0xf]
      %v795 = vld [vmem:[%s3 + $0xc] sm:$0xf]
      %v796 = vld [vmem:[%s3 + $0x10] sm:$0xf]
      %v797 = vld [vmem:[%s3 + $0x14] sm:$0xf]
      %v798 = vld [vmem:[%s3 + $0x18] sm:$0xf]
      %v799 = vld [vmem:[%s4] sm:$0x1]
      %v801 = vlaneseq
      %v802 = vshrl.u32 %v801, 7
      %v803 = vsub.s32 0, %v802
      %v804 = vrot.slane %v799, %v803
      %v813 = vunpack.c.l.b16 %v792
      %v814 = vunpack.c.l.b16 %v793
      %v815 = vunpack.c.l.b16 %v794
      %v816 = vunpack.c.l.b16 %v795
      %v817 = vunpack.c.l.b16 %v796
      %v818 = vunpack.c.l.b16 %v797
      %v819 = vunpack.c.l.b16 %v798
      %v820 = vpack.c.b16 %v814, %v813
      %v821 = vpack.c.b16 %v816, %v815
      %v822 = vpack.c.b16 %v818, %v817
      %v823 = vpack.c.b16 %v819, %v819
      %vm827 = vcmask 457728
      %v829 = vsel %vm827, %v791, 0
      %vm831 = vcmask 1043456
      %v833 = vsel %vm831, %v823, 0
      %835 = vmatprep.subr.bf16.mxu0 0
      %836 = vmatpush1.bf16.msra.mxu0 %v820
      %837 = vmatprep.subr.bf16.mxu0 0
      %838 = vmatpush1.bf16.msra.mxu0 %v821
      %839 = vmatprep.subr.bf16.mxu0 0
      %840 = vmatpush1.bf16.msra.mxu0 %v822
      %841 = vmatprep.subr.bf16.mxu0 0
      %842 = vmatpush1.bf16.msra.mxu0 %v833
      %843 = vmatprep.subr.bf16.mxu0 0
      %844 = vmatpush1.bf16.msra.mxu0 0
      %845 = vmatprep.subr.bf16.mxu0 0
      %846 = vmatpush1.bf16.msra.mxu0 0
      %847 = vmatprep.subr.bf16.mxu0 0
      %848 = vmatpush1.bf16.msra.mxu0 0
      %849 = vmatprep.subr.bf16.mxu0 0
      %850 = vmatpush1.bf16.msra.mxu0 0
      %851 = vmatprep.subr.bf16.mxu0 0
      %852 = vmatpush1.bf16.msra.mxu0 0
      %853 = vmatprep.subr.bf16.mxu0 0
      %854 = vmatpush1.bf16.msra.mxu0 0
      %855 = vmatprep.subr.bf16.mxu0 0
      %856 = vmatpush1.bf16.msra.mxu0 0
      %857 = vmatprep.subr.bf16.mxu0 0
      %858 = vmatpush1.bf16.msra.mxu0 0
      %859 = vmatprep.subr.bf16.mxu0 0
      %860 = vmatpush1.bf16.msra.mxu0 0
      %861 = vmatprep.subr.bf16.mxu0 0
      %862 = vmatpush1.bf16.msra.mxu0 0
      %863 = vmatprep.subr.bf16.mxu0 0
      %864 = vmatpush1.bf16.msra.mxu0 0
      %865 = vmatprep.subr.bf16.mxu0 0
      %866 = vmatpush1.bf16.msra.mxu0 0
      %867 = vmatprep.mubr.bf16.mxu0 0
      %868 = vmatmul.mubr.bf16.gmra.mrb[0].mxu0 %v829
      %v869 = vpop.f32.mrb[0].mxu0
      %v870 = vadd.f32 %v804, %v869
      %v871 = vpop.f32.mrb[0].mxu0
      %v872 = vpop.f32.mrb[0].mxu0
      %v873 = vpop.f32.mrb[0].mxu0
      %874 = vdwg.mxu0
      %v875 = vld [vmem:[%s5] sm:$0x1]
      %v876 = vld [vmem:[%s6] sm:$0x1]
      %vm877 = vcmask 261120
      %v878 = vsel %vm877, %v870, 0.0
      %879 = vadd.xlane.f32.xlu0 %v878
      %v880 = vpop.xlane.xlu0 %879
      %v881 = vrcp.pop 32.0
      %v882 = vmul.f32 %v880, %v881
      %v883 = vsub.f32 %v870, %v882
      %v884 = vmul.f32 %v883, %v883
      %v885 = vsel %vm877, %v884, 0.0
      %886 = vadd.xlane.f32.xlu0 %v885
      %v887 = vpop.xlane.xlu0 %886
      %v888 = vmul.f32 %v887, %v881
      %v889 = vadd.f32 %v888, 1e-12
      %v890 = vrsqrt.pop %v889
      %v891 = vmul.f32 %v883, %v890
      %v893 = vlaneseq
      %v894 = vshrl.u32 %v893, 7
      %v895 = vsub.s32 0, %v894
      %v896 = vrot.slane %v875, %v895
      %v898 = vmul.f32 %v891, %v896
      %v900 = vlaneseq
      %v901 = vshrl.u32 %v900, 7
      %v902 = vsub.s32 0, %v901
      %v903 = vrot.slane %v876, %v902
      %v905 = vadd.f32 %v898, %v903
      %v906 = vld [vmem:[%s782] sm:$0xff]
      %v907 = vadd.f32 %v905, %v906
      %v908 = vld [vmem:[%s7] sm:$0x1]
      %v909 = vld [vmem:[%s8] sm:$0x1]
      %v910 = vsel %vm877, %v907, 0.0
      %911 = vadd.xlane.f32.xlu0 %v910
      %v912 = vpop.xlane.xlu0 %911
      %v913 = vmul.f32 %v912, %v881
      %v914 = vsub.f32 %v907, %v913
      %v915 = vmul.f32 %v914, %v914
      %v916 = vsel %vm877, %v915, 0.0
      %917 = vadd.xlane.f32.xlu0 %v916
      %v918 = vpop.xlane.xlu0 %917
      %v919 = vmul.f32 %v918, %v881
      %v920 = vadd.f32 %v919, 1e-12
      %v921 = vrsqrt.pop %v920
      %v922 = vmul.f32 %v914, %v921
      %v924 = vlaneseq
      %v925 = vshrl.u32 %v924, 7
      %v926 = vsub.s32 0, %v925
      %v927 = vrot.slane %v908, %v926
      %v929 = vmul.f32 %v922, %v927
      %v931 = vlaneseq
      %v932 = vshrl.u32 %v931, 7
      %v933 = vsub.s32 0, %v932
      %v934 = vrot.slane %v909, %v933
      %v936 = vadd.f32 %v929, %v934
      %v937 = vld [vmem:[%s785] sm:$0x1]
      %v938 = vsub.f32 1.0, %v937
      %v939 = vmul.f32 %v938, -10000.0
      %v940 = vpack.c.bf16 %v936, %v936
      %v941 = vld [vmem:[%s9] sm:$0xf]
      %v942 = vld [vmem:[%s9 + $0x4] sm:$0xf]
      %v943 = vld [vmem:[%s9 + $0x8] sm:$0xf]
      %v944 = vld [vmem:[%s9 + $0xc] sm:$0xf]
      %v945 = vld [vmem:[%s10] sm:$0x1]
      %v947 = vlaneseq
      %v948 = vshrl.u32 %v947, 7
      %v949 = vsub.s32 0, %v948
      %v950 = vrot.slane %v945, %v949
      %v956 = vunpack.c.l.b16 %v941
      %v957 = vunpack.c.l.b16 %v942
      %v958 = vunpack.c.l.b16 %v943
      %v959 = vunpack.c.l.b16 %v944
      %v960 = vpack.c.b16 %v957, %v956
      %v961 = vpack.c.b16 %v959, %v958
      %v965 = vsel %vm877, %v940, 0
      %967 = vmatprep.subr.bf16.mxu0 0
      %968 = vmatpush1.bf16.msra.mxu0 %v960
      %969 = vmatprep.subr.bf16.mxu0 0
      %970 = vmatpush1.bf16.msra.mxu0 %v961
      %971 = vmatprep.subr.bf16.mxu0 0
      %972 = vmatpush1.bf16.msra.mxu0 0
      %973 = vmatprep.subr.bf16.mxu0 0
      %974 = vmatpush1.bf16.msra.mxu0 0
      %975 = vmatprep.subr.bf16.mxu0 0
      %976 = vmatpush1.bf16.msra.mxu0 0
      %977 = vmatprep.subr.bf16.mxu0 0
      %978 = vmatpush1.bf16.msra.mxu0 0
      %979 = vmatprep.subr.bf16.mxu0 0
      %980 = vmatpush1.bf16.msra.mxu0 0
      %981 = vmatprep.subr.bf16.mxu0 0
      %982 = vmatpush1.bf16.msra.mxu0 0
      %983 = vmatprep.subr.bf16.mxu0 0
      %984 = vmatpush1.bf16.msra.mxu0 0
      %985 = vmatprep.subr.bf16.mxu0 0
      %986 = vmatpush1.bf16.msra.mxu0 0
      %987 = vmatprep.subr.bf16.mxu0 0
      %988 = vmatpush1.bf16.msra.mxu0 0
      %989 = vmatprep.subr.bf16.mxu0 0
      %990 = vmatpush1.bf16.msra.mxu0 0
      %991 = vmatprep.subr.bf16.mxu0 0
      %992 = vmatpush1.bf16.msra.mxu0 0
      %993 = vmatprep.subr.bf16.mxu0 0
      %994 = vmatpush1.bf16.msra.mxu0 0
      %995 = vmatprep.subr.bf16.mxu0 0
      %996 = vmatpush1.bf16.msra.mxu0 0
      %997 = vmatprep.subr.bf16.mxu0 0
      %998 = vmatpush1.bf16.msra.mxu0 0
      %999 = vmatprep.mubr.bf16.mxu0 0
      %1000 = vmatmul.mubr.bf16.gmra.mrb[0].mxu0 %v965
      %v1001 = vpop.f32.mrb[0].mxu0
      %v1002 = vadd.f32 %v950, %v1001
      %v1003 = vpop.f32.mrb[0].mxu0
      %v1004 = vpop.f32.mrb[0].mxu0
      %v1005 = vpop.f32.mrb[0].mxu0
      %1006 = vdwg.mxu0
      %v1007 = vpack.c.bf16 %v1002, %v1002
      %1009 = vrot.lane.b32.xlu0 %v1007, 120
      %v1010 = vpop.permute.xlu0 %1009
      %1011 = vrot.lane.b32.xlu0 %v1007, 112
      %v1012 = vpop.permute.xlu0 %1011
      %1013 = vrot.lane.b32.xlu0 %v1007, 104
      %v1014 = vpop.permute.xlu0 %1013
      %1015 = vrot.lane.b32.xlu0 %v1007, 96
      %v1016 = vpop.permute.xlu0 %1015
      %vm1017 = vcmask 64512
      %v1019 = vsel %vm1017, %v1007, 0
      %v1022 = vsel %vm1017, %v1016, 0
      %1024 = vmatprep.subr.bf16.mxu0 0
      %1025 = vmatpush1.bf16.xpose.msra.mxu0 %v1022
      %1026 = vmatprep.subr.bf16.mxu0 0
      %1027 = vmatpush1.bf16.xpose.msra.mxu0 0
      %1028 = vmatprep.subr.bf16.mxu0 0
      %1029 = vmatpush1.bf16.xpose.msra.mxu0 0
      %1030 = vmatprep.subr.bf16.mxu0 0
      %1031 = vmatpush1.bf16.xpose.msra.mxu0 0
      %1032 = vmatprep.subr.bf16.mxu0 0
      %1033 = vmatpush1.bf16.xpose.msra.mxu0 0
      %1034 = vmatprep.subr.bf16.mxu0 0
      %1035 = vmatpush1.bf16.xpose.msra.mxu0 0
      %1036 = vmatprep.subr.bf16.mxu0 0
      %1037 = vmatpush1.bf16.xpose.msra.mxu0 0
      %1038 = vmatprep.subr.bf16.mxu0 0
      %1039 = vmatpush1.bf16.xpose.msra.mxu0 0
      %1040 = vmatprep.subr.bf16.mxu0 0
      %1041 = vmatpush1.bf16.xpose.msra.mxu0 0
      %1042 = vmatprep.subr.bf16.mxu0 0
      %1043 = vmatpush1.bf16.xpose.msra.mxu0 0
      %1044 = vmatprep.subr.bf16.mxu0 0
      %1045 = vmatpush1.bf16.xpose.msra.mxu0 0
      %1046 = vmatprep.subr.bf16.mxu0 0
      %1047 = vmatpush1.bf16.xpose.msra.mxu0 0
      %1048 = vmatprep.subr.bf16.mxu0 0
      %1049 = vmatpush1.bf16.xpose.msra.mxu0 0
      %1050 = vmatprep.subr.bf16.mxu0 0
      %1051 = vmatpush1.bf16.xpose.msra.mxu0 0
      %1052 = vmatprep.subr.bf16.mxu0 0
      %1053 = vmatpush1.bf16.xpose.msra.mxu0 0
      %1054 = vmatprep.subr.bf16.mxu0 0
      %1055 = vmatpush1.bf16.xpose.msra.mxu0 0
      %1056 = vmatprep.mubr.bf16.mxu0 0
      %1057 = vmatmul.mubr.bf16.gmra.mrb[0].mxu0 %v1019
      %v1058 = vpop.f32.mrb[0].mxu0
      %v1059 = vadd.f32 0.0, %v1058
      %v1060 = vpop.f32.mrb[0].mxu0
      %v1061 = vpop.f32.mrb[0].mxu0
      %v1062 = vpop.f32.mrb[0].mxu0
      %1063 = vdwg.mxu0
      %1064 = vrot.lane.b32.xlu0 %v1010, 96
      %v1065 = vpop.permute.xlu0 %1064
      %v1067 = vsel %vm1017, %v1010, 0
      %v1070 = vsel %vm1017, %v1065, 0
      %1072 = vmatprep.subr.bf16.mxu0 0
      %1073 = vmatpush1.bf16.xpose.msra.mxu0 %v1070
      %1074 = vmatprep.subr.bf16.mxu0 0
      %1075 = vmatpush1.bf16.xpose.msra.mxu0 0
      %1076 = vmatprep.subr.bf16.mxu0 0
      %1077 = vmatpush1.bf16.xpose.msra.mxu0 0
      %1078 = vmatprep.subr.bf16.mxu0 0
      %1079 = vmatpush1.bf16.xpose.msra.mxu0 0
      %1080 = vmatprep.subr.bf16.mxu0 0
      %1081 = vmatpush1.bf16.xpose.msra.mxu0 0
      %1082 = vmatprep.subr.bf16.mxu0 0
      %1083 = vmatpush1.bf16.xpose.msra.mxu0 0
      %1084 = vmatprep.subr.bf16.mxu0 0
      %1085 = vmatpush1.bf16.xpose.msra.mxu0 0
      %1086 = vmatprep.subr.bf16.mxu0 0
      %1087 = vmatpush1.bf16.xpose.msra.mxu0 0
      %1088 = vmatprep.subr.bf16.mxu0 0
      %1089 = vmatpush1.bf16.xpose.msra.mxu0 0
      %1090 = vmatprep.subr.bf16.mxu0 0
      %1091 = vmatpush1.bf16.xpose.msra.mxu0 0
      %1092 = vmatprep.subr.bf16.mxu0 0
      %1093 = vmatpush1.bf16.xpose.msra.mxu0 0
      %1094 = vmatprep.subr.bf16.mxu0 0
      %1095 = vmatpush1.bf16.xpose.msra.mxu0 0
      %1096 = vmatprep.subr.bf16.mxu0 0
      %1097 = vmatpush1.bf16.xpose.msra.mxu0 0
      %1098 = vmatprep.subr.bf16.mxu0 0
      %1099 = vmatpush1.bf16.xpose.msra.mxu0 0
      %1100 = vmatprep.subr.bf16.mxu0 0
      %1101 = vmatpush1.bf16.xpose.msra.mxu0 0
      %1102 = vmatprep.subr.bf16.mxu0 0
      %1103 = vmatpush1.bf16.xpose.msra.mxu0 0
      %1104 = vmatprep.mubr.bf16.mxu0 0
      %1105 = vmatmul.mubr.bf16.gmra.mrb[0].mxu0 %v1067
      %v1106 = vpop.f32.mrb[0].mxu0
      %v1107 = vadd.f32 0.0, %v1106
      %v1108 = vpop.f32.mrb[0].mxu0
      %v1109 = vpop.f32.mrb[0].mxu0
      %v1110 = vpop.f32.mrb[0].mxu0
      %1111 = vdwg.mxu0
      %1112 = vrot.lane.b32.xlu0 %v1012, 96
      %v1113 = vpop.permute.xlu0 %1112
      %v1115 = vsel %vm1017, %v1012, 0
      %v1118 = vsel %vm1017, %v1113, 0
      %1120 = vmatprep.subr.bf16.mxu0 0
      %1121 = vmatpush1.bf16.xpose.msra.mxu0 %v1118
      %1122 = vmatprep.subr.bf16.mxu0 0
      %1123 = vmatpush1.bf16.xpose.msra.mxu0 0
      %1124 = vmatprep.subr.bf16.mxu0 0
      %1125 = vmatpush1.bf16.xpose.msra.mxu0 0
      %1126 = vmatprep.subr.bf16.mxu0 0
      %1127 = vmatpush1.bf16.xpose.msra.mxu0 0
      %1128 = vmatprep.subr.bf16.mxu0 0
      %1129 = vmatpush1.bf16.xpose.msra.mxu0 0
      %1130 = vmatprep.subr.bf16.mxu0 0
      %1131 = vmatpush1.bf16.xpose.msra.mxu0 0
      %1132 = vmatprep.subr.bf16.mxu0 0
      %1133 = vmatpush1.bf16.xpose.msra.mxu0 0
      %1134 = vmatprep.subr.bf16.mxu0 0
      %1135 = vmatpush1.bf16.xpose.msra.mxu0 0
      %1136 = vmatprep.subr.bf16.mxu0 0
      %1137 = vmatpush1.bf16.xpose.msra.mxu0 0
      %1138 = vmatprep.subr.bf16.mxu0 0
      %1139 = vmatpush1.bf16.xpose.msra.mxu0 0
      %1140 = vmatprep.subr.bf16.mxu0 0
      %1141 = vmatpush1.bf16.xpose.msra.mxu0 0
      %1142 = vmatprep.subr.bf16.mxu0 0
      %1143 = vmatpush1.bf16.xpose.msra.mxu0 0
      %1144 = vmatprep.subr.bf16.mxu0 0
      %1145 = vmatpush1.bf16.xpose.msra.mxu0 0
      %1146 = vmatprep.subr.bf16.mxu0 0
      %1147 = vmatpush1.bf16.xpose.msra.mxu0 0
      %1148 = vmatprep.subr.bf16.mxu0 0
      %1149 = vmatpush1.bf16.xpose.msra.mxu0 0
      %1150 = vmatprep.subr.bf16.mxu0 0
      %1151 = vmatpush1.bf16.xpose.msra.mxu0 0
      %1152 = vmatprep.mubr.bf16.mxu0 0
      %1153 = vmatmul.mubr.bf16.gmra.mrb[0].mxu0 %v1115
      %v1154 = vpop.f32.mrb[0].mxu0
      %v1155 = vadd.f32 0.0, %v1154
      %v1156 = vpop.f32.mrb[0].mxu0
      %v1157 = vpop.f32.mrb[0].mxu0
      %v1158 = vpop.f32.mrb[0].mxu0
      %1159 = vdwg.mxu0
      %1160 = vrot.lane.b32.xlu0 %v1014, 96
      %v1161 = vpop.permute.xlu0 %1160
      %v1163 = vsel %vm1017, %v1014, 0
      %v1166 = vsel %vm1017, %v1161, 0
      %1168 = vmatprep.subr.bf16.mxu0 0
      %1169 = vmatpush1.bf16.xpose.msra.mxu0 %v1166
      %1170 = vmatprep.subr.bf16.mxu0 0
      %1171 = vmatpush1.bf16.xpose.msra.mxu0 0
      %1172 = vmatprep.subr.bf16.mxu0 0
      %1173 = vmatpush1.bf16.xpose.msra.mxu0 0
      %1174 = vmatprep.subr.bf16.mxu0 0
      %1175 = vmatpush1.bf16.xpose.msra.mxu0 0
      %1176 = vmatprep.subr.bf16.mxu0 0
      %1177 = vmatpush1.bf16.xpose.msra.mxu0 0
      %1178 = vmatprep.subr.bf16.mxu0 0
      %1179 = vmatpush1.bf16.xpose.msra.mxu0 0
      %1180 = vmatprep.subr.bf16.mxu0 0
      %1181 = vmatpush1.bf16.xpose.msra.mxu0 0
      %1182 = vmatprep.subr.bf16.mxu0 0
      %1183 = vmatpush1.bf16.xpose.msra.mxu0 0
      %1184 = vmatprep.subr.bf16.mxu0 0
      %1185 = vmatpush1.bf16.xpose.msra.mxu0 0
      %1186 = vmatprep.subr.bf16.mxu0 0
      %1187 = vmatpush1.bf16.xpose.msra.mxu0 0
      %1188 = vmatprep.subr.bf16.mxu0 0
      %1189 = vmatpush1.bf16.xpose.msra.mxu0 0
      %1190 = vmatprep.subr.bf16.mxu0 0
      %1191 = vmatpush1.bf16.xpose.msra.mxu0 0
      %1192 = vmatprep.subr.bf16.mxu0 0
      %1193 = vmatpush1.bf16.xpose.msra.mxu0 0
      %1194 = vmatprep.subr.bf16.mxu0 0
      %1195 = vmatpush1.bf16.xpose.msra.mxu0 0
      %1196 = vmatprep.subr.bf16.mxu0 0
      %1197 = vmatpush1.bf16.xpose.msra.mxu0 0
      %1198 = vmatprep.subr.bf16.mxu0 0
      %1199 = vmatpush1.bf16.xpose.msra.mxu0 0
      %1200 = vmatprep.mubr.bf16.mxu0 0
      %1201 = vmatmul.mubr.bf16.gmra.mrb[0].mxu0 %v1163
      %v1202 = vpop.f32.mrb[0].mxu0
      %v1203 = vadd.f32 0.0, %v1202
      %v1204 = vpop.f32.mrb[0].mxu0
      %v1205 = vpop.f32.mrb[0].mxu0
      %v1206 = vpop.f32.mrb[0].mxu0
      %1207 = vdwg.mxu0
      %v1208 = vmul.f32 %v1059, 0.35355338
      %v1209 = vmul.f32 %v1107, 0.35355338
      %v1210 = vmul.f32 %v1155, 0.35355338
      %v1211 = vmul.f32 %v1203, 0.35355338
      %v1213 = vlaneseq
      %v1214 = vshrl.u32 %v1213, 7
      %v1215 = vsub.s32 0, %v1214
      %v1216 = vrot.slane %v939, %v1215
      %v1218 = vadd.f32 %v1208, %v1216
      %v1219 = vadd.f32 %v1209, %v1216
      %v1220 = vadd.f32 %v1210, %v1216
      %v1221 = vadd.f32 %v1211, %v1216
      %v1222 = vsel %vm1017, %v1218, -inf
      %1223 = vmax.xlane.f32.xlu0 %v1222
      %v1224 = vpop.xlane.xlu0 %1223
      %v1225 = vsel %vm1017, %v1219, -inf
      %1226 = vmax.xlane.f32.xlu0 %v1225
      %v1227 = vpop.xlane.xlu0 %1226
      %v1228 = vsel %vm1017, %v1220, -inf
      %1229 = vmax.xlane.f32.xlu0 %v1228
      %v1230 = vpop.xlane.xlu0 %1229
      %v1231 = vsel %vm1017, %v1221, -inf
      %1232 = vmax.xlane.f32.xlu0 %v1231
      %v1233 = vpop.xlane.xlu0 %1232
      %v1234 = vsub.f32 %v1218, %v1224
      %v1235 = vsub.f32 %v1219, %v1227
      %v1236 = vsub.f32 %v1220, %v1230
      %v1237 = vsub.f32 %v1221, %v1233
      %v1238 = vmul.f32 %v1234, 1.442695
      %v1239 = vpow.pop %v1238
      %v1240 = vmul.f32 %v1235, 1.442695
      %v1241 = vpow.pop %v1240
      %v1242 = vmul.f32 %v1236, 1.442695
      %v1243 = vpow.pop %v1242
      %v1244 = vmul.f32 %v1237, 1.442695
      %v1245 = vpow.pop %v1244
      %v1246 = vsel %vm1017, %v1239, 0.0
      %1247 = vadd.xlane.f32.xlu0 %v1246
      %v1248 = vpop.xlane.xlu0 %1247
      %v1249 = vsel %vm1017, %v1241, 0.0
      %1250 = vadd.xlane.f32.xlu0 %v1249
      %v1251 = vpop.xlane.xlu0 %1250
      %v1252 = vsel %vm1017, %v1243, 0.0
      %1253 = vadd.xlane.f32.xlu0 %v1252
      %v1254 = vpop.xlane.xlu0 %1253
      %v1255 = vsel %vm1017, %v1245, 0.0
      %1256 = vadd.xlane.f32.xlu0 %v1255
      %v1257 = vpop.xlane.xlu0 %1256
      %v1258 = vrcp.pop %v1248
      %v1259 = vmul.f32 %v1239, %v1258
      %v1260 = vrcp.pop %v1251
      %v1261 = vmul.f32 %v1241, %v1260
      %v1262 = vrcp.pop %v1254
      %v1263 = vmul.f32 %v1243, %v1262
      %v1264 = vrcp.pop %v1257
      %v1265 = vmul.f32 %v1245, %v1264
      %v1266 = vpack.c.bf16 %v1259, %v1259
      %v1267 = vpack.c.bf16 %v1261, %v1261
      %v1268 = vpack.c.bf16 %v1263, %v1263
      %v1269 = vpack.c.bf16 %v1265, %v1265
      %1270 = vrot.lane.b32.xlu0 %v1007, 64
      %v1271 = vpop.permute.xlu0 %1270
      %v1273 = vsel %vm1017, %v1266, 0
      %v1276 = vsel %vm831, %v1271, 0
      %1278 = vmatprep.subr.bf16.mxu0 0
      %1279 = vmatpush1.bf16.msra.mxu0 %v1276
      %1280 = vmatprep.subr.bf16.mxu0 0
      %1281 = vmatpush1.bf16.msra.mxu0 0
      %1282 = vmatprep.subr.bf16.mxu0 0
      %1283 = vmatpush1.bf16.msra.mxu0 0
      %1284 = vmatprep.subr.bf16.mxu0 0
      %1285 = vmatpush1.bf16.msra.mxu0 0
      %1286 = vmatprep.subr.bf16.mxu0 0
      %1287 = vmatpush1.bf16.msra.mxu0 0
      %1288 = vmatprep.subr.bf16.mxu0 0
      %1289 = vmatpush1.bf16.msra.mxu0 0
      %1290 = vmatprep.subr.bf16.mxu0 0
      %1291 = vmatpush1.bf16.msra.mxu0 0
      %1292 = vmatprep.subr.bf16.mxu0 0
      %1293 = vmatpush1.bf16.msra.mxu0 0
      %1294 = vmatprep.subr.bf16.mxu0 0
      %1295 = vmatpush1.bf16.msra.mxu0 0
      %1296 = vmatprep.subr.bf16.mxu0 0
      %1297 = vmatpush1.bf16.msra.mxu0 0
      %1298 = vmatprep.subr.bf16.mxu0 0
      %1299 = vmatpush1.bf16.msra.mxu0 0
      %1300 = vmatprep.subr.bf16.mxu0 0
      %1301 = vmatpush1.bf16.msra.mxu0 0
      %1302 = vmatprep.subr.bf16.mxu0 0
      %1303 = vmatpush1.bf16.msra.mxu0 0
      %1304 = vmatprep.subr.bf16.mxu0 0
      %1305 = vmatpush1.bf16.msra.mxu0 0
      %1306 = vmatprep.subr.bf16.mxu0 0
      %1307 = vmatpush1.bf16.msra.mxu0 0
      %1308 = vmatprep.subr.bf16.mxu0 0
      %1309 = vmatpush1.bf16.msra.mxu0 0
      %1310 = vmatprep.mubr.bf16.mxu0 0
      %1311 = vmatmul.mubr.bf16.gmra.mrb[0].mxu0 %v1273
      %v1312 = vpop.f32.mrb[0].mxu0
      %v1313 = vadd.f32 0.0, %v1312
      %v1314 = vpop.f32.mrb[0].mxu0
      %v1315 = vpop.f32.mrb[0].mxu0
      %v1316 = vpop.f32.mrb[0].mxu0
      %1317 = vdwg.mxu0
      %1318 = vrot.lane.b32.xlu0 %v1010, 64
      %v1319 = vpop.permute.xlu0 %1318
      %v1321 = vsel %vm1017, %v1267, 0
      %v1324 = vsel %vm831, %v1319, 0
      %1326 = vmatprep.subr.bf16.mxu0 0
      %1327 = vmatpush1.bf16.msra.mxu0 %v1324
      %1328 = vmatprep.subr.bf16.mxu0 0
      %1329 = vmatpush1.bf16.msra.mxu0 0
      %1330 = vmatprep.subr.bf16.mxu0 0
      %1331 = vmatpush1.bf16.msra.mxu0 0
      %1332 = vmatprep.subr.bf16.mxu0 0
      %1333 = vmatpush1.bf16.msra.mxu0 0
      %1334 = vmatprep.subr.bf16.mxu0 0
      %1335 = vmatpush1.bf16.msra.mxu0 0
      %1336 = vmatprep.subr.bf16.mxu0 0
      %1337 = vmatpush1.bf16.msra.mxu0 0
      %1338 = vmatprep.subr.bf16.mxu0 0
      %1339 = vmatpush1.bf16.msra.mxu0 0
      %1340 = vmatprep.subr.bf16.mxu0 0
      %1341 = vmatpush1.bf16.msra.mxu0 0
      %1342 = vmatprep.subr.bf16.mxu0 0
      %1343 = vmatpush1.bf16.msra.mxu0 0
      %1344 = vmatprep.subr.bf16.mxu0 0
      %1345 = vmatpush1.bf16.msra.mxu0 0
      %1346 = vmatprep.subr.bf16.mxu0 0
      %1347 = vmatpush1.bf16.msra.mxu0 0
      %1348 = vmatprep.subr.bf16.mxu0 0
      %1349 = vmatpush1.bf16.msra.mxu0 0
      %1350 = vmatprep.subr.bf16.mxu0 0
      %1351 = vmatpush1.bf16.msra.mxu0 0
      %1352 = vmatprep.subr.bf16.mxu0 0
      %1353 = vmatpush1.bf16.msra.mxu0 0
      %1354 = vmatprep.subr.bf16.mxu0 0
      %1355 = vmatpush1.bf16.msra.mxu0 0
      %1356 = vmatprep.subr.bf16.mxu0 0
      %1357 = vmatpush1.bf16.msra.mxu0 0
      %1358 = vmatprep.mubr.bf16.mxu0 0
      %1359 = vmatmul.mubr.bf16.gmra.mrb[0].mxu0 %v1321
      %v1360 = vpop.f32.mrb[0].mxu0
      %v1361 = vadd.f32 0.0, %v1360
      %v1362 = vpop.f32.mrb[0].mxu0
      %v1363 = vpop.f32.mrb[0].mxu0
      %v1364 = vpop.f32.mrb[0].mxu0
      %1365 = vdwg.mxu0
      %1366 = vrot.lane.b32.xlu0 %v1012, 64
      %v1367 = vpop.permute.xlu0 %1366
      %v1369 = vsel %vm1017, %v1268, 0
      %v1372 = vsel %vm831, %v1367, 0
      %1374 = vmatprep.subr.bf16.mxu0 0
      %1375 = vmatpush1.bf16.msra.mxu0 %v1372
      %1376 = vmatprep.subr.bf16.mxu0 0
      %1377 = vmatpush1.bf16.msra.mxu0 0
      %1378 = vmatprep.subr.bf16.mxu0 0
      %1379 = vmatpush1.bf16.msra.mxu0 0
      %1380 = vmatprep.subr.bf16.mxu0 0
      %1381 = vmatpush1.bf16.msra.mxu0 0
      %1382 = vmatprep.subr.bf16.mxu0 0
      %1383 = vmatpush1.bf16.msra.mxu0 0
      %1384 = vmatprep.subr.bf16.mxu0 0
      %1385 = vmatpush1.bf16.msra.mxu0 0
      %1386 = vmatprep.subr.bf16.mxu0 0
      %1387 = vmatpush1.bf16.msra.mxu0 0
      %1388 = vmatprep.subr.bf16.mxu0 0
      %1389 = vmatpush1.bf16.msra.mxu0 0
      %1390 = vmatprep.subr.bf16.mxu0 0
      %1391 = vmatpush1.bf16.msra.mxu0 0
      %1392 = vmatprep.subr.bf16.mxu0 0
      %1393 = vmatpush1.bf16.msra.mxu0 0
      %1394 = vmatprep.subr.bf16.mxu0 0
      %1395 = vmatpush1.bf16.msra.mxu0 0
      %1396 = vmatprep.subr.bf16.mxu0 0
      %1397 = vmatpush1.bf16.msra.mxu0 0
      %1398 = vmatprep.subr.bf16.mxu0 0
      %1399 = vmatpush1.bf16.msra.mxu0 0
      %1400 = vmatprep.subr.bf16.mxu0 0
      %1401 = vmatpush1.bf16.msra.mxu0 0
      %1402 = vmatprep.subr.bf16.mxu0 0
      %1403 = vmatpush1.bf16.msra.mxu0 0
      %1404 = vmatprep.subr.bf16.mxu0 0
      %1405 = vmatpush1.bf16.msra.mxu0 0
      %1406 = vmatprep.mubr.bf16.mxu0 0
      %1407 = vmatmul.mubr.bf16.gmra.mrb[0].mxu0 %v1369
      %v1408 = vpop.f32.mrb[0].mxu0
      %v1409 = vadd.f32 0.0, %v1408
      %v1410 = vpop.f32.mrb[0].mxu0
      %v1411 = vpop.f32.mrb[0].mxu0
      %v1412 = vpop.f32.mrb[0].mxu0
      %1413 = vdwg.mxu0
      %1414 = vrot.lane.b32.xlu0 %v1014, 64
      %v1415 = vpop.permute.xlu0 %1414
      %v1417 = vsel %vm1017, %v1269, 0
      %v1420 = vsel %vm831, %v1415, 0
      %1422 = vmatprep.subr.bf16.mxu0 0
      %1423 = vmatpush1.bf16.msra.mxu0 %v1420
      %1424 = vmatprep.subr.bf16.mxu0 0
      %1425 = vmatpush1.bf16.msra.mxu0 0
      %1426 = vmatprep.subr.bf16.mxu0 0
      %1427 = vmatpush1.bf16.msra.mxu0 0
      %1428 = vmatprep.subr.bf16.mxu0 0
      %1429 = vmatpush1.bf16.msra.mxu0 0
      %1430 = vmatprep.subr.bf16.mxu0 0
      %1431 = vmatpush1.bf16.msra.mxu0 0
      %1432 = vmatprep.subr.bf16.mxu0 0
      %1433 = vmatpush1.bf16.msra.mxu0 0
      %1434 = vmatprep.subr.bf16.mxu0 0
      %1435 = vmatpush1.bf16.msra.mxu0 0
      %1436 = vmatprep.subr.bf16.mxu0 0
      %1437 = vmatpush1.bf16.msra.mxu0 0
      %1438 = vmatprep.subr.bf16.mxu0 0
      %1439 = vmatpush1.bf16.msra.mxu0 0
      %1440 = vmatprep.subr.bf16.mxu0 0
      %1441 = vmatpush1.bf16.msra.mxu0 0
      %1442 = vmatprep.subr.bf16.mxu0 0
      %1443 = vmatpush1.bf16.msra.mxu0 0
      %1444 = vmatprep.subr.bf16.mxu0 0
      %1445 = vmatpush1.bf16.msra.mxu0 0
      %1446 = vmatprep.subr.bf16.mxu0 0
      %1447 = vmatpush1.bf16.msra.mxu0 0
      %1448 = vmatprep.subr.bf16.mxu0 0
      %1449 = vmatpush1.bf16.msra.mxu0 0
      %1450 = vmatprep.subr.bf16.mxu0 0
      %1451 = vmatpush1.bf16.msra.mxu0 0
      %1452 = vmatprep.subr.bf16.mxu0 0
      %1453 = vmatpush1.bf16.msra.mxu0 0
      %1454 = vmatprep.mubr.bf16.mxu0 0
      %1455 = vmatmul.mubr.bf16.gmra.mrb[0].mxu0 %v1417
      %v1456 = vpop.f32.mrb[0].mxu0
      %v1457 = vadd.f32 0.0, %v1456
      %v1458 = vpop.f32.mrb[0].mxu0
      %v1459 = vpop.f32.mrb[0].mxu0
      %v1460 = vpop.f32.mrb[0].mxu0
      %1461 = vdwg.mxu0
      %1463 = vrot.lane.b32.xlu0 %v1361, 8
      %v1464 = vpop.permute.xlu0 %1463
      %1467 = vrot.lane.b32.xlu0 %v1409, 16
      %v1468 = vpop.permute.xlu0 %1467
      %1471 = vrot.lane.b32.xlu0 %v1457, 24
      %v1472 = vpop.permute.xlu0 %1471
      %v1474 = vsel %vm1017, %v1313, %v1464
      %vm1475 = vcmask 130048
      %v1476 = vsel %vm1475, %v1474, %v1468
      %vm1477 = vcmask 195584
      %v1478 = vsel %vm1477, %v1476, %v1472
      %v1479 = vpack.c.bf16 %v1478, %v1478
      %v1480 = vld [vmem:[%s11] sm:$0xf]
      %v1481 = vld [vmem:[%s11 + $0x4] sm:$0xf]
      %v1482 = vld [vmem:[%s11 + $0x8] sm:$0xf]
      %v1483 = vld [vmem:[%s11 + $0xc] sm:$0xf]
      %v1484 = vld [vmem:[%s12] sm:$0x1]
      %v1486 = vlaneseq
      %v1487 = vshrl.u32 %v1486, 7
      %v1488 = vsub.s32 0, %v1487
      %v1489 = vrot.slane %v1484, %v1488
      %v1495 = vunpack.c.l.b16 %v1480
      %v1496 = vunpack.c.l.b16 %v1481
      %v1497 = vunpack.c.l.b16 %v1482
      %v1498 = vunpack.c.l.b16 %v1483
      %v1499 = vpack.c.b16 %v1496, %v1495
      %v1500 = vpack.c.b16 %v1498, %v1497
      %v1504 = vsel %vm877, %v1479, 0
      %1506 = vmatprep.subr.bf16.mxu0 0
      %1507 = vmatpush1.bf16.msra.mxu0 %v1499
      %1508 = vmatprep.subr.bf16.mxu0 0
      %1509 = vmatpush1.bf16.msra.mxu0 %v1500
      %1510 = vmatprep.subr.bf16.mxu0 0
      %1511 = vmatpush1.bf16.msra.mxu0 0
      %1512 = vmatprep.subr.bf16.mxu0 0
      %1513 = vmatpush1.bf16.msra.mxu0 0
      %1514 = vmatprep.subr.bf16.mxu0 0
      %1515 = vmatpush1.bf16.msra.mxu0 0
      %1516 = vmatprep.subr.bf16.mxu0 0
      %1517 = vmatpush1.bf16.msra.mxu0 0
      %1518 = vmatprep.subr.bf16.mxu0 0
      %1519 = vmatpush1.bf16.msra.mxu0 0
      %1520 = vmatprep.subr.bf16.mxu0 0
      %1521 = vmatpush1.bf16.msra.mxu0 0
      %1522 = vmatprep.subr.bf16.mxu0 0
      %1523 = vmatpush1.bf16.msra.mxu0 0
      %1524 = vmatprep.subr.bf16.mxu0 0
      %1525 = vmatpush1.bf16.msra.mxu0 0
      %1526 = vmatprep.subr.bf16.mxu0 0
      %1527 = vmatpush1.bf16.msra.mxu0 0
      %1528 = vmatprep.subr.bf16.mxu0 0
      %1529 = vmatpush1.bf16.msra.mxu0 0
      %1530 = vmatprep.subr.bf16.mxu0 0
      %1531 = vmatpush1.bf16.msra.mxu0 0
      %1532 = vmatprep.subr.bf16.mxu0 0
      %1533 = vmatpush1.bf16.msra.mxu0 0
      %1534 = vmatprep.subr.bf16.mxu0 0
      %1535 = vmatpush1.bf16.msra.mxu0 0
      %1536 = vmatprep.subr.bf16.mxu0 0
      %1537 = vmatpush1.bf16.msra.mxu0 0
      %1538 = vmatprep.mubr.bf16.mxu0 0
      %1539 = vmatmul.mubr.bf16.gmra.mrb[0].mxu0 %v1504
      %v1540 = vpop.f32.mrb[0].mxu0
      %v1541 = vadd.f32 %v1489, %v1540
      %v1542 = vpop.f32.mrb[0].mxu0
      %v1543 = vpop.f32.mrb[0].mxu0
      %v1544 = vpop.f32.mrb[0].mxu0
      %1545 = vdwg.mxu0
      %v1546 = vadd.f32 %v1541, %v936
      %v1547 = vld [vmem:[%s13] sm:$0x1]
      %v1548 = vld [vmem:[%s14] sm:$0x1]
      %v1549 = vsel %vm877, %v1546, 0.0
      %1550 = vadd.xlane.f32.xlu0 %v1549
      %v1551 = vpop.xlane.xlu0 %1550
      %v1552 = vmul.f32 %v1551, %v881
      %v1553 = vsub.f32 %v1546, %v1552
      %v1554 = vmul.f32 %v1553, %v1553
      %v1555 = vsel %vm877, %v1554, 0.0
      %1556 = vadd.xlane.f32.xlu0 %v1555
      %v1557 = vpop.xlane.xlu0 %1556
      %v1558 = vmul.f32 %v1557, %v881
      %v1559 = vadd.f32 %v1558, 1e-12
      %v1560 = vrsqrt.pop %v1559
      %v1561 = vmul.f32 %v1553, %v1560
      %v1563 = vlaneseq
      %v1564 = vshrl.u32 %v1563, 7
      %v1565 = vsub.s32 0, %v1564
      %v1566 = vrot.slane %v1547, %v1565
      %v1568 = vmul.f32 %v1561, %v1566
      %v1570 = vlaneseq
      %v1571 = vshrl.u32 %v1570, 7
      %v1572 = vsub.s32 0, %v1571
      %v1573 = vrot.slane %v1548, %v1572
      %v1575 = vadd.f32 %v1568, %v1573
      %v1576 = vpack.c.bf16 %v1575, %v1575
      %v1577 = vld [vmem:[%s15] sm:$0xf]
      %v1578 = vld [vmem:[%s15 + $0x4] sm:$0xf]
      %v1579 = vld [vmem:[%s15 + $0x8] sm:$0xf]
      %v1580 = vld [vmem:[%s15 + $0xc] sm:$0xf]
      %v1581 = vld [vmem:[%s16] sm:$0x1]
      %v1583 = vlaneseq
      %v1584 = vshrl.u32 %v1583, 7
      %v1585 = vsub.s32 0, %v1584
      %v1586 = vrot.slane %v1581, %v1585
      %v1592 = vunpack.c.l.b16 %v1577
      %v1593 = vunpack.c.l.b16 %v1578
      %v1594 = vunpack.c.l.b16 %v1579
      %v1595 = vunpack.c.l.b16 %v1580
      %v1596 = vpack.c.b16 %v1593, %v1592
      %v1597 = vpack.c.b16 %v1595, %v1594
      %v1601 = vsel %vm877, %v1576, 0
      %1603 = vmatprep.subr.bf16.mxu0 0
      %1604 = vmatpush1.bf16.msra.mxu0 %v1596
      %1605 = vmatprep.subr.bf16.mxu0 0
      %1606 = vmatpush1.bf16.msra.mxu0 %v1597
      %1607 = vmatprep.subr.bf16.mxu0 0
      %1608 = vmatpush1.bf16.msra.mxu0 0
      %1609 = vmatprep.subr.bf16.mxu0 0
      %1610 = vmatpush1.bf16.msra.mxu0 0
      %1611 = vmatprep.subr.bf16.mxu0 0
      %1612 = vmatpush1.bf16.msra.mxu0 0
      %1613 = vmatprep.subr.bf16.mxu0 0
      %1614 = vmatpush1.bf16.msra.mxu0 0
      %1615 = vmatprep.subr.bf16.mxu0 0
      %1616 = vmatpush1.bf16.msra.mxu0 0
      %1617 = vmatprep.subr.bf16.mxu0 0
      %1618 = vmatpush1.bf16.msra.mxu0 0
      %1619 = vmatprep.subr.bf16.mxu0 0
      %1620 = vmatpush1.bf16.msra.mxu0 0
      %1621 = vmatprep.subr.bf16.mxu0 0
      %1622 = vmatpush1.bf16.msra.mxu0 0
      %1623 = vmatprep.subr.bf16.mxu0 0
      %1624 = vmatpush1.bf16.msra.mxu0 0
      %1625 = vmatprep.subr.bf16.mxu0 0
      %1626 = vmatpush1.bf16.msra.mxu0 0
      %1627 = vmatprep.subr.bf16.mxu0 0
      %1628 = vmatpush1.bf16.msra.mxu0 0
      %1629 = vmatprep.subr.bf16.mxu0 0
      %1630 = vmatpush1.bf16.msra.mxu0 0
      %1631 = vmatprep.subr.bf16.mxu0 0
      %1632 = vmatpush1.bf16.msra.mxu0 0
      %1633 = vmatprep.subr.bf16.mxu0 0
      %1634 = vmatpush1.bf16.msra.mxu0 0
      %1635 = vmatprep.mubr.bf16.mxu0 0
      %1636 = vmatmul.mubr.bf16.gmra.mrb[0].mxu0 %v1601
      %v1637 = vpop.f32.mrb[0].mxu0
      %v1638 = vadd.f32 %v1586, %v1637
      %v1639 = vpop.f32.mrb[0].mxu0
      %v1640 = vpop.f32.mrb[0].mxu0
      %v1641 = vpop.f32.mrb[0].mxu0
      %1642 = vdwg.mxu0
      %v1643 = vmul.f32 %v1638, 0.5
      %v1644 = vmul.f32 %v1638, 0.044715
      %v1645 = vmul.f32 %v1644, %v1638
      %v1646 = vmul.f32 %v1645, %v1638
      %v1647 = vadd.f32 %v1638, %v1646
      %v1648 = vmul.f32 %v1647, 0.7978846
      %v1649 = vtanh.pop %v1648
      %v1650 = vadd.f32 %v1649, 1.0
      %v1651 = vmul.f32 %v1643, %v1650
      %v1652 = vpack.c.bf16 %v1651, %v1651
      %v1653 = vld [vmem:[%s17] sm:$0xf]
      %v1654 = vld [vmem:[%s17 + $0x4] sm:$0xf]
      %v1655 = vld [vmem:[%s17 + $0x8] sm:$0xf]
      %v1656 = vld [vmem:[%s17 + $0xc] sm:$0xf]
      %v1657 = vld [vmem:[%s17 + $0x10] sm:$0xf]
      %v1658 = vld [vmem:[%s17 + $0x14] sm:$0xf]
      %v1659 = vld [vmem:[%s17 + $0x18] sm:$0xf]
      %v1660 = vld [vmem:[%s17 + $0x1c] sm:$0xf]
      %v1661 = vld [vmem:[%s18] sm:$0x1]
      %v1663 = vlaneseq
      %v1664 = vshrl.u32 %v1663, 7
      %v1665 = vsub.s32 0, %v1664
      %v1666 = vrot.slane %v1661, %v1665
      %v1676 = vunpack.c.l.b16 %v1653
      %v1677 = vunpack.c.l.b16 %v1654
      %v1678 = vunpack.c.l.b16 %v1655
      %v1679 = vunpack.c.l.b16 %v1656
      %v1680 = vunpack.c.l.b16 %v1657
      %v1681 = vunpack.c.l.b16 %v1658
      %v1682 = vunpack.c.l.b16 %v1659
      %v1683 = vunpack.c.l.b16 %v1660
      %v1684 = vpack.c.b16 %v1677, %v1676
      %v1685 = vpack.c.b16 %v1679, %v1678
      %v1686 = vpack.c.b16 %v1681, %v1680
      %v1687 = vpack.c.b16 %v1683, %v1682
      %vm1692 = vcmask 523264
      %v1694 = vsel %vm1692, %v1652, 0
      %1696 = vmatprep.subr.bf16.mxu0 0
      %1697 = vmatpush1.bf16.msra.mxu0 %v1684
      %1698 = vmatprep.subr.bf16.mxu0 0
      %1699 = vmatpush1.bf16.msra.mxu0 %v1685
      %1700 = vmatprep.subr.bf16.mxu0 0
      %1701 = vmatpush1.bf16.msra.mxu0 %v1686
      %1702 = vmatprep.subr.bf16.mxu0 0
      %1703 = vmatpush1.bf16.msra.mxu0 %v1687
      %1704 = vmatprep.subr.bf16.mxu0 0
      %1705 = vmatpush1.bf16.msra.mxu0 0
      %1706 = vmatprep.subr.bf16.mxu0 0
      %1707 = vmatpush1.bf16.msra.mxu0 0
      %1708 = vmatprep.subr.bf16.mxu0 0
      %1709 = vmatpush1.bf16.msra.mxu0 0
      %1710 = vmatprep.subr.bf16.mxu0 0
      %1711 = vmatpush1.bf16.msra.mxu0 0
      %1712 = vmatprep.subr.bf16.mxu0 0
      %1713 = vmatpush1.bf16.msra.mxu0 0
      %1714 = vmatprep.subr.bf16.mxu0 0
      %1715 = vmatpush1.bf16.msra.mxu0 0
      %1716 = vmatprep.subr.bf16.mxu0 0
      %1717 = vmatpush1.bf16.msra.mxu0 0
      %1718 = vmatprep.subr.bf16.mxu0 0
      %1719 = vmatpush1.bf16.msra.mxu0 0
      %1720 = vmatprep.subr.bf16.mxu0 0
      %1721 = vmatpush1.bf16.msra.mxu0 0
      %1722 = vmatprep.subr.bf16.mxu0 0
      %1723 = vmatpush1.bf16.msra.mxu0 0
      %1724 = vmatprep.subr.bf16.mxu0 0
      %1725 = vmatpush1.bf16.msra.mxu0 0
      %1726 = vmatprep.subr.bf16.mxu0 0
      %1727 = vmatpush1.bf16.msra.mxu0 0
      %1728 = vmatprep.mubr.bf16.mxu0 0
      %1729 = vmatmul.mubr.bf16.gmra.mrb[0].mxu0 %v1694
      %v1730 = vpop.f32.mrb[0].mxu0
      %v1731 = vadd.f32 %v1666, %v1730
      %v1732 = vpop.f32.mrb[0].mxu0
      %v1733 = vpop.f32.mrb[0].mxu0
      %v1734 = vpop.f32.mrb[0].mxu0
      %1735 = vdwg.mxu0
      %v1736 = vadd.f32 %v1731, %v1575
      %v1737 = vld [vmem:[%s19] sm:$0x1]
      %v1738 = vld [vmem:[%s20] sm:$0x1]
      %v1739 = vsel %vm877, %v1736, 0.0
      %1740 = vadd.xlane.f32.xlu0 %v1739
      %v1741 = vpop.xlane.xlu0 %1740
      %v1742 = vmul.f32 %v1741, %v881
      %v1743 = vsub.f32 %v1736, %v1742
      %v1744 = vmul.f32 %v1743, %v1743
      %v1745 = vsel %vm877, %v1744, 0.0
      %1746 = vadd.xlane.f32.xlu0 %v1745
      %v1747 = vpop.xlane.xlu0 %1746
      %v1748 = vmul.f32 %v1747, %v881
      %v1749 = vadd.f32 %v1748, 1e-12
      %v1750 = vrsqrt.pop %v1749
      %v1751 = vmul.f32 %v1743, %v1750
      %v1753 = vlaneseq
      %v1754 = vshrl.u32 %v1753, 7
      %v1755 = vsub.s32 0, %v1754
      %v1756 = vrot.slane %v1737, %v1755
      %v1758 = vmul.f32 %v1751, %v1756
      %v1760 = vlaneseq
      %v1761 = vshrl.u32 %v1760, 7
      %v1762 = vsub.s32 0, %v1761
      %v1763 = vrot.slane %v1738, %v1762
      %v1765 = vadd.f32 %v1758, %v1763
      %v1766 = vpack.c.bf16 %v1765, %v1765
      %s1767 = scalar_lea.vmem %s9, 16
      %v1768 = vld [vmem:[%s1767] sm:$0xf]
      %v1769 = vld [vmem:[%s1767 + $0x4] sm:$0xf]
      %v1770 = vld [vmem:[%s1767 + $0x8] sm:$0xf]
      %v1771 = vld [vmem:[%s1767 + $0xc] sm:$0xf]
      %s1772 = scalar_lea.vmem %s10, 1
      %v1773 = vld [vmem:[%s1772] sm:$0x1]
      %v1775 = vlaneseq
      %v1776 = vshrl.u32 %v1775, 7
      %v1777 = vsub.s32 0, %v1776
      %v1778 = vrot.slane %v1773, %v1777
      %v1784 = vunpack.c.l.b16 %v1768
      %v1785 = vunpack.c.l.b16 %v1769
      %v1786 = vunpack.c.l.b16 %v1770
      %v1787 = vunpack.c.l.b16 %v1771
      %v1788 = vpack.c.b16 %v1785, %v1784
      %v1789 = vpack.c.b16 %v1787, %v1786
      %v1793 = vsel %vm877, %v1766, 0
      %1795 = vmatprep.subr.bf16.mxu0 0
      %1796 = vmatpush1.bf16.msra.mxu0 %v1788
      %1797 = vmatprep.subr.bf16.mxu0 0
      %1798 = vmatpush1.bf16.msra.mxu0 %v1789
      %1799 = vmatprep.subr.bf16.mxu0 0
      %1800 = vmatpush1.bf16.msra.mxu0 0
      %1801 = vmatprep.subr.bf16.mxu0 0
      %1802 = vmatpush1.bf16.msra.mxu0 0
      %1803 = vmatprep.subr.bf16.mxu0 0
      %1804 = vmatpush1.bf16.msra.mxu0 0
      %1805 = vmatprep.subr.bf16.mxu0 0
      %1806 = vmatpush1.bf16.msra.mxu0 0
      %1807 = vmatprep.subr.bf16.mxu0 0
      %1808 = vmatpush1.bf16.msra.mxu0 0
      %1809 = vmatprep.subr.bf16.mxu0 0
      %1810 = vmatpush1.bf16.msra.mxu0 0
      %1811 = vmatprep.subr.bf16.mxu0 0
      %1812 = vmatpush1.bf16.msra.mxu0 0
      %1813 = vmatprep.subr.bf16.mxu0 0
      %1814 = vmatpush1.bf16.msra.mxu0 0
      %1815 = vmatprep.subr.bf16.mxu0 0
      %1816 = vmatpush1.bf16.msra.mxu0 0
      %1817 = vmatprep.subr.bf16.mxu0 0
      %1818 = vmatpush1.bf16.msra.mxu0 0
      %1819 = vmatprep.subr.bf16.mxu0 0
      %1820 = vmatpush1.bf16.msra.mxu0 0
      %1821 = vmatprep.subr.bf16.mxu0 0
      %1822 = vmatpush1.bf16.msra.mxu0 0
      %1823 = vmatprep.subr.bf16.mxu0 0
      %1824 = vmatpush1.bf16.msra.mxu0 0
      %1825 = vmatprep.subr.bf16.mxu0 0
      %1826 = vmatpush1.bf16.msra.mxu0 0
      %1827 = vmatprep.mubr.bf16.mxu0 0
      %1828 = vmatmul.mubr.bf16.gmra.mrb[0].mxu0 %v1793
      %v1829 = vpop.f32.mrb[0].mxu0
      %v1830 = vadd.f32 %v1778, %v1829
      %v1831 = vpop.f32.mrb[0].mxu0
      %v1832 = vpop.f32.mrb[0].mxu0
      %v1833 = vpop.f32.mrb[0].mxu0
      %1834 = vdwg.mxu0
      %v1835 = vpack.c.bf16 %v1830, %v1830
      %1837 = vrot.lane.b32.xlu0 %v1835, 120
      %v1838 = vpop.permute.xlu0 %1837
      %1839 = vrot.lane.b32.xlu0 %v1835, 112
      %v1840 = vpop.permute.xlu0 %1839
      %1841 = vrot.lane.b32.xlu0 %v1835, 104
      %v1842 = vpop.permute.xlu0 %1841
      %1843 = vrot.lane.b32.xlu0 %v1835, 96
      %v1844 = vpop.permute.xlu0 %1843
      %v1846 = vsel %vm1017, %v1835, 0
      %v1849 = vsel %vm1017, %v1844, 0
      %1851 = vmatprep.subr.bf16.mxu0 0
      %1852 = vmatpush1.bf16.xpose.msra.mxu0 %v1849
      %1853 = vmatprep.subr.bf16.mxu0 0
      %1854 = vmatpush1.bf16.xpose.msra.mxu0 0
      %1855 = vmatprep.subr.bf16.mxu0 0
      %1856 = vmatpush1.bf16.xpose.msra.mxu0 0
      %1857 = vmatprep.subr.bf16.mxu0 0
      %1858 = vmatpush1.bf16.xpose.msra.mxu0 0
      %1859 = vmatprep.subr.bf16.mxu0 0
      %1860 = vmatpush1.bf16.xpose.msra.mxu0 0
      %1861 = vmatprep.subr.bf16.mxu0 0
      %1862 = vmatpush1.bf16.xpose.msra.mxu0 0
      %1863 = vmatprep.subr.bf16.mxu0 0
      %1864 = vmatpush1.bf16.xpose.msra.mxu0 0
      %1865 = vmatprep.subr.bf16.mxu0 0
      %1866 = vmatpush1.bf16.xpose.msra.mxu0 0
      %1867 = vmatprep.subr.bf16.mxu0 0
      %1868 = vmatpush1.bf16.xpose.msra.mxu0 0
      %1869 = vmatprep.subr.bf16.mxu0 0
      %1870 = vmatpush1.bf16.xpose.msra.mxu0 0
      %1871 = vmatprep.subr.bf16.mxu0 0
      %1872 = vmatpush1.bf16.xpose.msra.mxu0 0
      %1873 = vmatprep.subr.bf16.mxu0 0
      %1874 = vmatpush1.bf16.xpose.msra.mxu0 0
      %1875 = vmatprep.subr.bf16.mxu0 0
      %1876 = vmatpush1.bf16.xpose.msra.mxu0 0
      %1877 = vmatprep.subr.bf16.mxu0 0
      %1878 = vmatpush1.bf16.xpose.msra.mxu0 0
      %1879 = vmatprep.subr.bf16.mxu0 0
      %1880 = vmatpush1.bf16.xpose.msra.mxu0 0
      %1881 = vmatprep.subr.bf16.mxu0 0
      %1882 = vmatpush1.bf16.xpose.msra.mxu0 0
      %1883 = vmatprep.mubr.bf16.mxu0 0
      %1884 = vmatmul.mubr.bf16.gmra.mrb[0].mxu0 %v1846
      %v1885 = vpop.f32.mrb[0].mxu0
      %v1886 = vadd.f32 0.0, %v1885
      %v1887 = vpop.f32.mrb[0].mxu0
      %v1888 = vpop.f32.mrb[0].mxu0
      %v1889 = vpop.f32.mrb[0].mxu0
      %1890 = vdwg.mxu0
      %1891 = vrot.lane.b32.xlu0 %v1838, 96
      %v1892 = vpop.permute.xlu0 %1891
      %v1894 = vsel %vm1017, %v1838, 0
      %v1897 = vsel %vm1017, %v1892, 0
      %1899 = vmatprep.subr.bf16.mxu0 0
      %1900 = vmatpush1.bf16.xpose.msra.mxu0 %v1897
      %1901 = vmatprep.subr.bf16.mxu0 0
      %1902 = vmatpush1.bf16.xpose.msra.mxu0 0
      %1903 = vmatprep.subr.bf16.mxu0 0
      %1904 = vmatpush1.bf16.xpose.msra.mxu0 0
      %1905 = vmatprep.subr.bf16.mxu0 0
      %1906 = vmatpush1.bf16.xpose.msra.mxu0 0
      %1907 = vmatprep.subr.bf16.mxu0 0
      %1908 = vmatpush1.bf16.xpose.msra.mxu0 0
      %1909 = vmatprep.subr.bf16.mxu0 0
      %1910 = vmatpush1.bf16.xpose.msra.mxu0 0
      %1911 = vmatprep.subr.bf16.mxu0 0
      %1912 = vmatpush1.bf16.xpose.msra.mxu0 0
      %1913 = vmatprep.subr.bf16.mxu0 0
      %1914 = vmatpush1.bf16.xpose.msra.mxu0 0
      %1915 = vmatprep.subr.bf16.mxu0 0
      %1916 = vmatpush1.bf16.xpose.msra.mxu0 0
      %1917 = vmatprep.subr.bf16.mxu0 0
      %1918 = vmatpush1.bf16.xpose.msra.mxu0 0
      %1919 = vmatprep.subr.bf16.mxu0 0
      %1920 = vmatpush1.bf16.xpose.msra.mxu0 0
      %1921 = vmatprep.subr.bf16.mxu0 0
      %1922 = vmatpush1.bf16.xpose.msra.mxu0 0
      %1923 = vmatprep.subr.bf16.mxu0 0
      %1924 = vmatpush1.bf16.xpose.msra.mxu0 0
      %1925 = vmatprep.subr.bf16.mxu0 0
      %1926 = vmatpush1.bf16.xpose.msra.mxu0 0
      %1927 = vmatprep.subr.bf16.mxu0 0
      %1928 = vmatpush1.bf16.xpose.msra.mxu0 0
      %1929 = vmatprep.subr.bf16.mxu0 0
      %1930 = vmatpush1.bf16.xpose.msra.mxu0 0
      %1931 = vmatprep.mubr.bf16.mxu0 0
      %1932 = vmatmul.mubr.bf16.gmra.mrb[0].mxu0 %v1894
      %v1933 = vpop.f32.mrb[0].mxu0
      %v1934 = vadd.f32 0.0, %v1933
      %v1935 = vpop.f32.mrb[0].mxu0
      %v1936 = vpop.f32.mrb[0].mxu0
      %v1937 = vpop.f32.mrb[0].mxu0
      %1938 = vdwg.mxu0
      %1939 = vrot.lane.b32.xlu0 %v1840, 96
      %v1940 = vpop.permute.xlu0 %1939
      %v1942 = vsel %vm1017, %v1840, 0
      %v1945 = vsel %vm1017, %v1940, 0
      %1947 = vmatprep.subr.bf16.mxu0 0
      %1948 = vmatpush1.bf16.xpose.msra.mxu0 %v1945
      %1949 = vmatprep.subr.bf16.mxu0 0
      %1950 = vmatpush1.bf16.xpose.msra.mxu0 0
      %1951 = vmatprep.subr.bf16.mxu0 0
      %1952 = vmatpush1.bf16.xpose.msra.mxu0 0
      %1953 = vmatprep.subr.bf16.mxu0 0
      %1954 = vmatpush1.bf16.xpose.msra.mxu0 0
      %1955 = vmatprep.subr.bf16.mxu0 0
      %1956 = vmatpush1.bf16.xpose.msra.mxu0 0
      %1957 = vmatprep.subr.bf16.mxu0 0
      %1958 = vmatpush1.bf16.xpose.msra.mxu0 0
      %1959 = vmatprep.subr.bf16.mxu0 0
      %1960 = vmatpush1.bf16.xpose.msra.mxu0 0
      %1961 = vmatprep.subr.bf16.mxu0 0
      %1962 = vmatpush1.bf16.xpose.msra.mxu0 0
      %1963 = vmatprep.subr.bf16.mxu0 0
      %1964 = vmatpush1.bf16.xpose.msra.mxu0 0
      %1965 = vmatprep.subr.bf16.mxu0 0
      %1966 = vmatpush1.bf16.xpose.msra.mxu0 0
      %1967 = vmatprep.subr.bf16.mxu0 0
      %1968 = vmatpush1.bf16.xpose.msra.mxu0 0
      %1969 = vmatprep.subr.bf16.mxu0 0
      %1970 = vmatpush1.bf16.xpose.msra.mxu0 0
      %1971 = vmatprep.subr.bf16.mxu0 0
      %1972 = vmatpush1.bf16.xpose.msra.mxu0 0
      %1973 = vmatprep.subr.bf16.mxu0 0
      %1974 = vmatpush1.bf16.xpose.msra.mxu0 0
      %1975 = vmatprep.subr.bf16.mxu0 0
      %1976 = vmatpush1.bf16.xpose.msra.mxu0 0
      %1977 = vmatprep.subr.bf16.mxu0 0
      %1978 = vmatpush1.bf16.xpose.msra.mxu0 0
      %1979 = vmatprep.mubr.bf16.mxu0 0
      %1980 = vmatmul.mubr.bf16.gmra.mrb[0].mxu0 %v1942
      %v1981 = vpop.f32.mrb[0].mxu0
      %v1982 = vadd.f32 0.0, %v1981
      %v1983 = vpop.f32.mrb[0].mxu0
      %v1984 = vpop.f32.mrb[0].mxu0
      %v1985 = vpop.f32.mrb[0].mxu0
      %1986 = vdwg.mxu0
      %1987 = vrot.lane.b32.xlu0 %v1842, 96
      %v1988 = vpop.permute.xlu0 %1987
      %v1990 = vsel %vm1017, %v1842, 0
      %v1993 = vsel %vm1017, %v1988, 0
      %1995 = vmatprep.subr.bf16.mxu0 0
      %1996 = vmatpush1.bf16.xpose.msra.mxu0 %v1993
      %1997 = vmatprep.subr.bf16.mxu0 0
      %1998 = vmatpush1.bf16.xpose.msra.mxu0 0
      %1999 = vmatprep.subr.bf16.mxu0 0
      %2000 = vmatpush1.bf16.xpose.msra.mxu0 0
      %2001 = vmatprep.subr.bf16.mxu0 0
      %2002 = vmatpush1.bf16.xpose.msra.mxu0 0
      %2003 = vmatprep.subr.bf16.mxu0 0
      %2004 = vmatpush1.bf16.xpose.msra.mxu0 0
      %2005 = vmatprep.subr.bf16.mxu0 0
      %2006 = vmatpush1.bf16.xpose.msra.mxu0 0
      %2007 = vmatprep.subr.bf16.mxu0 0
      %2008 = vmatpush1.bf16.xpose.msra.mxu0 0
      %2009 = vmatprep.subr.bf16.mxu0 0
      %2010 = vmatpush1.bf16.xpose.msra.mxu0 0
      %2011 = vmatprep.subr.bf16.mxu0 0
      %2012 = vmatpush1.bf16.xpose.msra.mxu0 0
      %2013 = vmatprep.subr.bf16.mxu0 0
      %2014 = vmatpush1.bf16.xpose.msra.mxu0 0
      %2015 = vmatprep.subr.bf16.mxu0 0
      %2016 = vmatpush1.bf16.xpose.msra.mxu0 0
      %2017 = vmatprep.subr.bf16.mxu0 0
      %2018 = vmatpush1.bf16.xpose.msra.mxu0 0
      %2019 = vmatprep.subr.bf16.mxu0 0
      %2020 = vmatpush1.bf16.xpose.msra.mxu0 0
      %2021 = vmatprep.subr.bf16.mxu0 0
      %2022 = vmatpush1.bf16.xpose.msra.mxu0 0
      %2023 = vmatprep.subr.bf16.mxu0 0
      %2024 = vmatpush1.bf16.xpose.msra.mxu0 0
      %2025 = vmatprep.subr.bf16.mxu0 0
      %2026 = vmatpush1.bf16.xpose.msra.mxu0 0
      %2027 = vmatprep.mubr.bf16.mxu0 0
      %2028 = vmatmul.mubr.bf16.gmra.mrb[0].mxu0 %v1990
      %v2029 = vpop.f32.mrb[0].mxu0
      %v2030 = vadd.f32 0.0, %v2029
      %v2031 = vpop.f32.mrb[0].mxu0
      %v2032 = vpop.f32.mrb[0].mxu0
      %v2033 = vpop.f32.mrb[0].mxu0
      %2034 = vdwg.mxu0
      %v2035 = vmul.f32 %v1886, 0.35355338
      %v2036 = vmul.f32 %v1934, 0.35355338
      %v2037 = vmul.f32 %v1982, 0.35355338
      %v2038 = vmul.f32 %v2030, 0.35355338
      %v2039 = vadd.f32 %v2035, %v1216
      %v2040 = vadd.f32 %v2036, %v1216
      %v2041 = vadd.f32 %v2037, %v1216
      %v2042 = vadd.f32 %v2038, %v1216
      %v2043 = vsel %vm1017, %v2039, -inf
      %2044 = vmax.xlane.f32.xlu0 %v2043
      %v2045 = vpop.xlane.xlu0 %2044
      %v2046 = vsel %vm1017, %v2040, -inf
      %2047 = vmax.xlane.f32.xlu0 %v2046
      %v2048 = vpop.xlane.xlu0 %2047
      %v2049 = vsel %vm1017, %v2041, -inf
      %2050 = vmax.xlane.f32.xlu0 %v2049
      %v2051 = vpop.xlane.xlu0 %2050
      %v2052 = vsel %vm1017, %v2042, -inf
      %2053 = vmax.xlane.f32.xlu0 %v2052
      %v2054 = vpop.xlane.xlu0 %2053
      %v2055 = vsub.f32 %v2039, %v2045
      %v2056 = vsub.f32 %v2040, %v2048
      %v2057 = vsub.f32 %v2041, %v2051
      %v2058 = vsub.f32 %v2042, %v2054
      %v2059 = vmul.f32 %v2055, 1.442695
      %v2060 = vpow.pop %v2059
      %v2061 = vmul.f32 %v2056, 1.442695
      %v2062 = vpow.pop %v2061
      %v2063 = vmul.f32 %v2057, 1.442695
      %v2064 = vpow.pop %v2063
      %v2065 = vmul.f32 %v2058, 1.442695
      %v2066 = vpow.pop %v2065
      %v2067 = vsel %vm1017, %v2060, 0.0
      %2068 = vadd.xlane.f32.xlu0 %v2067
      %v2069 = vpop.xlane.xlu0 %2068
      %v2070 = vsel %vm1017, %v2062, 0.0
      %2071 = vadd.xlane.f32.xlu0 %v2070
      %v2072 = vpop.xlane.xlu0 %2071
      %v2073 = vsel %vm1017, %v2064, 0.0
      %2074 = vadd.xlane.f32.xlu0 %v2073
      %v2075 = vpop.xlane.xlu0 %2074
      %v2076 = vsel %vm1017, %v2066, 0.0
      %2077 = vadd.xlane.f32.xlu0 %v2076
      %v2078 = vpop.xlane.xlu0 %2077
      %v2079 = vrcp.pop %v2069
      %v2080 = vmul.f32 %v2060, %v2079
      %v2081 = vrcp.pop %v2072
      %v2082 = vmul.f32 %v2062, %v2081
      %v2083 = vrcp.pop %v2075
      %v2084 = vmul.f32 %v2064, %v2083
      %v2085 = vrcp.pop %v2078
      %v2086 = vmul.f32 %v2066, %v2085
      %v2087 = vpack.c.bf16 %v2080, %v2080
      %v2088 = vpack.c.bf16 %v2082, %v2082
      %v2089 = vpack.c.bf16 %v2084, %v2084
      %v2090 = vpack.c.bf16 %v2086, %v2086
      %2091 = vrot.lane.b32.xlu0 %v1835, 64
      %v2092 = vpop.permute.xlu0 %2091
      %v2094 = vsel %vm1017, %v2087, 0
      %v2097 = vsel %vm831, %v2092, 0
      %2099 = vmatprep.subr.bf16.mxu0 0
      %2100 = vmatpush1.bf16.msra.mxu0 %v2097
      %2101 = vmatprep.subr.bf16.mxu0 0
      %2102 = vmatpush1.bf16.msra.mxu0 0
      %2103 = vmatprep.subr.bf16.mxu0 0
      %2104 = vmatpush1.bf16.msra.mxu0 0
      %2105 = vmatprep.subr.bf16.mxu0 0
      %2106 = vmatpush1.bf16.msra.mxu0 0
      %2107 = vmatprep.subr.bf16.mxu0 0
      %2108 = vmatpush1.bf16.msra.mxu0 0
      %2109 = vmatprep.subr.bf16.mxu0 0
      %2110 = vmatpush1.bf16.msra.mxu0 0
      %2111 = vmatprep.subr.bf16.mxu0 0
      %2112 = vmatpush1.bf16.msra.mxu0 0
      %2113 = vmatprep.subr.bf16.mxu0 0
      %2114 = vmatpush1.bf16.msra.mxu0 0
      %2115 = vmatprep.subr.bf16.mxu0 0
      %2116 = vmatpush1.bf16.msra.mxu0 0
      %2117 = vmatprep.subr.bf16.mxu0 0
      %2118 = vmatpush1.bf16.msra.mxu0 0
      %2119 = vmatprep.subr.bf16.mxu0 0
      %2120 = vmatpush1.bf16.msra.mxu0 0
      %2121 = vmatprep.subr.bf16.mxu0 0
      %2122 = vmatpush1.bf16.msra.mxu0 0
      %2123 = vmatprep.subr.bf16.mxu0 0
      %2124 = vmatpush1.bf16.msra.mxu0 0
      %2125 = vmatprep.subr.bf16.mxu0 0
      %2126 = vmatpush1.bf16.msra.mxu0 0
      %2127 = vmatprep.subr.bf16.mxu0 0
      %2128 = vmatpush1.bf16.msra.mxu0 0
      %2129 = vmatprep.subr.bf16.mxu0 0
      %2130 = vmatpush1.bf16.msra.mxu0 0
      %2131 = vmatprep.mubr.bf16.mxu0 0
      %2132 = vmatmul.mubr.bf16.gmra.mrb[0].mxu0 %v2094
      %v2133 = vpop.f32.mrb[0].mxu0
      %v2134 = vadd.f32 0.0, %v2133
      %v2135 = vpop.f32.mrb[0].mxu0
      %v2136 = vpop.f32.mrb[0].mxu0
      %v2137 = vpop.f32.mrb[0].mxu0
      %2138 = vdwg.mxu0
      %2139 = vrot.lane.b32.xlu0 %v1838, 64
      %v2140 = vpop.permute.xlu0 %2139
      %v2142 = vsel %vm1017, %v2088, 0
      %v2145 = vsel %vm831, %v2140, 0
      %2147 = vmatprep.subr.bf16.mxu0 0
      %2148 = vmatpush1.bf16.msra.mxu0 %v2145
      %2149 = vmatprep.subr.bf16.mxu0 0
      %2150 = vmatpush1.bf16.msra.mxu0 0
      %2151 = vmatprep.subr.bf16.mxu0 0
      %2152 = vmatpush1.bf16.msra.mxu0 0
      %2153 = vmatprep.subr.bf16.mxu0 0
      %2154 = vmatpush1.bf16.msra.mxu0 0
      %2155 = vmatprep.subr.bf16.mxu0 0
      %2156 = vmatpush1.bf16.msra.mxu0 0
      %2157 = vmatprep.subr.bf16.mxu0 0
      %2158 = vmatpush1.bf16.msra.mxu0 0
      %2159 = vmatprep.subr.bf16.mxu0 0
      %2160 = vmatpush1.bf16.msra.mxu0 0
      %2161 = vmatprep.subr.bf16.mxu0 0
      %2162 = vmatpush1.bf16.msra.mxu0 0
      %2163 = vmatprep.subr.bf16.mxu0 0
      %2164 = vmatpush1.bf16.msra.mxu0 0
      %2165 = vmatprep.subr.bf16.mxu0 0
      %2166 = vmatpush1.bf16.msra.mxu0 0
      %2167 = vmatprep.subr.bf16.mxu0 0
      %2168 = vmatpush1.bf16.msra.mxu0 0
      %2169 = vmatprep.subr.bf16.mxu0 0
      %2170 = vmatpush1.bf16.msra.mxu0 0
      %2171 = vmatprep.subr.bf16.mxu0 0
      %2172 = vmatpush1.bf16.msra.mxu0 0
      %2173 = vmatprep.subr.bf16.mxu0 0
      %2174 = vmatpush1.bf16.msra.mxu0 0
      %2175 = vmatprep.subr.bf16.mxu0 0
      %2176 = vmatpush1.bf16.msra.mxu0 0
      %2177 = vmatprep.subr.bf16.mxu0 0
      %2178 = vmatpush1.bf16.msra.mxu0 0
      %2179 = vmatprep.mubr.bf16.mxu0 0
      %2180 = vmatmul.mubr.bf16.gmra.mrb[0].mxu0 %v2142
      %v2181 = vpop.f32.mrb[0].mxu0
      %v2182 = vadd.f32 0.0, %v2181
      %v2183 = vpop.f32.mrb[0].mxu0
      %v2184 = vpop.f32.mrb[0].mxu0
      %v2185 = vpop.f32.mrb[0].mxu0
      %2186 = vdwg.mxu0
      %2187 = vrot.lane.b32.xlu0 %v1840, 64
      %v2188 = vpop.permute.xlu0 %2187
      %v2190 = vsel %vm1017, %v2089, 0
      %v2193 = vsel %vm831, %v2188, 0
      %2195 = vmatprep.subr.bf16.mxu0 0
      %2196 = vmatpush1.bf16.msra.mxu0 %v2193
      %2197 = vmatprep.subr.bf16.mxu0 0
      %2198 = vmatpush1.bf16.msra.mxu0 0
      %2199 = vmatprep.subr.bf16.mxu0 0
      %2200 = vmatpush1.bf16.msra.mxu0 0
      %2201 = vmatprep.subr.bf16.mxu0 0
      %2202 = vmatpush1.bf16.msra.mxu0 0
      %2203 = vmatprep.subr.bf16.mxu0 0
      %2204 = vmatpush1.bf16.msra.mxu0 0
      %2205 = vmatprep.subr.bf16.mxu0 0
      %2206 = vmatpush1.bf16.msra.mxu0 0
      %2207 = vmatprep.subr.bf16.mxu0 0
      %2208 = vmatpush1.bf16.msra.mxu0 0
      %2209 = vmatprep.subr.bf16.mxu0 0
      %2210 = vmatpush1.bf16.msra.mxu0 0
      %2211 = vmatprep.subr.bf16.mxu0 0
      %2212 = vmatpush1.bf16.msra.mxu0 0
      %2213 = vmatprep.subr.bf16.mxu0 0
      %2214 = vmatpush1.bf16.msra.mxu0 0
      %2215 = vmatprep.subr.bf16.mxu0 0
      %2216 = vmatpush1.bf16.msra.mxu0 0
      %2217 = vmatprep.subr.bf16.mxu0 0
      %2218 = vmatpush1.bf16.msra.mxu0 0
      %2219 = vmatprep.subr.bf16.mxu0 0
      %2220 = vmatpush1.bf16.msra.mxu0 0
      %2221 = vmatprep.subr.bf16.mxu0 0
      %2222 = vmatpush1.bf16.msra.mxu0 0
      %2223 = vmatprep.subr.bf16.mxu0 0
      %2224 = vmatpush1.bf16.msra.mxu0 0
      %2225 = vmatprep.subr.bf16.mxu0 0
      %2226 = vmatpush1.bf16.msra.mxu0 0
      %2227 = vmatprep.mubr.bf16.mxu0 0
      %2228 = vmatmul.mubr.bf16.gmra.mrb[0].mxu0 %v2190
      %v2229 = vpop.f32.mrb[0].mxu0
      %v2230 = vadd.f32 0.0, %v2229
      %v2231 = vpop.f32.mrb[0].mxu0
      %v2232 = vpop.f32.mrb[0].mxu0
      %v2233 = vpop.f32.mrb[0].mxu0
      %2234 = vdwg.mxu0
      %2235 = vrot.lane.b32.xlu0 %v1842, 64
      %v2236 = vpop.permute.xlu0 %2235
      %v2238 = vsel %vm1017, %v2090, 0
      %v2241 = vsel %vm831, %v2236, 0
      %2243 = vmatprep.subr.bf16.mxu0 0
      %2244 = vmatpush1.bf16.msra.mxu0 %v2241
      %2245 = vmatprep.subr.bf16.mxu0 0
      %2246 = vmatpush1.bf16.msra.mxu0 0
      %2247 = vmatprep.subr.bf16.mxu0 0
      %2248 = vmatpush1.bf16.msra.mxu0 0
      %2249 = vmatprep.subr.bf16.mxu0 0
      %2250 = vmatpush1.bf16.msra.mxu0 0
      %2251 = vmatprep.subr.bf16.mxu0 0
      %2252 = vmatpush1.bf16.msra.mxu0 0
      %2253 = vmatprep.subr.bf16.mxu0 0
      %2254 = vmatpush1.bf16.msra.mxu0 0
      %2255 = vmatprep.subr.bf16.mxu0 0
      %2256 = vmatpush1.bf16.msra.mxu0 0
      %2257 = vmatprep.subr.bf16.mxu0 0
      %2258 = vmatpush1.bf16.msra.mxu0 0
      %2259 = vmatprep.subr.bf16.mxu0 0
      %2260 = vmatpush1.bf16.msra.mxu0 0
      %2261 = vmatprep.subr.bf16.mxu0 0
      %2262 = vmatpush1.bf16.msra.mxu0 0
      %2263 = vmatprep.subr.bf16.mxu0 0
      %2264 = vmatpush1.bf16.msra.mxu0 0
      %2265 = vmatprep.subr.bf16.mxu0 0
      %2266 = vmatpush1.bf16.msra.mxu0 0
      %2267 = vmatprep.subr.bf16.mxu0 0
      %2268 = vmatpush1.bf16.msra.mxu0 0
      %2269 = vmatprep.subr.bf16.mxu0 0
      %2270 = vmatpush1.bf16.msra.mxu0 0
      %2271 = vmatprep.subr.bf16.mxu0 0
      %2272 = vmatpush1.bf16.msra.mxu0 0
      %2273 = vmatprep.subr.bf16.mxu0 0
      %2274 = vmatpush1.bf16.msra.mxu0 0
      %2275 = vmatprep.mubr.bf16.mxu0 0
      %2276 = vmatmul.mubr.bf16.gmra.mrb[0].mxu0 %v2238
      %v2277 = vpop.f32.mrb[0].mxu0
      %v2278 = vadd.f32 0.0, %v2277
      %v2279 = vpop.f32.mrb[0].mxu0
      %v2280 = vpop.f32.mrb[0].mxu0
      %v2281 = vpop.f32.mrb[0].mxu0
      %2282 = vdwg.mxu0
      %2284 = vrot.lane.b32.xlu0 %v2182, 8
      %v2285 = vpop.permute.xlu0 %2284
      %2288 = vrot.lane.b32.xlu0 %v2230, 16
      %v2289 = vpop.permute.xlu0 %2288
      %2292 = vrot.lane.b32.xlu0 %v2278, 24
      %v2293 = vpop.permute.xlu0 %2292
      %v2295 = vsel %vm1017, %v2134, %v2285
      %v2296 = vsel %vm1475, %v2295, %v2289
      %v2297 = vsel %vm1477, %v2296, %v2293
      %v2298 = vpack.c.bf16 %v2297, %v2297
      %s2299 = scalar_lea.vmem %s11, 16
      %v2300 = vld [vmem:[%s2299] sm:$0xf]
      %v2301 = vld [vmem:[%s2299 + $0x4] sm:$0xf]
      %v2302 = vld [vmem:[%s2299 + $0x8] sm:$0xf]
      %v2303 = vld [vmem:[%s2299 + $0xc] sm:$0xf]
      %s2304 = scalar_lea.vmem %s12, 1
      %v2305 = vld [vmem:[%s2304] sm:$0x1]
      %v2307 = vlaneseq
      %v2308 = vshrl.u32 %v2307, 7
      %v2309 = vsub.s32 0, %v2308
      %v2310 = vrot.slane %v2305, %v2309
      %v2316 = vunpack.c.l.b16 %v2300
      %v2317 = vunpack.c.l.b16 %v2301
      %v2318 = vunpack.c.l.b16 %v2302
      %v2319 = vunpack.c.l.b16 %v2303
      %v2320 = vpack.c.b16 %v2317, %v2316
      %v2321 = vpack.c.b16 %v2319, %v2318
      %v2325 = vsel %vm877, %v2298, 0
      %2327 = vmatprep.subr.bf16.mxu0 0
      %2328 = vmatpush1.bf16.msra.mxu0 %v2320
      %2329 = vmatprep.subr.bf16.mxu0 0
      %2330 = vmatpush1.bf16.msra.mxu0 %v2321
      %2331 = vmatprep.subr.bf16.mxu0 0
      %2332 = vmatpush1.bf16.msra.mxu0 0
      %2333 = vmatprep.subr.bf16.mxu0 0
      %2334 = vmatpush1.bf16.msra.mxu0 0
      %2335 = vmatprep.subr.bf16.mxu0 0
      %2336 = vmatpush1.bf16.msra.mxu0 0
      %2337 = vmatprep.subr.bf16.mxu0 0
      %2338 = vmatpush1.bf16.msra.mxu0 0
      %2339 = vmatprep.subr.bf16.mxu0 0
      %2340 = vmatpush1.bf16.msra.mxu0 0
      %2341 = vmatprep.subr.bf16.mxu0 0
      %2342 = vmatpush1.bf16.msra.mxu0 0
      %2343 = vmatprep.subr.bf16.mxu0 0
      %2344 = vmatpush1.bf16.msra.mxu0 0
      %2345 = vmatprep.subr.bf16.mxu0 0
      %2346 = vmatpush1.bf16.msra.mxu0 0
      %2347 = vmatprep.subr.bf16.mxu0 0
      %2348 = vmatpush1.bf16.msra.mxu0 0
      %2349 = vmatprep.subr.bf16.mxu0 0
      %2350 = vmatpush1.bf16.msra.mxu0 0
      %2351 = vmatprep.subr.bf16.mxu0 0
      %2352 = vmatpush1.bf16.msra.mxu0 0
      %2353 = vmatprep.subr.bf16.mxu0 0
      %2354 = vmatpush1.bf16.msra.mxu0 0
      %2355 = vmatprep.subr.bf16.mxu0 0
      %2356 = vmatpush1.bf16.msra.mxu0 0
      %2357 = vmatprep.subr.bf16.mxu0 0
      %2358 = vmatpush1.bf16.msra.mxu0 0
      %2359 = vmatprep.mubr.bf16.mxu0 0
      %2360 = vmatmul.mubr.bf16.gmra.mrb[0].mxu0 %v2325
      %v2361 = vpop.f32.mrb[0].mxu0
      %v2362 = vadd.f32 %v2310, %v2361
      %v2363 = vpop.f32.mrb[0].mxu0
      %v2364 = vpop.f32.mrb[0].mxu0
      %v2365 = vpop.f32.mrb[0].mxu0
      %2366 = vdwg.mxu0
      %v2367 = vadd.f32 %v2362, %v1765
      %s2368 = scalar_lea.vmem %s13, 1
      %v2369 = vld [vmem:[%s2368] sm:$0x1]
      %s2370 = scalar_lea.vmem %s14, 1
      %v2371 = vld [vmem:[%s2370] sm:$0x1]
      %v2372 = vsel %vm877, %v2367, 0.0
      %2373 = vadd.xlane.f32.xlu0 %v2372
      %v2374 = vpop.xlane.xlu0 %2373
      %v2375 = vmul.f32 %v2374, %v881
      %v2376 = vsub.f32 %v2367, %v2375
      %v2377 = vmul.f32 %v2376, %v2376
      %v2378 = vsel %vm877, %v2377, 0.0
      %2379 = vadd.xlane.f32.xlu0 %v2378
      %v2380 = vpop.xlane.xlu0 %2379
      %v2381 = vmul.f32 %v2380, %v881
      %v2382 = vadd.f32 %v2381, 1e-12
      %v2383 = vrsqrt.pop %v2382
      %v2384 = vmul.f32 %v2376, %v2383
      %v2386 = vlaneseq
      %v2387 = vshrl.u32 %v2386, 7
      %v2388 = vsub.s32 0, %v2387
      %v2389 = vrot.slane %v2369, %v2388
      %v2391 = vmul.f32 %v2384, %v2389
      %v2393 = vlaneseq
      %v2394 = vshrl.u32 %v2393, 7
      %v2395 = vsub.s32 0, %v2394
      %v2396 = vrot.slane %v2371, %v2395
      %v2398 = vadd.f32 %v2391, %v2396
      %v2399 = vpack.c.bf16 %v2398, %v2398
      %s2400 = scalar_lea.vmem %s15, 16
      %v2401 = vld [vmem:[%s2400] sm:$0xf]
      %v2402 = vld [vmem:[%s2400 + $0x4] sm:$0xf]
      %v2403 = vld [vmem:[%s2400 + $0x8] sm:$0xf]
      %v2404 = vld [vmem:[%s2400 + $0xc] sm:$0xf]
      %s2405 = scalar_lea.vmem %s16, 1
      %v2406 = vld [vmem:[%s2405] sm:$0x1]
      %v2408 = vlaneseq
      %v2409 = vshrl.u32 %v2408, 7
      %v2410 = vsub.s32 0, %v2409
      %v2411 = vrot.slane %v2406, %v2410
      %v2417 = vunpack.c.l.b16 %v2401
      %v2418 = vunpack.c.l.b16 %v2402
      %v2419 = vunpack.c.l.b16 %v2403
      %v2420 = vunpack.c.l.b16 %v2404
      %v2421 = vpack.c.b16 %v2418, %v2417
      %v2422 = vpack.c.b16 %v2420, %v2419
      %v2426 = vsel %vm877, %v2399, 0
      %2428 = vmatprep.subr.bf16.mxu0 0
      %2429 = vmatpush1.bf16.msra.mxu0 %v2421
      %2430 = vmatprep.subr.bf16.mxu0 0
      %2431 = vmatpush1.bf16.msra.mxu0 %v2422
      %2432 = vmatprep.subr.bf16.mxu0 0
      %2433 = vmatpush1.bf16.msra.mxu0 0
      %2434 = vmatprep.subr.bf16.mxu0 0
      %2435 = vmatpush1.bf16.msra.mxu0 0
      %2436 = vmatprep.subr.bf16.mxu0 0
      %2437 = vmatpush1.bf16.msra.mxu0 0
      %2438 = vmatprep.subr.bf16.mxu0 0
      %2439 = vmatpush1.bf16.msra.mxu0 0
      %2440 = vmatprep.subr.bf16.mxu0 0
      %2441 = vmatpush1.bf16.msra.mxu0 0
      %2442 = vmatprep.subr.bf16.mxu0 0
      %2443 = vmatpush1.bf16.msra.mxu0 0
      %2444 = vmatprep.subr.bf16.mxu0 0
      %2445 = vmatpush1.bf16.msra.mxu0 0
      %2446 = vmatprep.subr.bf16.mxu0 0
      %2447 = vmatpush1.bf16.msra.mxu0 0
      %2448 = vmatprep.subr.bf16.mxu0 0
      %2449 = vmatpush1.bf16.msra.mxu0 0
      %2450 = vmatprep.subr.bf16.mxu0 0
      %2451 = vmatpush1.bf16.msra.mxu0 0
      %2452 = vmatprep.subr.bf16.mxu0 0
      %2453 = vmatpush1.bf16.msra.mxu0 0
      %2454 = vmatprep.subr.bf16.mxu0 0
      %2455 = vmatpush1.bf16.msra.mxu0 0
      %2456 = vmatprep.subr.bf16.mxu0 0
      %2457 = vmatpush1.bf16.msra.mxu0 0
      %2458 = vmatprep.subr.bf16.mxu0 0
      %2459 = vmatpush1.bf16.msra.mxu0 0
      %2460 = vmatprep.mubr.bf16.mxu0 0
      %2461 = vmatmul.mubr.bf16.gmra.mrb[0].mxu0 %v2426
      %v2462 = vpop.f32.mrb[0].mxu0
      %v2463 = vadd.f32 %v2411, %v2462
      %v2464 = vpop.f32.mrb[0].mxu0
      %v2465 = vpop.f32.mrb[0].mxu0
      %v2466 = vpop.f32.mrb[0].mxu0
      %2467 = vdwg.mxu0
      %v2468 = vmul.f32 %v2463, 0.5
      %v2469 = vmul.f32 %v2463, 0.044715
      %v2470 = vmul.f32 %v2469, %v2463
      %v2471 = vmul.f32 %v2470, %v2463
      %v2472 = vadd.f32 %v2463, %v2471
      %v2473 = vmul.f32 %v2472, 0.7978846
      %v2474 = vtanh.pop %v2473
      %v2475 = vadd.f32 %v2474, 1.0
      %v2476 = vmul.f32 %v2468, %v2475
      %v2477 = vpack.c.bf16 %v2476, %v2476
      %s2478 = scalar_lea.vmem %s17, 32
      %v2479 = vld [vmem:[%s2478] sm:$0xf]
      %v2480 = vld [vmem:[%s2478 + $0x4] sm:$0xf]
      %v2481 = vld [vmem:[%s2478 + $0x8] sm:$0xf]
      %v2482 = vld [vmem:[%s2478 + $0xc] sm:$0xf]
      %v2483 = vld [vmem:[%s2478 + $0x10] sm:$0xf]
      %v2484 = vld [vmem:[%s2478 + $0x14] sm:$0xf]
      %v2485 = vld [vmem:[%s2478 + $0x18] sm:$0xf]
      %v2486 = vld [vmem:[%s2478 + $0x1c] sm:$0xf]
      %s2487 = scalar_lea.vmem %s18, 1
      %v2488 = vld [vmem:[%s2487] sm:$0x1]
      %v2490 = vlaneseq
      %v2491 = vshrl.u32 %v2490, 7
      %v2492 = vsub.s32 0, %v2491
      %v2493 = vrot.slane %v2488, %v2492
      %v2503 = vunpack.c.l.b16 %v2479
      %v2504 = vunpack.c.l.b16 %v2480
      %v2505 = vunpack.c.l.b16 %v2481
      %v2506 = vunpack.c.l.b16 %v2482
      %v2507 = vunpack.c.l.b16 %v2483
      %v2508 = vunpack.c.l.b16 %v2484
      %v2509 = vunpack.c.l.b16 %v2485
      %v2510 = vunpack.c.l.b16 %v2486
      %v2511 = vpack.c.b16 %v2504, %v2503
      %v2512 = vpack.c.b16 %v2506, %v2505
      %v2513 = vpack.c.b16 %v2508, %v2507
      %v2514 = vpack.c.b16 %v2510, %v2509
      %v2520 = vsel %vm1692, %v2477, 0
      %2522 = vmatprep.subr.bf16.mxu0 0
      %2523 = vmatpush1.bf16.msra.mxu0 %v2511
      %2524 = vmatprep.subr.bf16.mxu0 0
      %2525 = vmatpush1.bf16.msra.mxu0 %v2512
      %2526 = vmatprep.subr.bf16.mxu0 0
      %2527 = vmatpush1.bf16.msra.mxu0 %v2513
      %2528 = vmatprep.subr.bf16.mxu0 0
      %2529 = vmatpush1.bf16.msra.mxu0 %v2514
      %2530 = vmatprep.subr.bf16.mxu0 0
      %2531 = vmatpush1.bf16.msra.mxu0 0
      %2532 = vmatprep.subr.bf16.mxu0 0
      %2533 = vmatpush1.bf16.msra.mxu0 0
      %2534 = vmatprep.subr.bf16.mxu0 0
      %2535 = vmatpush1.bf16.msra.mxu0 0
      %2536 = vmatprep.subr.bf16.mxu0 0
      %2537 = vmatpush1.bf16.msra.mxu0 0
      %2538 = vmatprep.subr.bf16.mxu0 0
      %2539 = vmatpush1.bf16.msra.mxu0 0
      %2540 = vmatprep.subr.bf16.mxu0 0
      %2541 = vmatpush1.bf16.msra.mxu0 0
      %2542 = vmatprep.subr.bf16.mxu0 0
      %2543 = vmatpush1.bf16.msra.mxu0 0
      %2544 = vmatprep.subr.bf16.mxu0 0
      %2545 = vmatpush1.bf16.msra.mxu0 0
      %2546 = vmatprep.subr.bf16.mxu0 0
      %2547 = vmatpush1.bf16.msra.mxu0 0
      %2548 = vmatprep.subr.bf16.mxu0 0
      %2549 = vmatpush1.bf16.msra.mxu0 0
      %2550 = vmatprep.subr.bf16.mxu0 0
      %2551 = vmatpush1.bf16.msra.mxu0 0
      %2552 = vmatprep.subr.bf16.mxu0 0
      %2553 = vmatpush1.bf16.msra.mxu0 0
      %2554 = vmatprep.mubr.bf16.mxu0 0
      %2555 = vmatmul.mubr.bf16.gmra.mrb[0].mxu0 %v2520
      %v2556 = vpop.f32.mrb[0].mxu0
      %v2557 = vadd.f32 %v2493, %v2556
      %v2558 = vpop.f32.mrb[0].mxu0
      %v2559 = vpop.f32.mrb[0].mxu0
      %v2560 = vpop.f32.mrb[0].mxu0
      %2561 = vdwg.mxu0
      %v2562 = vadd.f32 %v2557, %v2398
      %s2563 = scalar_lea.vmem %s19, 1
      %v2564 = vld [vmem:[%s2563] sm:$0x1]
      %s2565 = scalar_lea.vmem %s20, 1
      %v2566 = vld [vmem:[%s2565] sm:$0x1]
      %v2567 = vsel %vm877, %v2562, 0.0
      %2568 = vadd.xlane.f32.xlu0 %v2567
      %v2569 = vpop.xlane.xlu0 %2568
      %v2570 = vmul.f32 %v2569, %v881
      %v2571 = vsub.f32 %v2562, %v2570
      %v2572 = vmul.f32 %v2571, %v2571
      %v2573 = vsel %vm877, %v2572, 0.0
      %2574 = vadd.xlane.f32.xlu0 %v2573
      %v2575 = vpop.xlane.xlu0 %2574
      %v2576 = vmul.f32 %v2575, %v881
      %v2577 = vadd.f32 %v2576, 1e-12
      %v2578 = vrsqrt.pop %v2577
      %v2579 = vmul.f32 %v2571, %v2578
      %v2581 = vlaneseq
      %v2582 = vshrl.u32 %v2581, 7
      %v2583 = vsub.s32 0, %v2582
      %v2584 = vrot.slane %v2564, %v2583
      %v2586 = vmul.f32 %v2579, %v2584
      %v2588 = vlaneseq
      %v2589 = vshrl.u32 %v2588, 7
      %v2590 = vsub.s32 0, %v2589
      %v2591 = vrot.slane %v2566, %v2590
      %v2593 = vadd.f32 %v2586, %v2591
      %v2594 = vpack.c.bf16 %v2593, %v2593
      %v2595 = vld [vmem:[%s21] sm:$0xf]
      %v2596 = vld [vmem:[%s21 + $0x4] sm:$0xf]
      %v2597 = vld [vmem:[%s21 + $0x8] sm:$0xf]
      %v2598 = vld [vmem:[%s21 + $0xc] sm:$0xf]
      %v2599 = vld [vmem:[%s22] sm:$0x1]
      %v2604 = vunpack.c.l.b16 %v2595
      %v2605 = vunpack.c.l.b16 %v2596
      %v2606 = vunpack.c.l.b16 %v2597
      %v2607 = vunpack.c.l.b16 %v2598
      %v2608 = vpack.c.b16 %v2605, %v2604
      %v2609 = vpack.c.b16 %v2607, %v2606
      %v2613 = vsel %vm877, %v2594, 0
      %2615 = vmatprep.subr.bf16.mxu0 0
      %2616 = vmatpush1.bf16.msra.mxu0 %v2608
      %2617 = vmatprep.subr.bf16.mxu0 0
      %2618 = vmatpush1.bf16.msra.mxu0 %v2609
      %2619 = vmatprep.subr.bf16.mxu0 0
      %2620 = vmatpush1.bf16.msra.mxu0 0
      %2621 = vmatprep.subr.bf16.mxu0 0
      %2622 = vmatpush1.bf16.msra.mxu0 0
      %2623 = vmatprep.subr.bf16.mxu0 0
      %2624 = vmatpush1.bf16.msra.mxu0 0
      %2625 = vmatprep.subr.bf16.mxu0 0
      %2626 = vmatpush1.bf16.msra.mxu0 0
      %2627 = vmatprep.subr.bf16.mxu0 0
      %2628 = vmatpush1.bf16.msra.mxu0 0
      %2629 = vmatprep.subr.bf16.mxu0 0
      %2630 = vmatpush1.bf16.msra.mxu0 0
      %2631 = vmatprep.subr.bf16.mxu0 0
      %2632 = vmatpush1.bf16.msra.mxu0 0
      %2633 = vmatprep.subr.bf16.mxu0 0
      %2634 = vmatpush1.bf16.msra.mxu0 0
      %2635 = vmatprep.subr.bf16.mxu0 0
      %2636 = vmatpush1.bf16.msra.mxu0 0
      %2637 = vmatprep.subr.bf16.mxu0 0
      %2638 = vmatpush1.bf16.msra.mxu0 0
      %2639 = vmatprep.subr.bf16.mxu0 0
      %2640 = vmatpush1.bf16.msra.mxu0 0
      %2641 = vmatprep.subr.bf16.mxu0 0
      %2642 = vmatpush1.bf16.msra.mxu0 0
      %2643 = vmatprep.subr.bf16.mxu0 0
      %2644 = vmatpush1.bf16.msra.mxu0 0
      %2645 = vmatprep.subr.bf16.mxu0 0
      %2646 = vmatpush1.bf16.msra.mxu0 0
      %2647 = vmatprep.mubr.bf16.mxu0 0
      %2648 = vmatmul.mubr.bf16.gmra.mrb[0].mxu0 %v2613
      %v2649 = vpop.f32.mrb[0].mxu0
      %v2650 = vadd.f32 %v2599, %v2649
      %v2651 = vpop.f32.mrb[0].mxu0
      %v2652 = vpop.f32.mrb[0].mxu0
      %v2653 = vpop.f32.mrb[0].mxu0
      %2654 = vdwg.mxu0
      %v2655 = vtanh.pop %v2650
      %v2656 = vpack.c.bf16 %v2655, %v2655
      %v2657 = vld [vmem:[%s23] sm:$0xf]
      %v2658 = vld [vmem:[%s23 + $0x4] sm:$0xf]
      %v2659 = vld [vmem:[%s23 + $0x8] sm:$0xf]
      %v2660 = vld [vmem:[%s23 + $0xc] sm:$0xf]
      %v2661 = vld [vmem:[%s24] sm:$0x1]
      %v2666 = vunpack.c.l.b16 %v2657
      %v2667 = vunpack.c.l.b16 %v2658
      %v2668 = vunpack.c.l.b16 %v2659
      %v2669 = vunpack.c.l.b16 %v2660
      %v2670 = vpack.c.b16 %v2667, %v2666
      %v2671 = vpack.c.b16 %v2669, %v2668
      %v2675 = vsel %vm877, %v2656, 0
      %2677 = vmatprep.subr.bf16.mxu0 0
      %2678 = vmatpush1.bf16.msra.mxu0 %v2670
      %2679 = vmatprep.subr.bf16.mxu0 0
      %2680 = vmatpush1.bf16.msra.mxu0 %v2671
      %2681 = vmatprep.subr.bf16.mxu0 0
      %2682 = vmatpush1.bf16.msra.mxu0 0
      %2683 = vmatprep.subr.bf16.mxu0 0
      %2684 = vmatpush1.bf16.msra.mxu0 0
      %2685 = vmatprep.subr.bf16.mxu0 0
      %2686 = vmatpush1.bf16.msra.mxu0 0
      %2687 = vmatprep.subr.bf16.mxu0 0
      %2688 = vmatpush1.bf16.msra.mxu0 0
      %2689 = vmatprep.subr.bf16.mxu0 0
      %2690 = vmatpush1.bf16.msra.mxu0 0
      %2691 = vmatprep.subr.bf16.mxu0 0
      %2692 = vmatpush1.bf16.msra.mxu0 0
      %2693 = vmatprep.subr.bf16.mxu0 0
      %2694 = vmatpush1.bf16.msra.mxu0 0
      %2695 = vmatprep.subr.bf16.mxu0 0
      %2696 = vmatpush1.bf16.msra.mxu0 0
      %2697 = vmatprep.subr.bf16.mxu0 0
      %2698 = vmatpush1.bf16.msra.mxu0 0
      %2699 = vmatprep.subr.bf16.mxu0 0
      %2700 = vmatpush1.bf16.msra.mxu0 0
      %2701 = vmatprep.subr.bf16.mxu0 0
      %2702 = vmatpush1.bf16.msra.mxu0 0
      %2703 = vmatprep.subr.bf16.mxu0 0
      %2704 = vmatpush1.bf16.msra.mxu0 0
      %2705 = vmatprep.subr.bf16.mxu0 0
      %2706 = vmatpush1.bf16.msra.mxu0 0
      %2707 = vmatprep.subr.bf16.mxu0 0
      %2708 = vmatpush1.bf16.msra.mxu0 0
      %2709 = vmatprep.mubr.bf16.mxu0 0
      %2710 = vmatmul.mubr.bf16.gmra.mrb[0].mxu0 %v2675
      %v2711 = vpop.f32.mrb[0].mxu0
      %v2712 = vadd.f32 %v2661, %v2711
      %v2713 = vpop.f32.mrb[0].mxu0
      %v2714 = vpop.f32.mrb[0].mxu0
      %v2715 = vpop.f32.mrb[0].mxu0
      %2716 = vdwg.mxu0
      %2717 = vst [vmem:[%s788] sm:$0x1] %v2712
      %p2718 = scmp.lt.s32.totalorder %s36, 1
      %s2719 = scalar_select %p2718, %s36, 1
      %s2720 = scalar_lea.vmem %s25, %s2719
      // Predicated region
      $region121: #{joint_modal_bert_forward.1} parent=119 // pred_check
        %p2721 = pneg %p594
      $region122: #{joint_modal_bert_forward.1} parent=119 // pred_check_branch
        %2723 = sbr.rel (%p2721) target = $region124
      $region123: #{joint_modal_bert_forward.1} parent=119 // pred_region
        _
      $region124: #{joint_modal_bert_forward.1} parent=119 // pred_fallthru
        _
    $region120: #{joint_modal_bert_forward.1} parent=5 // pred_fallthru
      _
    %p2724 = scmp.le.s32.totalorder 2, %s31
    // Predicated region
    $region125: #{joint_modal_bert_forward.1} parent=5 // pred_check
      %p2725 = pneg %p2724
    $region126: #{joint_modal_bert_forward.1} parent=5 // pred_check_branch
      %2727 = sbr.rel (%p2725) target = $region128
    $region127: #{joint_modal_bert_forward.1} parent=5 // pred_region
      %s2728 = ssub.s32 %s31, 2
      // Predicated region
      $region129: #{joint_modal_bert_forward.1} parent=127 // pred_check
        %p2729 = pneg %p600
      $region130: #{joint_modal_bert_forward.1} parent=127 // pred_check_branch
        %2731 = sbr.rel (%p2729) target = $region132
      $region131: #{joint_modal_bert_forward.1} parent=127 // pred_region
        %p2732 = scmp.lt.s32.totalorder %s37, 1
        %s2733 = scalar_select %p2732, %s37, 1
        %s2734 = scalar_lea.vmem %s25, %s2733
      $region132: #{joint_modal_bert_forward.1} parent=127 // pred_fallthru
        _
    $region128: #{joint_modal_bert_forward.1} parent=5 // pred_fallthru
      _
  $region6: #{joint_modal_bert_forward.1} parent=0 // loop_footer
    %s35 = sadd.s32 1, %s31
  $region7: #{joint_modal_bert_forward.1} parent=0 // loop_footer_branch
    %30 = sbr.rel target = $region3
  $region8: #{joint_modal_bert_forward.1} parent=0 // loop_exit
    _

</llo_original>
